<compile_context>
chip_gen: v7x
topology: tpu7x:2x2x1
jax: 0.10.0
libtpu: 0.0.40
codegen_flags: <defaults>
</compile_context>

<pallas_src>
import functools
import math

import jax
import jax.numpy as jnp
from jax.experimental import pallas as pl
from jax.experimental.pallas import tpu as pltpu


# ----------------------------- Pallas kernel ---------------------------------


def _sentiment_lstm_kernel(gx_ref,          # (Tc, Bb, 4Hp) precomputed x @ Wih0 + b0
                           whh0_ref,        # (Hp, 4Hp)
                           wih1_ref,        # (Hp, 4Hp)
                           whh1_ref,        # (Hp, 4Hp)
                           b1_ref,          # (1, 4Hp)   (= b_ih1 + b_hh1)
                           wfc_ref,         # (1, Hp)
                           bfc_ref,         # (1, 1)
                           out_ref,         # (Bb, 1)
                           h1_s, c1_s, h2_s, c2_s,   # VMEM scratch (cross-chunk state)
                           *, seq_len, padded_len, unroll):
    chunk = pl.program_id(1)                 # time-chunk axis (sequential)
    n_chunks = pl.num_programs(1)
    Tc = gx_ref.shape[0]
    Bb = h1_s.shape[0]
    Hp = h1_s.shape[-1]
    f32 = jnp.float32

    @pl.when(chunk == 0)
    def _init():
        h1_s[...] = jnp.zeros_like(h1_s)
        c1_s[...] = jnp.zeros_like(c1_s)
        h2_s[...] = jnp.zeros_like(h2_s)
        c2_s[...] = jnp.zeros_like(c2_s)

    # Constant-index weights: fetched once by the pipeline, loaded once here.
    whh0 = whh0_ref[...]
    wih1 = wih1_ref[...]
    whh1 = whh1_ref[...]
    wdt = whh0.dtype
    # Hoisted bias broadcast (would otherwise be re-materialized every unrolled
    # iteration — JAX does not CSE broadcast_in_dim).
    b1b = jnp.broadcast_to(b1_ref[...].astype(f32), (Bb, 4 * Hp))

    def gate_math(gates, c_prev):
        # PyTorch gate order [i, f, g, o]; Hp is a multiple of 128 so each slice
        # is a lane-aligned (Bb, Hp) slab -> pure VPU/EUP work.
        i = jax.nn.sigmoid(gates[:, 0 * Hp:1 * Hp])
        f = jax.nn.sigmoid(gates[:, 1 * Hp:2 * Hp])
        g = jnp.tanh(gates[:, 2 * Hp:3 * Hp])
        o = jax.nn.sigmoid(gates[:, 3 * Hp:4 * Hp])
        c_new = f * c_prev + i * g
        h_new = o * jnp.tanh(c_new)
        return h_new, c_new

    mask_tail = (padded_len != seq_len)      # static Python bool

    def step(tt, carry):
        h1v, c1v, h2v, c2v = carry
        # Layer 1 recurrent dot depends only on last step's h2 -> issue it first
        # so its MXU push overlaps the layer-0 gate math below.
        g1_rec = jnp.dot(h2v.astype(wdt), whh1, preferred_element_type=f32)
        # Layer 0: the x-projection (incl. b0) was hoisted to the wrapper; only
        # the recurrent matmul remains on the serial critical path.
        g0 = gx_ref[tt].astype(f32) + jnp.dot(h1v.astype(wdt), whh0,
                                              preferred_element_type=f32)
        h1n, c1n = gate_math(g0, c1v)
        # Layer 1: input-part dot (needs h1_new) + precomputed recurrent part.
        g1 = jnp.dot(h1n.astype(wdt), wih1,
                     preferred_element_type=f32) + g1_rec + b1b
        h2n, c2n = gate_math(g1, c2v)
        if mask_tail:
            # Only emitted when T was padded up to a multiple of Tc: freeze the
            # state on the (zero-padded) tail steps of the final chunk.
            valid = (chunk * Tc + tt) < seq_len
            h1n = jnp.where(valid, h1n, h1v)
            c1n = jnp.where(valid, c1n, c1v)
            h2n = jnp.where(valid, h2n, h2v)
            c2n = jnp.where(valid, c2n, c2v)
        return (h1n, c1n, h2n, c2n)

    # State in loop carries (pure data deps for the LLO scheduler); scratch is
    # touched exactly once per chunk on each side for cross-chunk persistence.
    carry0 = (h1_s[...], c1_s[...], h2_s[...], c2_s[...])
    h1v, c1v, h2v, c2v = jax.lax.fori_loop(0, Tc, step, carry0, unroll=unroll)
    h1_s[...] = h1v
    c1_s[...] = c1v
    h2_s[...] = h2v
    c2_s[...] = c2v

    # Output block index is constant across the chunk axis, so HBM writeback is
    # deferred until the block index changes / grid ends; writing only on each
    # batch block's final chunk is intentional and correct.
    @pl.when(chunk == n_chunks - 1)
    def _finalize():
        # FC head on the VPU: broadcast multiply + lane reduction (avoids an
        # N=1 MXU dot and masked-store-heavy matmul output).
        logits = (jnp.sum(h2v * wfc_ref[...].astype(f32), axis=-1, keepdims=True)
                  + bfc_ref[...].astype(f32))
        out_ref[...] = jax.nn.sigmoid(logits)


# ----------------------------- JAX wrapper ------------------------------------


def _pad_axis(x, axis, new_size):
    pad = [(0, 0)] * x.ndim
    pad[axis] = (0, new_size - x.shape[axis])
    return jnp.pad(x, pad)


def _pad_gate_cols(w, H, Hp):
    """w: (..., 4H) in PyTorch gate order [i,f,g,o]; zero-pad each gate block to Hp."""
    lead = w.shape[:-1]
    w4 = w.reshape(*lead, 4, H)
    w4 = jnp.pad(w4, [(0, 0)] * len(lead) + [(0, 0), (0, Hp - H)])
    return w4.reshape(*lead, 4 * Hp)


def sentiment_lstm_forward(tokens, params, *, time_chunk=32, batch_blocks=1,
                           param_dtype=jnp.float32):
    """tokens: (B, T) int32 indices. Returns (B, 1) float32 in (0, 1).

    time_chunk : timesteps per grid step (sweep 8/16/32).
    batch_blocks : set 2 on v7x (dual TensorCore) to split the batch across cores.
    param_dtype : jnp.bfloat16 on v6e/v7x halves gx DMA / VMEM (dots still f32-acc).
    """
    f32 = jnp.float32
    emb_table = params["embedding"]            # (V, E)
    embedded = emb_table[tokens].astype(f32)   # (B, T, E)  -- gather glue in JAX
    B, T, E = embedded.shape
    H = params["whh0"].shape[0]

    LANE, SUBLANE = 128, 8
    Hp = ((H + LANE - 1) // LANE) * LANE                    # lane-aligned hidden width
    nb = max(1, int(batch_blocks))
    step_b = SUBLANE * nb
    Bp = ((B + step_b - 1) // step_b) * step_b              # padded batch
    Bb = Bp // nb                                           # rows per batch block

    # Time chunking: cdiv + zero-padded tail (statically masked in the kernel),
    # so awkward T never degrades to Tc=1.
    Tc = max(1, min(T, time_chunk))
    n_chunks = pl.cdiv(T, Tc)
    T_pad = n_chunks * Tc
    unroll = math.gcd(Tc, 8)                                # partial unroll

    # ---- prepare padded weights (zero padding keeps real columns uncontaminated)
    wih0 = _pad_gate_cols(params["wih0"].astype(f32), H, Hp)                        # (E, 4Hp)
    whh0 = _pad_gate_cols(_pad_axis(params["whh0"].astype(f32), 0, Hp), H, Hp)      # (Hp, 4Hp)
    b0 = _pad_gate_cols(params["b0"].astype(f32), H, Hp)                            # (1, 4Hp)
    wih1 = _pad_gate_cols(_pad_axis(params["wih1"].astype(f32), 0, Hp), H, Hp)      # (Hp, 4Hp)
    whh1 = _pad_gate_cols(_pad_axis(params["whh1"].astype(f32), 0, Hp), H, Hp)      # (Hp, 4Hp)
    b1 = _pad_gate_cols(params["b1"].astype(f32), H, Hp)                            # (1, 4Hp)
    wfc = _pad_axis(params["wfc"].astype(f32), 0, Hp).reshape(1, Hp)                # (1, Hp)
    bfc = params["bfc"].astype(f32).reshape(1, 1)                                   # (1, 1)

    # ---- hoist the non-recurrent layer-0 input projection as one large matmul
    emb_p = _pad_axis(embedded, 0, Bp)                                              # (Bp, T, E)
    gx = jnp.einsum("bte,ef->tbf", emb_p, wih0) + b0                                # (T, Bp, 4Hp)
    gx = _pad_axis(gx, 0, T_pad)                                                    # zero-pad tail steps

    # Cast the streamed slab + recurrent weight matrices (MXU operands) only.
    gx = gx.astype(param_dtype)
    whh0 = whh0.astype(param_dtype)
    wih1 = wih1.astype(param_dtype)
    whh1 = whh1.astype(param_dtype)

    def _const_spec(shape):
        nd = len(shape)
        return pl.BlockSpec(shape, lambda b, c, _nd=nd: (0,) * _nd)

    grid_spec = pltpu.PrefetchScalarGridSpec(
        num_scalar_prefetch=0,
        grid=(nb, n_chunks),
        in_specs=[
            pl.BlockSpec((Tc, Bb, 4 * Hp), lambda b, c: (c, b, 0)),  # gx chunk
            _const_spec((Hp, 4 * Hp)),       # whh0
            _const_spec((Hp, 4 * Hp)),       # wih1
            _const_spec((Hp, 4 * Hp)),       # whh1
            _const_spec((1, 4 * Hp)),        # b1 = b_ih1 + b_hh1
            _const_spec((1, Hp)),            # fc weight (row)
            _const_spec((1, 1)),             # fc bias
        ],
        out_specs=pl.BlockSpec((Bb, 1), lambda b, c: (b, 0)),
        scratch_shapes=[pltpu.VMEM((Bb, Hp), jnp.float32)] * 4,  # h1, c1, h2, c2
    )

    # Explicit VMEM budget: raise the 16/32 MiB default scoped limits where needed,
    # but stay conservative for v7x's 64 MiB physical VMEM.
    itm = jnp.dtype(param_dtype).itemsize
    est_bytes = (2 * Tc * Bb * 4 * Hp * itm          # gx chunk (double-buffered)
                 + 2 * 3 * Hp * 4 * Hp * itm         # recurrent weight matrices
                 + 4 * Bb * Hp * 4                   # f32 state scratch
                 + 2 * (4 * Hp + Hp + 1) * 4)        # biases / fc head
    vmem_limit = int(min(96 * 2 ** 20, max(32 * 2 ** 20, 2 * est_bytes)))

    kernel = functools.partial(_sentiment_lstm_kernel,
                               seq_len=T, padded_len=T_pad, unroll=unroll)

    out_p = pl.pallas_call(
        kernel,
        out_shape=jax.ShapeDtypeStruct((Bp, 1), jnp.float32),
        grid_spec=grid_spec,
        compiler_params=pltpu.CompilerParams(
            dimension_semantics=("parallel", "arbitrary"),  # batch parallel, time sequential
            vmem_limit_bytes=vmem_limit),
    )(gx, whh0, wih1, whh1, b1, wfc, bfc)

    return out_p[:B]


# ----------------------------- reference & test --------------------------------


def _reference_forward(tokens, params):
    """Pure-JAX reference matching torch.nn.LSTM semantics (gate order i,f,g,o)."""
    emb = params["embedding"][tokens]          # (B, T, E)
    B, T, E = emb.shape
    H = params["whh0"].shape[0]

    def cell(x, h, c, wih, whh, b):
        g = x @ wih + h @ whh + b
        i = jax.nn.sigmoid(g[:, 0 * H:1 * H])
        f = jax.nn.sigmoid(g[:, 1 * H:2 * H])
        gg = jnp.tanh(g[:, 2 * H:3 * H])
        o = jax.nn.sigmoid(g[:, 3 * H:4 * H])
        c = f * c + i * gg
        h = o * jnp.tanh(c)
        return h, c

    h1 = c1 = h2 = c2 = jnp.zeros((B, H), jnp.float32)
    for t in range(T):
        h1, c1 = cell(emb[:, t, :], h1, c1, params["wih0"], params["whh0"], params["b0"])
        h2, c2 = cell(h1, h2, c2, params["wih1"], params["whh1"], params["b1"])
    return jax.nn.sigmoid(h2 @ params["wfc"] + params["bfc"])


if __name__ == "__main__":
    # Small shapes consistent with the module's forward.
    vocab_size, E, H, B, T = 50, 32, 32, 2, 16

    key = jax.random.PRNGKey(0)
    ks = jax.random.split(key, 13)
    s = 1.0 / jnp.sqrt(jnp.float32(H))

    def u(k, shape):
        return jax.random.uniform(k, shape, jnp.float32, -s, s)

    params = {
        "embedding": jax.random.normal(ks[0], (vocab_size, E), jnp.float32),
        # layer 0: PyTorch weight_ih_l0 is (4H, E); we store the transpose (E, 4H).
        "wih0": u(ks[1], (E, 4 * H)),
        "whh0": u(ks[2], (H, 4 * H)),
        "b0":   u(ks[3], (1, 4 * H)) + u(ks[4], (1, 4 * H)),   # b_ih0 + b_hh0
        # layer 1: weight_ih_l1 is (4H, H) -> transpose (H, 4H).
        "wih1": u(ks[5], (H, 4 * H)),
        "whh1": u(ks[6], (H, 4 * H)),
        "b1":   u(ks[7], (1, 4 * H)) + u(ks[8], (1, 4 * H)),   # b_ih1 + b_hh1
        # fc: nn.Linear(H, 1) weight is (1, H) -> transpose (H, 1).
        "wfc":  u(ks[9], (H, 1)),
        "bfc":  u(ks[10], (1, 1)),
    }

    tokens = jax.random.randint(ks[11], (B, T), 0, vocab_size, dtype=jnp.int32)
    ref = _reference_forward(tokens, params)

    # 2 time chunks (exercises VMEM state carry across grid steps), no tail.
    out = sentiment_lstm_forward(tokens, params, time_chunk=8)
    jax.block_until_ready(out)
    assert out.shape == (B, 1)
    assert jnp.allclose(out, ref, atol=2e-4, rtol=2e-4), (out, ref)

    # 3 chunks with a masked tail step + 2 batch blocks (exercises the cdiv/tail
    # path and the parallel batch grid axis / per-block output write).
    out2 = sentiment_lstm_forward(tokens, params, time_chunk=6, batch_blocks=2)
    jax.block_until_ready(out2)
    assert jnp.allclose(out2, ref, atol=2e-4, rtol=2e-4), (out2, ref)

    print("KERNEL_OK")
</pallas_src>

<mosaic_0001>
module attributes {stable_mosaic.version = 11 : i64} {
  func.func @_sentiment_lstm_kernel(%arg0: i32, %arg1: i32, %arg2: memref<8x8x512xf32, #tpu.memory_space<vmem>>, %arg3: memref<128x512xf32, #tpu.memory_space<vmem>>, %arg4: memref<128x512xf32, #tpu.memory_space<vmem>>, %arg5: memref<128x512xf32, #tpu.memory_space<vmem>>, %arg6: memref<1x512xf32, #tpu.memory_space<vmem>>, %arg7: memref<1x128xf32, #tpu.memory_space<vmem>>, %arg8: memref<1x1xf32, #tpu.memory_space<vmem>>, %arg9: memref<8x1xf32, #tpu.memory_space<vmem>>, %arg10: memref<8x128xf32, #tpu.memory_space<vmem>>, %arg11: memref<8x128xf32, #tpu.memory_space<vmem>>, %arg12: memref<8x128xf32, #tpu.memory_space<vmem>>, %arg13: memref<8x128xf32, #tpu.memory_space<vmem>>) attributes {dimension_semantics = [#tpu.dimension_semantics<parallel>, #tpu.dimension_semantics<arbitrary>], iteration_bounds = array<i64: 1, 2>, scalar_prefetch = 0 : i64, scratch_operands = 4 : i64, tpu.core_type = #tpu.core_type<tc>, window_params = [{transform_indices = @transform_0, window_bounds = array<i64: 8, 8, 512>}, {pipeline_mode = #tpu.pipeline_mode<synchronous>, transform_indices = @transform_1, window_bounds = array<i64: 128, 512>}, {pipeline_mode = #tpu.pipeline_mode<synchronous>, transform_indices = @transform_2, window_bounds = array<i64: 128, 512>}, {pipeline_mode = #tpu.pipeline_mode<synchronous>, transform_indices = @transform_3, window_bounds = array<i64: 128, 512>}, {pipeline_mode = #tpu.pipeline_mode<synchronous>, transform_indices = @transform_4, window_bounds = array<i64: 1, 512>}, {pipeline_mode = #tpu.pipeline_mode<synchronous>, transform_indices = @transform_5, window_bounds = array<i64: 1, 128>}, {pipeline_mode = #tpu.pipeline_mode<synchronous>, transform_indices = @transform_6, window_bounds = array<i64: 1, 1>}, {transform_indices = @transform_7, window_bounds = array<i64: 8, 1>}]} {
    %c0_i32 = arith.constant 0 : i32
    %0 = arith.cmpi eq, %arg1, %c0_i32 : i32
    %1 = arith.extui %0 : i1 to i32
    %c0_i32_0 = arith.constant 0 : i32
    %2 = arith.cmpi ne, %1, %c0_i32_0 : i32
    scf.if %2 {
      %cst_114 = arith.constant 0.000000e+00 : f32
      %492 = vector.broadcast %cst_114 : f32 to vector<8x128xf32>
      %c0_115 = arith.constant 0 : index
      %c0_116 = arith.constant 0 : index
      %493 = vector.load %arg10[%c0_115, %c0_116] : memref<8x128xf32, #tpu.memory_space<vmem>>, vector<8x128xf32>
      tpu.vector_store %arg10[%c0_115, %c0_116], %492 {strides = array<i32>} : memref<8x128xf32, #tpu.memory_space<vmem>>, vector<8x128xf32>,
      %cst_117 = arith.constant 0.000000e+00 : f32
      %494 = vector.broadcast %cst_117 : f32 to vector<8x128xf32>
      %c0_118 = arith.constant 0 : index
      %c0_119 = arith.constant 0 : index
      %495 = vector.load %arg11[%c0_118, %c0_119] : memref<8x128xf32, #tpu.memory_space<vmem>>, vector<8x128xf32>
      tpu.vector_store %arg11[%c0_118, %c0_119], %494 {strides = array<i32>} : memref<8x128xf32, #tpu.memory_space<vmem>>, vector<8x128xf32>,
      %cst_120 = arith.constant 0.000000e+00 : f32
      %496 = vector.broadcast %cst_120 : f32 to vector<8x128xf32>
      %c0_121 = arith.constant 0 : index
      %c0_122 = arith.constant 0 : index
      %497 = vector.load %arg12[%c0_121, %c0_122] : memref<8x128xf32, #tpu.memory_space<vmem>>, vector<8x128xf32>
      tpu.vector_store %arg12[%c0_121, %c0_122], %496 {strides = array<i32>} : memref<8x128xf32, #tpu.memory_space<vmem>>, vector<8x128xf32>,
      %cst_123 = arith.constant 0.000000e+00 : f32
      %498 = vector.broadcast %cst_123 : f32 to vector<8x128xf32>
      %c0_124 = arith.constant 0 : index
      %c0_125 = arith.constant 0 : index
      %499 = vector.load %arg13[%c0_124, %c0_125] : memref<8x128xf32, #tpu.memory_space<vmem>>, vector<8x128xf32>
      tpu.vector_store %arg13[%c0_124, %c0_125], %498 {strides = array<i32>} : memref<8x128xf32, #tpu.memory_space<vmem>>, vector<8x128xf32>,
    } else {
    }
    %c0 = arith.constant 0 : index
    %c0_1 = arith.constant 0 : index
    %3 = vector.load %arg3[%c0, %c0_1] : memref<128x512xf32, #tpu.memory_space<vmem>>, vector<128x512xf32>
    %c0_2 = arith.constant 0 : index
    %c0_3 = arith.constant 0 : index
    %4 = vector.load %arg4[%c0_2, %c0_3] : memref<128x512xf32, #tpu.memory_space<vmem>>, vector<128x512xf32>
    %c0_4 = arith.constant 0 : index
    %c0_5 = arith.constant 0 : index
    %5 = vector.load %arg5[%c0_4, %c0_5] : memref<128x512xf32, #tpu.memory_space<vmem>>, vector<128x512xf32>
    %c0_6 = arith.constant 0 : index
    %c0_7 = arith.constant 0 : index
    %6 = vector.load %arg6[%c0_6, %c0_7] : memref<1x512xf32, #tpu.memory_space<vmem>>, vector<1x512xf32>
    %7 = vector.shape_cast %6 : vector<1x512xf32> to vector<1x512xf32>
    %8 = vector.broadcast %7 : vector<1x512xf32> to vector<8x512xf32>
    %c0_8 = arith.constant 0 : index
    %c0_9 = arith.constant 0 : index
    %9 = vector.load %arg10[%c0_8, %c0_9] : memref<8x128xf32, #tpu.memory_space<vmem>>, vector<8x128xf32>
    %c0_10 = arith.constant 0 : index
    %c0_11 = arith.constant 0 : index
    %10 = vector.load %arg11[%c0_10, %c0_11] : memref<8x128xf32, #tpu.memory_space<vmem>>, vector<8x128xf32>
    %c0_12 = arith.constant 0 : index
    %c0_13 = arith.constant 0 : index
    %11 = vector.load %arg12[%c0_12, %c0_13] : memref<8x128xf32, #tpu.memory_space<vmem>>, vector<8x128xf32>
    %c0_14 = arith.constant 0 : index
    %c0_15 = arith.constant 0 : index
    %12 = vector.load %arg13[%c0_14, %c0_15] : memref<8x128xf32, #tpu.memory_space<vmem>>, vector<8x128xf32>
    %c0_i32_16 = arith.constant 0 : i32
    %cst = arith.constant dense<0.000000e+00> : vector<8x512xf32>
    %13 = tpu.matmul %11, %5, %cst {dimension_numbers = #tpu.dot_dimension_numbers<[1], [0], [0], [1], [0, 0, 1, 1], [], []>} : vector<8x128xf32>, vector<128x512xf32>, vector<8x512xf32> -> vector<8x512xf32>
    %14 = arith.index_cast %c0_i32_16 : i32 to index
    %c0_17 = arith.constant 0 : index
    %c0_18 = arith.constant 0 : index
    %15 = vector.load %arg2[%14, %c0_17, %c0_18] : memref<8x8x512xf32, #tpu.memory_space<vmem>>, vector<1x8x512xf32>
    %16 = vector.shape_cast %15 : vector<1x8x512xf32> to vector<8x512xf32>
    %cst_19 = arith.constant dense<0.000000e+00> : vector<8x512xf32>
    %17 = tpu.matmul %9, %3, %cst_19 {dimension_numbers = #tpu.dot_dimension_numbers<[1], [0], [0], [1], [0, 0, 1, 1], [], []>} : vector<8x128xf32>, vector<128x512xf32>, vector<8x512xf32> -> vector<8x512xf32>
    %18 = arith.addf %16, %17 : vector<8x512xf32>
    %19 = vector.extract_strided_slice %18 {offsets = [0, 0], sizes = [8, 128], strides = [1, 1]} : vector<8x512xf32> to vector<8x128xf32>
    %20 = arith.negf %19 : vector<8x128xf32>
    %21 = math.exp %20 : vector<8x128xf32>
    %cst_20 = arith.constant 1.000000e+00 : f32
    %22 = vector.broadcast %cst_20 : f32 to vector<8x128xf32>
    %23 = arith.addf %22, %21 : vector<8x128xf32>
    %24 = arith.divf %22, %23 : vector<8x128xf32>
    %25 = vector.extract_strided_slice %18 {offsets = [0, 128], sizes = [8, 128], strides = [1, 1]} : vector<8x512xf32> to vector<8x128xf32>
    %26 = arith.negf %25 : vector<8x128xf32>
    %27 = math.exp %26 : vector<8x128xf32>
    %cst_21 = arith.constant 1.000000e+00 : f32
    %28 = vector.broadcast %cst_21 : f32 to vector<8x128xf32>
    %29 = arith.addf %28, %27 : vector<8x128xf32>
    %30 = arith.divf %28, %29 : vector<8x128xf32>
    %31 = vector.extract_strided_slice %18 {offsets = [0, 256], sizes = [8, 128], strides = [1, 1]} : vector<8x512xf32> to vector<8x128xf32>
    %32 = math.tanh %31 : vector<8x128xf32>
    %33 = vector.extract_strided_slice %18 {offsets = [0, 384], sizes = [8, 128], strides = [1, 1]} : vector<8x512xf32> to vector<8x128xf32>
    %34 = arith.negf %33 : vector<8x128xf32>
    %35 = math.exp %34 : vector<8x128xf32>
    %cst_22 = arith.constant 1.000000e+00 : f32
    %36 = vector.broadcast %cst_22 : f32 to vector<8x128xf32>
    %37 = arith.addf %36, %35 : vector<8x128xf32>
    %38 = arith.divf %36, %37 : vector<8x128xf32>
    %39 = arith.mulf %30, %10 : vector<8x128xf32>
    %40 = arith.mulf %24, %32 : vector<8x128xf32>
    %41 = arith.addf %39, %40 : vector<8x128xf32>
    %42 = math.tanh %41 : vector<8x128xf32>
    %43 = arith.mulf %38, %42 : vector<8x128xf32>
    %cst_23 = arith.constant dense<0.000000e+00> : vector<8x512xf32>
    %44 = tpu.matmul %43, %4, %cst_23 {dimension_numbers = #tpu.dot_dimension_numbers<[1], [0], [0], [1], [0, 0, 1, 1], [], []>} : vector<8x128xf32>, vector<128x512xf32>, vector<8x512xf32> -> vector<8x512xf32>
    %45 = arith.addf %44, %13 : vector<8x512xf32>
    %46 = arith.addf %45, %8 : vector<8x512xf32>
    %47 = vector.extract_strided_slice %46 {offsets = [0, 0], sizes = [8, 128], strides = [1, 1]} : vector<8x512xf32> to vector<8x128xf32>
    %48 = arith.negf %47 : vector<8x128xf32>
    %49 = math.exp %48 : vector<8x128xf32>
    %cst_24 = arith.constant 1.000000e+00 : f32
    %50 = vector.broadcast %cst_24 : f32 to vector<8x128xf32>
    %51 = arith.addf %50, %49 : vector<8x128xf32>
    %52 = arith.divf %50, %51 : vector<8x128xf32>
    %53 = vector.extract_strided_slice %46 {offsets = [0, 128], sizes = [8, 128], strides = [1, 1]} : vector<8x512xf32> to vector<8x128xf32>
    %54 = arith.negf %53 : vector<8x128xf32>
    %55 = math.exp %54 : vector<8x128xf32>
    %cst_25 = arith.constant 1.000000e+00 : f32
    %56 = vector.broadcast %cst_25 : f32 to vector<8x128xf32>
    %57 = arith.addf %56, %55 : vector<8x128xf32>
    %58 = arith.divf %56, %57 : vector<8x128xf32>
    %59 = vector.extract_strided_slice %46 {offsets = [0, 256], sizes = [8, 128], strides = [1, 1]} : vector<8x512xf32> to vector<8x128xf32>
    %60 = math.tanh %59 : vector<8x128xf32>
    %61 = vector.extract_strided_slice %46 {offsets = [0, 384], sizes = [8, 128], strides = [1, 1]} : vector<8x512xf32> to vector<8x128xf32>
    %62 = arith.negf %61 : vector<8x128xf32>
    %63 = math.exp %62 : vector<8x128xf32>
    %cst_26 = arith.constant 1.000000e+00 : f32
    %64 = vector.broadcast %cst_26 : f32 to vector<8x128xf32>
    %65 = arith.addf %64, %63 : vector<8x128xf32>
    %66 = arith.divf %64, %65 : vector<8x128xf32>
    %67 = arith.mulf %58, %12 : vector<8x128xf32>
    %68 = arith.mulf %52, %60 : vector<8x128xf32>
    %69 = arith.addf %67, %68 : vector<8x128xf32>
    %70 = math.tanh %69 : vector<8x128xf32>
    %71 = arith.mulf %66, %70 : vector<8x128xf32>
    %c1_i32 = arith.constant 1 : i32
    %cst_27 = arith.constant dense<0.000000e+00> : vector<8x512xf32>
    %72 = tpu.matmul %71, %5, %cst_27 {dimension_numbers = #tpu.dot_dimension_numbers<[1], [0], [0], [1], [0, 0, 1, 1], [], []>} : vector<8x128xf32>, vector<128x512xf32>, vector<8x512xf32> -> vector<8x512xf32>
    %73 = arith.index_cast %c1_i32 : i32 to index
    %c0_28 = arith.constant 0 : index
    %c0_29 = arith.constant 0 : index
    %74 = vector.load %arg2[%73, %c0_28, %c0_29] : memref<8x8x512xf32, #tpu.memory_space<vmem>>, vector<1x8x512xf32>
    %75 = vector.shape_cast %74 : vector<1x8x512xf32> to vector<8x512xf32>
    %cst_30 = arith.constant dense<0.000000e+00> : vector<8x512xf32>
    %76 = tpu.matmul %43, %3, %cst_30 {dimension_numbers = #tpu.dot_dimension_numbers<[1], [0], [0], [1], [0, 0, 1, 1], [], []>} : vector<8x128xf32>, vector<128x512xf32>, vector<8x512xf32> -> vector<8x512xf32>
    %77 = arith.addf %75, %76 : vector<8x512xf32>
    %78 = vector.extract_strided_slice %77 {offsets = [0, 0], sizes = [8, 128], strides = [1, 1]} : vector<8x512xf32> to vector<8x128xf32>
    %79 = arith.negf %78 : vector<8x128xf32>
    %80 = math.exp %79 : vector<8x128xf32>
    %cst_31 = arith.constant 1.000000e+00 : f32
    %81 = vector.broadcast %cst_31 : f32 to vector<8x128xf32>
    %82 = arith.addf %81, %80 : vector<8x128xf32>
    %83 = arith.divf %81, %82 : vector<8x128xf32>
    %84 = vector.extract_strided_slice %77 {offsets = [0, 128], sizes = [8, 128], strides = [1, 1]} : vector<8x512xf32> to vector<8x128xf32>
    %85 = arith.negf %84 : vector<8x128xf32>
    %86 = math.exp %85 : vector<8x128xf32>
    %cst_32 = arith.constant 1.000000e+00 : f32
    %87 = vector.broadcast %cst_32 : f32 to vector<8x128xf32>
    %88 = arith.addf %87, %86 : vector<8x128xf32>
    %89 = arith.divf %87, %88 : vector<8x128xf32>
    %90 = vector.extract_strided_slice %77 {offsets = [0, 256], sizes = [8, 128], strides = [1, 1]} : vector<8x512xf32> to vector<8x128xf32>
    %91 = math.tanh %90 : vector<8x128xf32>
    %92 = vector.extract_strided_slice %77 {offsets = [0, 384], sizes = [8, 128], strides = [1, 1]} : vector<8x512xf32> to vector<8x128xf32>
    %93 = arith.negf %92 : vector<8x128xf32>
    %94 = math.exp %93 : vector<8x128xf32>
    %cst_33 = arith.constant 1.000000e+00 : f32
    %95 = vector.broadcast %cst_33 : f32 to vector<8x128xf32>
    %96 = arith.addf %95, %94 : vector<8x128xf32>
    %97 = arith.divf %95, %96 : vector<8x128xf32>
    %98 = arith.mulf %89, %41 : vector<8x128xf32>
    %99 = arith.mulf %83, %91 : vector<8x128xf32>
    %100 = arith.addf %98, %99 : vector<8x128xf32>
    %101 = math.tanh %100 : vector<8x128xf32>
    %102 = arith.mulf %97, %101 : vector<8x128xf32>
    %cst_34 = arith.constant dense<0.000000e+00> : vector<8x512xf32>
    %103 = tpu.matmul %102, %4, %cst_34 {dimension_numbers = #tpu.dot_dimension_numbers<[1], [0], [0], [1], [0, 0, 1, 1], [], []>} : vector<8x128xf32>, vector<128x512xf32>, vector<8x512xf32> -> vector<8x512xf32>
    %104 = arith.addf %103, %72 : vector<8x512xf32>
    %105 = arith.addf %104, %8 : vector<8x512xf32>
    %106 = vector.extract_strided_slice %105 {offsets = [0, 0], sizes = [8, 128], strides = [1, 1]} : vector<8x512xf32> to vector<8x128xf32>
    %107 = arith.negf %106 : vector<8x128xf32>
    %108 = math.exp %107 : vector<8x128xf32>
    %cst_35 = arith.constant 1.000000e+00 : f32
    %109 = vector.broadcast %cst_35 : f32 to vector<8x128xf32>
    %110 = arith.addf %109, %108 : vector<8x128xf32>
    %111 = arith.divf %109, %110 : vector<8x128xf32>
    %112 = vector.extract_strided_slice %105 {offsets = [0, 128], sizes = [8, 128], strides = [1, 1]} : vector<8x512xf32> to vector<8x128xf32>
    %113 = arith.negf %112 : vector<8x128xf32>
    %114 = math.exp %113 : vector<8x128xf32>
    %cst_36 = arith.constant 1.000000e+00 : f32
    %115 = vector.broadcast %cst_36 : f32 to vector<8x128xf32>
    %116 = arith.addf %115, %114 : vector<8x128xf32>
    %117 = arith.divf %115, %116 : vector<8x128xf32>
    %118 = vector.extract_strided_slice %105 {offsets = [0, 256], sizes = [8, 128], strides = [1, 1]} : vector<8x512xf32> to vector<8x128xf32>
    %119 = math.tanh %118 : vector<8x128xf32>
    %120 = vector.extract_strided_slice %105 {offsets = [0, 384], sizes = [8, 128], strides = [1, 1]} : vector<8x512xf32> to vector<8x128xf32>
    %121 = arith.negf %120 : vector<8x128xf32>
    %122 = math.exp %121 : vector<8x128xf32>
    %cst_37 = arith.constant 1.000000e+00 : f32
    %123 = vector.broadcast %cst_37 : f32 to vector<8x128xf32>
    %124 = arith.addf %123, %122 : vector<8x128xf32>
    %125 = arith.divf %123, %124 : vector<8x128xf32>
    %126 = arith.mulf %117, %69 : vector<8x128xf32>
    %127 = arith.mulf %111, %119 : vector<8x128xf32>
    %128 = arith.addf %126, %127 : vector<8x128xf32>
    %129 = math.tanh %128 : vector<8x128xf32>
    %130 = arith.mulf %125, %129 : vector<8x128xf32>
    %c2_i32 = arith.constant 2 : i32
    %cst_38 = arith.constant dense<0.000000e+00> : vector<8x512xf32>
    %131 = tpu.matmul %130, %5, %cst_38 {dimension_numbers = #tpu.dot_dimension_numbers<[1], [0], [0], [1], [0, 0, 1, 1], [], []>} : vector<8x128xf32>, vector<128x512xf32>, vector<8x512xf32> -> vector<8x512xf32>
    %132 = arith.index_cast %c2_i32 : i32 to index
    %c0_39 = arith.constant 0 : index
    %c0_40 = arith.constant 0 : index
    %133 = vector.load %arg2[%132, %c0_39, %c0_40] : memref<8x8x512xf32, #tpu.memory_space<vmem>>, vector<1x8x512xf32>
    %134 = vector.shape_cast %133 : vector<1x8x512xf32> to vector<8x512xf32>
    %cst_41 = arith.constant dense<0.000000e+00> : vector<8x512xf32>
    %135 = tpu.matmul %102, %3, %cst_41 {dimension_numbers = #tpu.dot_dimension_numbers<[1], [0], [0], [1], [0, 0, 1, 1], [], []>} : vector<8x128xf32>, vector<128x512xf32>, vector<8x512xf32> -> vector<8x512xf32>
    %136 = arith.addf %134, %135 : vector<8x512xf32>
    %137 = vector.extract_strided_slice %136 {offsets = [0, 0], sizes = [8, 128], strides = [1, 1]} : vector<8x512xf32> to vector<8x128xf32>
    %138 = arith.negf %137 : vector<8x128xf32>
    %139 = math.exp %138 : vector<8x128xf32>
    %cst_42 = arith.constant 1.000000e+00 : f32
    %140 = vector.broadcast %cst_42 : f32 to vector<8x128xf32>
    %141 = arith.addf %140, %139 : vector<8x128xf32>
    %142 = arith.divf %140, %141 : vector<8x128xf32>
    %143 = vector.extract_strided_slice %136 {offsets = [0, 128], sizes = [8, 128], strides = [1, 1]} : vector<8x512xf32> to vector<8x128xf32>
    %144 = arith.negf %143 : vector<8x128xf32>
    %145 = math.exp %144 : vector<8x128xf32>
    %cst_43 = arith.constant 1.000000e+00 : f32
    %146 = vector.broadcast %cst_43 : f32 to vector<8x128xf32>
    %147 = arith.addf %146, %145 : vector<8x128xf32>
    %148 = arith.divf %146, %147 : vector<8x128xf32>
    %149 = vector.extract_strided_slice %136 {offsets = [0, 256], sizes = [8, 128], strides = [1, 1]} : vector<8x512xf32> to vector<8x128xf32>
    %150 = math.tanh %149 : vector<8x128xf32>
    %151 = vector.extract_strided_slice %136 {offsets = [0, 384], sizes = [8, 128], strides = [1, 1]} : vector<8x512xf32> to vector<8x128xf32>
    %152 = arith.negf %151 : vector<8x128xf32>
    %153 = math.exp %152 : vector<8x128xf32>
    %cst_44 = arith.constant 1.000000e+00 : f32
    %154 = vector.broadcast %cst_44 : f32 to vector<8x128xf32>
    %155 = arith.addf %154, %153 : vector<8x128xf32>
    %156 = arith.divf %154, %155 : vector<8x128xf32>
    %157 = arith.mulf %148, %100 : vector<8x128xf32>
    %158 = arith.mulf %142, %150 : vector<8x128xf32>
    %159 = arith.addf %157, %158 : vector<8x128xf32>
    %160 = math.tanh %159 : vector<8x128xf32>
    %161 = arith.mulf %156, %160 : vector<8x128xf32>
    %cst_45 = arith.constant dense<0.000000e+00> : vector<8x512xf32>
    %162 = tpu.matmul %161, %4, %cst_45 {dimension_numbers = #tpu.dot_dimension_numbers<[1], [0], [0], [1], [0, 0, 1, 1], [], []>} : vector<8x128xf32>, vector<128x512xf32>, vector<8x512xf32> -> vector<8x512xf32>
    %163 = arith.addf %162, %131 : vector<8x512xf32>
    %164 = arith.addf %163, %8 : vector<8x512xf32>
    %165 = vector.extract_strided_slice %164 {offsets = [0, 0], sizes = [8, 128], strides = [1, 1]} : vector<8x512xf32> to vector<8x128xf32>
    %166 = arith.negf %165 : vector<8x128xf32>
    %167 = math.exp %166 : vector<8x128xf32>
    %cst_46 = arith.constant 1.000000e+00 : f32
    %168 = vector.broadcast %cst_46 : f32 to vector<8x128xf32>
    %169 = arith.addf %168, %167 : vector<8x128xf32>
    %170 = arith.divf %168, %169 : vector<8x128xf32>
    %171 = vector.extract_strided_slice %164 {offsets = [0, 128], sizes = [8, 128], strides = [1, 1]} : vector<8x512xf32> to vector<8x128xf32>
    %172 = arith.negf %171 : vector<8x128xf32>
    %173 = math.exp %172 : vector<8x128xf32>
    %cst_47 = arith.constant 1.000000e+00 : f32
    %174 = vector.broadcast %cst_47 : f32 to vector<8x128xf32>
    %175 = arith.addf %174, %173 : vector<8x128xf32>
    %176 = arith.divf %174, %175 : vector<8x128xf32>
    %177 = vector.extract_strided_slice %164 {offsets = [0, 256], sizes = [8, 128], strides = [1, 1]} : vector<8x512xf32> to vector<8x128xf32>
    %178 = math.tanh %177 : vector<8x128xf32>
    %179 = vector.extract_strided_slice %164 {offsets = [0, 384], sizes = [8, 128], strides = [1, 1]} : vector<8x512xf32> to vector<8x128xf32>
    %180 = arith.negf %179 : vector<8x128xf32>
    %181 = math.exp %180 : vector<8x128xf32>
    %cst_48 = arith.constant 1.000000e+00 : f32
    %182 = vector.broadcast %cst_48 : f32 to vector<8x128xf32>
    %183 = arith.addf %182, %181 : vector<8x128xf32>
    %184 = arith.divf %182, %183 : vector<8x128xf32>
    %185 = arith.mulf %176, %128 : vector<8x128xf32>
    %186 = arith.mulf %170, %178 : vector<8x128xf32>
    %187 = arith.addf %185, %186 : vector<8x128xf32>
    %188 = math.tanh %187 : vector<8x128xf32>
    %189 = arith.mulf %184, %188 : vector<8x128xf32>
    %c3_i32 = arith.constant 3 : i32
    %cst_49 = arith.constant dense<0.000000e+00> : vector<8x512xf32>
    %190 = tpu.matmul %189, %5, %cst_49 {dimension_numbers = #tpu.dot_dimension_numbers<[1], [0], [0], [1], [0, 0, 1, 1], [], []>} : vector<8x128xf32>, vector<128x512xf32>, vector<8x512xf32> -> vector<8x512xf32>
    %191 = arith.index_cast %c3_i32 : i32 to index
    %c0_50 = arith.constant 0 : index
    %c0_51 = arith.constant 0 : index
    %192 = vector.load %arg2[%191, %c0_50, %c0_51] : memref<8x8x512xf32, #tpu.memory_space<vmem>>, vector<1x8x512xf32>
    %193 = vector.shape_cast %192 : vector<1x8x512xf32> to vector<8x512xf32>
    %cst_52 = arith.constant dense<0.000000e+00> : vector<8x512xf32>
    %194 = tpu.matmul %161, %3, %cst_52 {dimension_numbers = #tpu.dot_dimension_numbers<[1], [0], [0], [1], [0, 0, 1, 1], [], []>} : vector<8x128xf32>, vector<128x512xf32>, vector<8x512xf32> -> vector<8x512xf32>
    %195 = arith.addf %193, %194 : vector<8x512xf32>
    %196 = vector.extract_strided_slice %195 {offsets = [0, 0], sizes = [8, 128], strides = [1, 1]} : vector<8x512xf32> to vector<8x128xf32>
    %197 = arith.negf %196 : vector<8x128xf32>
    %198 = math.exp %197 : vector<8x128xf32>
    %cst_53 = arith.constant 1.000000e+00 : f32
    %199 = vector.broadcast %cst_53 : f32 to vector<8x128xf32>
    %200 = arith.addf %199, %198 : vector<8x128xf32>
    %201 = arith.divf %199, %200 : vector<8x128xf32>
    %202 = vector.extract_strided_slice %195 {offsets = [0, 128], sizes = [8, 128], strides = [1, 1]} : vector<8x512xf32> to vector<8x128xf32>
    %203 = arith.negf %202 : vector<8x128xf32>
    %204 = math.exp %203 : vector<8x128xf32>
    %cst_54 = arith.constant 1.000000e+00 : f32
    %205 = vector.broadcast %cst_54 : f32 to vector<8x128xf32>
    %206 = arith.addf %205, %204 : vector<8x128xf32>
    %207 = arith.divf %205, %206 : vector<8x128xf32>
    %208 = vector.extract_strided_slice %195 {offsets = [0, 256], sizes = [8, 128], strides = [1, 1]} : vector<8x512xf32> to vector<8x128xf32>
    %209 = math.tanh %208 : vector<8x128xf32>
    %210 = vector.extract_strided_slice %195 {offsets = [0, 384], sizes = [8, 128], strides = [1, 1]} : vector<8x512xf32> to vector<8x128xf32>
    %211 = arith.negf %210 : vector<8x128xf32>
    %212 = math.exp %211 : vector<8x128xf32>
    %cst_55 = arith.constant 1.000000e+00 : f32
    %213 = vector.broadcast %cst_55 : f32 to vector<8x128xf32>
    %214 = arith.addf %213, %212 : vector<8x128xf32>
    %215 = arith.divf %213, %214 : vector<8x128xf32>
    %216 = arith.mulf %207, %159 : vector<8x128xf32>
    %217 = arith.mulf %201, %209 : vector<8x128xf32>
    %218 = arith.addf %216, %217 : vector<8x128xf32>
    %219 = math.tanh %218 : vector<8x128xf32>
    %220 = arith.mulf %215, %219 : vector<8x128xf32>
    %cst_56 = arith.constant dense<0.000000e+00> : vector<8x512xf32>
    %221 = tpu.matmul %220, %4, %cst_56 {dimension_numbers = #tpu.dot_dimension_numbers<[1], [0], [0], [1], [0, 0, 1, 1], [], []>} : vector<8x128xf32>, vector<128x512xf32>, vector<8x512xf32> -> vector<8x512xf32>
    %222 = arith.addf %221, %190 : vector<8x512xf32>
    %223 = arith.addf %222, %8 : vector<8x512xf32>
    %224 = vector.extract_strided_slice %223 {offsets = [0, 0], sizes = [8, 128], strides = [1, 1]} : vector<8x512xf32> to vector<8x128xf32>
    %225 = arith.negf %224 : vector<8x128xf32>
    %226 = math.exp %225 : vector<8x128xf32>
    %cst_57 = arith.constant 1.000000e+00 : f32
    %227 = vector.broadcast %cst_57 : f32 to vector<8x128xf32>
    %228 = arith.addf %227, %226 : vector<8x128xf32>
    %229 = arith.divf %227, %228 : vector<8x128xf32>
    %230 = vector.extract_strided_slice %223 {offsets = [0, 128], sizes = [8, 128], strides = [1, 1]} : vector<8x512xf32> to vector<8x128xf32>
    %231 = arith.negf %230 : vector<8x128xf32>
    %232 = math.exp %231 : vector<8x128xf32>
    %cst_58 = arith.constant 1.000000e+00 : f32
    %233 = vector.broadcast %cst_58 : f32 to vector<8x128xf32>
    %234 = arith.addf %233, %232 : vector<8x128xf32>
    %235 = arith.divf %233, %234 : vector<8x128xf32>
    %236 = vector.extract_strided_slice %223 {offsets = [0, 256], sizes = [8, 128], strides = [1, 1]} : vector<8x512xf32> to vector<8x128xf32>
    %237 = math.tanh %236 : vector<8x128xf32>
    %238 = vector.extract_strided_slice %223 {offsets = [0, 384], sizes = [8, 128], strides = [1, 1]} : vector<8x512xf32> to vector<8x128xf32>
    %239 = arith.negf %238 : vector<8x128xf32>
    %240 = math.exp %239 : vector<8x128xf32>
    %cst_59 = arith.constant 1.000000e+00 : f32
    %241 = vector.broadcast %cst_59 : f32 to vector<8x128xf32>
    %242 = arith.addf %241, %240 : vector<8x128xf32>
    %243 = arith.divf %241, %242 : vector<8x128xf32>
    %244 = arith.mulf %235, %187 : vector<8x128xf32>
    %245 = arith.mulf %229, %237 : vector<8x128xf32>
    %246 = arith.addf %244, %245 : vector<8x128xf32>
    %247 = math.tanh %246 : vector<8x128xf32>
    %248 = arith.mulf %243, %247 : vector<8x128xf32>
    %c4_i32 = arith.constant 4 : i32
    %cst_60 = arith.constant dense<0.000000e+00> : vector<8x512xf32>
    %249 = tpu.matmul %248, %5, %cst_60 {dimension_numbers = #tpu.dot_dimension_numbers<[1], [0], [0], [1], [0, 0, 1, 1], [], []>} : vector<8x128xf32>, vector<128x512xf32>, vector<8x512xf32> -> vector<8x512xf32>
    %250 = arith.index_cast %c4_i32 : i32 to index
    %c0_61 = arith.constant 0 : index
    %c0_62 = arith.constant 0 : index
    %251 = vector.load %arg2[%250, %c0_61, %c0_62] : memref<8x8x512xf32, #tpu.memory_space<vmem>>, vector<1x8x512xf32>
    %252 = vector.shape_cast %251 : vector<1x8x512xf32> to vector<8x512xf32>
    %cst_63 = arith.constant dense<0.000000e+00> : vector<8x512xf32>
    %253 = tpu.matmul %220, %3, %cst_63 {dimension_numbers = #tpu.dot_dimension_numbers<[1], [0], [0], [1], [0, 0, 1, 1], [], []>} : vector<8x128xf32>, vector<128x512xf32>, vector<8x512xf32> -> vector<8x512xf32>
    %254 = arith.addf %252, %253 : vector<8x512xf32>
    %255 = vector.extract_strided_slice %254 {offsets = [0, 0], sizes = [8, 128], strides = [1, 1]} : vector<8x512xf32> to vector<8x128xf32>
    %256 = arith.negf %255 : vector<8x128xf32>
    %257 = math.exp %256 : vector<8x128xf32>
    %cst_64 = arith.constant 1.000000e+00 : f32
    %258 = vector.broadcast %cst_64 : f32 to vector<8x128xf32>
    %259 = arith.addf %258, %257 : vector<8x128xf32>
    %260 = arith.divf %258, %259 : vector<8x128xf32>
    %261 = vector.extract_strided_slice %254 {offsets = [0, 128], sizes = [8, 128], strides = [1, 1]} : vector<8x512xf32> to vector<8x128xf32>
    %262 = arith.negf %261 : vector<8x128xf32>
    %263 = math.exp %262 : vector<8x128xf32>
    %cst_65 = arith.constant 1.000000e+00 : f32
    %264 = vector.broadcast %cst_65 : f32 to vector<8x128xf32>
    %265 = arith.addf %264, %263 : vector<8x128xf32>
    %266 = arith.divf %264, %265 : vector<8x128xf32>
    %267 = vector.extract_strided_slice %254 {offsets = [0, 256], sizes = [8, 128], strides = [1, 1]} : vector<8x512xf32> to vector<8x128xf32>
    %268 = math.tanh %267 : vector<8x128xf32>
    %269 = vector.extract_strided_slice %254 {offsets = [0, 384], sizes = [8, 128], strides = [1, 1]} : vector<8x512xf32> to vector<8x128xf32>
    %270 = arith.negf %269 : vector<8x128xf32>
    %271 = math.exp %270 : vector<8x128xf32>
    %cst_66 = arith.constant 1.000000e+00 : f32
    %272 = vector.broadcast %cst_66 : f32 to vector<8x128xf32>
    %273 = arith.addf %272, %271 : vector<8x128xf32>
    %274 = arith.divf %272, %273 : vector<8x128xf32>
    %275 = arith.mulf %266, %218 : vector<8x128xf32>
    %276 = arith.mulf %260, %268 : vector<8x128xf32>
    %277 = arith.addf %275, %276 : vector<8x128xf32>
    %278 = math.tanh %277 : vector<8x128xf32>
    %279 = arith.mulf %274, %278 : vector<8x128xf32>
    %cst_67 = arith.constant dense<0.000000e+00> : vector<8x512xf32>
    %280 = tpu.matmul %279, %4, %cst_67 {dimension_numbers = #tpu.dot_dimension_numbers<[1], [0], [0], [1], [0, 0, 1, 1], [], []>} : vector<8x128xf32>, vector<128x512xf32>, vector<8x512xf32> -> vector<8x512xf32>
    %281 = arith.addf %280, %249 : vector<8x512xf32>
    %282 = arith.addf %281, %8 : vector<8x512xf32>
    %283 = vector.extract_strided_slice %282 {offsets = [0, 0], sizes = [8, 128], strides = [1, 1]} : vector<8x512xf32> to vector<8x128xf32>
    %284 = arith.negf %283 : vector<8x128xf32>
    %285 = math.exp %284 : vector<8x128xf32>
    %cst_68 = arith.constant 1.000000e+00 : f32
    %286 = vector.broadcast %cst_68 : f32 to vector<8x128xf32>
    %287 = arith.addf %286, %285 : vector<8x128xf32>
    %288 = arith.divf %286, %287 : vector<8x128xf32>
    %289 = vector.extract_strided_slice %282 {offsets = [0, 128], sizes = [8, 128], strides = [1, 1]} : vector<8x512xf32> to vector<8x128xf32>
    %290 = arith.negf %289 : vector<8x128xf32>
    %291 = math.exp %290 : vector<8x128xf32>
    %cst_69 = arith.constant 1.000000e+00 : f32
    %292 = vector.broadcast %cst_69 : f32 to vector<8x128xf32>
    %293 = arith.addf %292, %291 : vector<8x128xf32>
    %294 = arith.divf %292, %293 : vector<8x128xf32>
    %295 = vector.extract_strided_slice %282 {offsets = [0, 256], sizes = [8, 128], strides = [1, 1]} : vector<8x512xf32> to vector<8x128xf32>
    %296 = math.tanh %295 : vector<8x128xf32>
    %297 = vector.extract_strided_slice %282 {offsets = [0, 384], sizes = [8, 128], strides = [1, 1]} : vector<8x512xf32> to vector<8x128xf32>
    %298 = arith.negf %297 : vector<8x128xf32>
    %299 = math.exp %298 : vector<8x128xf32>
    %cst_70 = arith.constant 1.000000e+00 : f32
    %300 = vector.broadcast %cst_70 : f32 to vector<8x128xf32>
    %301 = arith.addf %300, %299 : vector<8x128xf32>
    %302 = arith.divf %300, %301 : vector<8x128xf32>
    %303 = arith.mulf %294, %246 : vector<8x128xf32>
    %304 = arith.mulf %288, %296 : vector<8x128xf32>
    %305 = arith.addf %303, %304 : vector<8x128xf32>
    %306 = math.tanh %305 : vector<8x128xf32>
    %307 = arith.mulf %302, %306 : vector<8x128xf32>
    %c5_i32 = arith.constant 5 : i32
    %cst_71 = arith.constant dense<0.000000e+00> : vector<8x512xf32>
    %308 = tpu.matmul %307, %5, %cst_71 {dimension_numbers = #tpu.dot_dimension_numbers<[1], [0], [0], [1], [0, 0, 1, 1], [], []>} : vector<8x128xf32>, vector<128x512xf32>, vector<8x512xf32> -> vector<8x512xf32>
    %309 = arith.index_cast %c5_i32 : i32 to index
    %c0_72 = arith.constant 0 : index
    %c0_73 = arith.constant 0 : index
    %310 = vector.load %arg2[%309, %c0_72, %c0_73] : memref<8x8x512xf32, #tpu.memory_space<vmem>>, vector<1x8x512xf32>
    %311 = vector.shape_cast %310 : vector<1x8x512xf32> to vector<8x512xf32>
    %cst_74 = arith.constant dense<0.000000e+00> : vector<8x512xf32>
    %312 = tpu.matmul %279, %3, %cst_74 {dimension_numbers = #tpu.dot_dimension_numbers<[1], [0], [0], [1], [0, 0, 1, 1], [], []>} : vector<8x128xf32>, vector<128x512xf32>, vector<8x512xf32> -> vector<8x512xf32>
    %313 = arith.addf %311, %312 : vector<8x512xf32>
    %314 = vector.extract_strided_slice %313 {offsets = [0, 0], sizes = [8, 128], strides = [1, 1]} : vector<8x512xf32> to vector<8x128xf32>
    %315 = arith.negf %314 : vector<8x128xf32>
    %316 = math.exp %315 : vector<8x128xf32>
    %cst_75 = arith.constant 1.000000e+00 : f32
    %317 = vector.broadcast %cst_75 : f32 to vector<8x128xf32>
    %318 = arith.addf %317, %316 : vector<8x128xf32>
    %319 = arith.divf %317, %318 : vector<8x128xf32>
    %320 = vector.extract_strided_slice %313 {offsets = [0, 128], sizes = [8, 128], strides = [1, 1]} : vector<8x512xf32> to vector<8x128xf32>
    %321 = arith.negf %320 : vector<8x128xf32>
    %322 = math.exp %321 : vector<8x128xf32>
    %cst_76 = arith.constant 1.000000e+00 : f32
    %323 = vector.broadcast %cst_76 : f32 to vector<8x128xf32>
    %324 = arith.addf %323, %322 : vector<8x128xf32>
    %325 = arith.divf %323, %324 : vector<8x128xf32>
    %326 = vector.extract_strided_slice %313 {offsets = [0, 256], sizes = [8, 128], strides = [1, 1]} : vector<8x512xf32> to vector<8x128xf32>
    %327 = math.tanh %326 : vector<8x128xf32>
    %328 = vector.extract_strided_slice %313 {offsets = [0, 384], sizes = [8, 128], strides = [1, 1]} : vector<8x512xf32> to vector<8x128xf32>
    %329 = arith.negf %328 : vector<8x128xf32>
    %330 = math.exp %329 : vector<8x128xf32>
    %cst_77 = arith.constant 1.000000e+00 : f32
    %331 = vector.broadcast %cst_77 : f32 to vector<8x128xf32>
    %332 = arith.addf %331, %330 : vector<8x128xf32>
    %333 = arith.divf %331, %332 : vector<8x128xf32>
    %334 = arith.mulf %325, %277 : vector<8x128xf32>
    %335 = arith.mulf %319, %327 : vector<8x128xf32>
    %336 = arith.addf %334, %335 : vector<8x128xf32>
    %337 = math.tanh %336 : vector<8x128xf32>
    %338 = arith.mulf %333, %337 : vector<8x128xf32>
    %cst_78 = arith.constant dense<0.000000e+00> : vector<8x512xf32>
    %339 = tpu.matmul %338, %4, %cst_78 {dimension_numbers = #tpu.dot_dimension_numbers<[1], [0], [0], [1], [0, 0, 1, 1], [], []>} : vector<8x128xf32>, vector<128x512xf32>, vector<8x512xf32> -> vector<8x512xf32>
    %340 = arith.addf %339, %308 : vector<8x512xf32>
    %341 = arith.addf %340, %8 : vector<8x512xf32>
    %342 = vector.extract_strided_slice %341 {offsets = [0, 0], sizes = [8, 128], strides = [1, 1]} : vector<8x512xf32> to vector<8x128xf32>
    %343 = arith.negf %342 : vector<8x128xf32>
    %344 = math.exp %343 : vector<8x128xf32>
    %cst_79 = arith.constant 1.000000e+00 : f32
    %345 = vector.broadcast %cst_79 : f32 to vector<8x128xf32>
    %346 = arith.addf %345, %344 : vector<8x128xf32>
    %347 = arith.divf %345, %346 : vector<8x128xf32>
    %348 = vector.extract_strided_slice %341 {offsets = [0, 128], sizes = [8, 128], strides = [1, 1]} : vector<8x512xf32> to vector<8x128xf32>
    %349 = arith.negf %348 : vector<8x128xf32>
    %350 = math.exp %349 : vector<8x128xf32>
    %cst_80 = arith.constant 1.000000e+00 : f32
    %351 = vector.broadcast %cst_80 : f32 to vector<8x128xf32>
    %352 = arith.addf %351, %350 : vector<8x128xf32>
    %353 = arith.divf %351, %352 : vector<8x128xf32>
    %354 = vector.extract_strided_slice %341 {offsets = [0, 256], sizes = [8, 128], strides = [1, 1]} : vector<8x512xf32> to vector<8x128xf32>
    %355 = math.tanh %354 : vector<8x128xf32>
    %356 = vector.extract_strided_slice %341 {offsets = [0, 384], sizes = [8, 128], strides = [1, 1]} : vector<8x512xf32> to vector<8x128xf32>
    %357 = arith.negf %356 : vector<8x128xf32>
    %358 = math.exp %357 : vector<8x128xf32>
    %cst_81 = arith.constant 1.000000e+00 : f32
    %359 = vector.broadcast %cst_81 : f32 to vector<8x128xf32>
    %360 = arith.addf %359, %358 : vector<8x128xf32>
    %361 = arith.divf %359, %360 : vector<8x128xf32>
    %362 = arith.mulf %353, %305 : vector<8x128xf32>
    %363 = arith.mulf %347, %355 : vector<8x128xf32>
    %364 = arith.addf %362, %363 : vector<8x128xf32>
    %365 = math.tanh %364 : vector<8x128xf32>
    %366 = arith.mulf %361, %365 : vector<8x128xf32>
    %c6_i32 = arith.constant 6 : i32
    %cst_82 = arith.constant dense<0.000000e+00> : vector<8x512xf32>
    %367 = tpu.matmul %366, %5, %cst_82 {dimension_numbers = #tpu.dot_dimension_numbers<[1], [0], [0], [1], [0, 0, 1, 1], [], []>} : vector<8x128xf32>, vector<128x512xf32>, vector<8x512xf32> -> vector<8x512xf32>
    %368 = arith.index_cast %c6_i32 : i32 to index
    %c0_83 = arith.constant 0 : index
    %c0_84 = arith.constant 0 : index
    %369 = vector.load %arg2[%368, %c0_83, %c0_84] : memref<8x8x512xf32, #tpu.memory_space<vmem>>, vector<1x8x512xf32>
    %370 = vector.shape_cast %369 : vector<1x8x512xf32> to vector<8x512xf32>
    %cst_85 = arith.constant dense<0.000000e+00> : vector<8x512xf32>
    %371 = tpu.matmul %338, %3, %cst_85 {dimension_numbers = #tpu.dot_dimension_numbers<[1], [0], [0], [1], [0, 0, 1, 1], [], []>} : vector<8x128xf32>, vector<128x512xf32>, vector<8x512xf32> -> vector<8x512xf32>
    %372 = arith.addf %370, %371 : vector<8x512xf32>
    %373 = vector.extract_strided_slice %372 {offsets = [0, 0], sizes = [8, 128], strides = [1, 1]} : vector<8x512xf32> to vector<8x128xf32>
    %374 = arith.negf %373 : vector<8x128xf32>
    %375 = math.exp %374 : vector<8x128xf32>
    %cst_86 = arith.constant 1.000000e+00 : f32
    %376 = vector.broadcast %cst_86 : f32 to vector<8x128xf32>
    %377 = arith.addf %376, %375 : vector<8x128xf32>
    %378 = arith.divf %376, %377 : vector<8x128xf32>
    %379 = vector.extract_strided_slice %372 {offsets = [0, 128], sizes = [8, 128], strides = [1, 1]} : vector<8x512xf32> to vector<8x128xf32>
    %380 = arith.negf %379 : vector<8x128xf32>
    %381 = math.exp %380 : vector<8x128xf32>
    %cst_87 = arith.constant 1.000000e+00 : f32
    %382 = vector.broadcast %cst_87 : f32 to vector<8x128xf32>
    %383 = arith.addf %382, %381 : vector<8x128xf32>
    %384 = arith.divf %382, %383 : vector<8x128xf32>
    %385 = vector.extract_strided_slice %372 {offsets = [0, 256], sizes = [8, 128], strides = [1, 1]} : vector<8x512xf32> to vector<8x128xf32>
    %386 = math.tanh %385 : vector<8x128xf32>
    %387 = vector.extract_strided_slice %372 {offsets = [0, 384], sizes = [8, 128], strides = [1, 1]} : vector<8x512xf32> to vector<8x128xf32>
    %388 = arith.negf %387 : vector<8x128xf32>
    %389 = math.exp %388 : vector<8x128xf32>
    %cst_88 = arith.constant 1.000000e+00 : f32
    %390 = vector.broadcast %cst_88 : f32 to vector<8x128xf32>
    %391 = arith.addf %390, %389 : vector<8x128xf32>
    %392 = arith.divf %390, %391 : vector<8x128xf32>
    %393 = arith.mulf %384, %336 : vector<8x128xf32>
    %394 = arith.mulf %378, %386 : vector<8x128xf32>
    %395 = arith.addf %393, %394 : vector<8x128xf32>
    %396 = math.tanh %395 : vector<8x128xf32>
    %397 = arith.mulf %392, %396 : vector<8x128xf32>
    %cst_89 = arith.constant dense<0.000000e+00> : vector<8x512xf32>
    %398 = tpu.matmul %397, %4, %cst_89 {dimension_numbers = #tpu.dot_dimension_numbers<[1], [0], [0], [1], [0, 0, 1, 1], [], []>} : vector<8x128xf32>, vector<128x512xf32>, vector<8x512xf32> -> vector<8x512xf32>
    %399 = arith.addf %398, %367 : vector<8x512xf32>
    %400 = arith.addf %399, %8 : vector<8x512xf32>
    %401 = vector.extract_strided_slice %400 {offsets = [0, 0], sizes = [8, 128], strides = [1, 1]} : vector<8x512xf32> to vector<8x128xf32>
    %402 = arith.negf %401 : vector<8x128xf32>
    %403 = math.exp %402 : vector<8x128xf32>
    %cst_90 = arith.constant 1.000000e+00 : f32
    %404 = vector.broadcast %cst_90 : f32 to vector<8x128xf32>
    %405 = arith.addf %404, %403 : vector<8x128xf32>
    %406 = arith.divf %404, %405 : vector<8x128xf32>
    %407 = vector.extract_strided_slice %400 {offsets = [0, 128], sizes = [8, 128], strides = [1, 1]} : vector<8x512xf32> to vector<8x128xf32>
    %408 = arith.negf %407 : vector<8x128xf32>
    %409 = math.exp %408 : vector<8x128xf32>
    %cst_91 = arith.constant 1.000000e+00 : f32
    %410 = vector.broadcast %cst_91 : f32 to vector<8x128xf32>
    %411 = arith.addf %410, %409 : vector<8x128xf32>
    %412 = arith.divf %410, %411 : vector<8x128xf32>
    %413 = vector.extract_strided_slice %400 {offsets = [0, 256], sizes = [8, 128], strides = [1, 1]} : vector<8x512xf32> to vector<8x128xf32>
    %414 = math.tanh %413 : vector<8x128xf32>
    %415 = vector.extract_strided_slice %400 {offsets = [0, 384], sizes = [8, 128], strides = [1, 1]} : vector<8x512xf32> to vector<8x128xf32>
    %416 = arith.negf %415 : vector<8x128xf32>
    %417 = math.exp %416 : vector<8x128xf32>
    %cst_92 = arith.constant 1.000000e+00 : f32
    %418 = vector.broadcast %cst_92 : f32 to vector<8x128xf32>
    %419 = arith.addf %418, %417 : vector<8x128xf32>
    %420 = arith.divf %418, %419 : vector<8x128xf32>
    %421 = arith.mulf %412, %364 : vector<8x128xf32>
    %422 = arith.mulf %406, %414 : vector<8x128xf32>
    %423 = arith.addf %421, %422 : vector<8x128xf32>
    %424 = math.tanh %423 : vector<8x128xf32>
    %425 = arith.mulf %420, %424 : vector<8x128xf32>
    %c7_i32 = arith.constant 7 : i32
    %cst_93 = arith.constant dense<0.000000e+00> : vector<8x512xf32>
    %426 = tpu.matmul %425, %5, %cst_93 {dimension_numbers = #tpu.dot_dimension_numbers<[1], [0], [0], [1], [0, 0, 1, 1], [], []>} : vector<8x128xf32>, vector<128x512xf32>, vector<8x512xf32> -> vector<8x512xf32>
    %427 = arith.index_cast %c7_i32 : i32 to index
    %c0_94 = arith.constant 0 : index
    %c0_95 = arith.constant 0 : index
    %428 = vector.load %arg2[%427, %c0_94, %c0_95] : memref<8x8x512xf32, #tpu.memory_space<vmem>>, vector<1x8x512xf32>
    %429 = vector.shape_cast %428 : vector<1x8x512xf32> to vector<8x512xf32>
    %cst_96 = arith.constant dense<0.000000e+00> : vector<8x512xf32>
    %430 = tpu.matmul %397, %3, %cst_96 {dimension_numbers = #tpu.dot_dimension_numbers<[1], [0], [0], [1], [0, 0, 1, 1], [], []>} : vector<8x128xf32>, vector<128x512xf32>, vector<8x512xf32> -> vector<8x512xf32>
    %431 = arith.addf %429, %430 : vector<8x512xf32>
    %432 = vector.extract_strided_slice %431 {offsets = [0, 0], sizes = [8, 128], strides = [1, 1]} : vector<8x512xf32> to vector<8x128xf32>
    %433 = arith.negf %432 : vector<8x128xf32>
    %434 = math.exp %433 : vector<8x128xf32>
    %cst_97 = arith.constant 1.000000e+00 : f32
    %435 = vector.broadcast %cst_97 : f32 to vector<8x128xf32>
    %436 = arith.addf %435, %434 : vector<8x128xf32>
    %437 = arith.divf %435, %436 : vector<8x128xf32>
    %438 = vector.extract_strided_slice %431 {offsets = [0, 128], sizes = [8, 128], strides = [1, 1]} : vector<8x512xf32> to vector<8x128xf32>
    %439 = arith.negf %438 : vector<8x128xf32>
    %440 = math.exp %439 : vector<8x128xf32>
    %cst_98 = arith.constant 1.000000e+00 : f32
    %441 = vector.broadcast %cst_98 : f32 to vector<8x128xf32>
    %442 = arith.addf %441, %440 : vector<8x128xf32>
    %443 = arith.divf %441, %442 : vector<8x128xf32>
    %444 = vector.extract_strided_slice %431 {offsets = [0, 256], sizes = [8, 128], strides = [1, 1]} : vector<8x512xf32> to vector<8x128xf32>
    %445 = math.tanh %444 : vector<8x128xf32>
    %446 = vector.extract_strided_slice %431 {offsets = [0, 384], sizes = [8, 128], strides = [1, 1]} : vector<8x512xf32> to vector<8x128xf32>
    %447 = arith.negf %446 : vector<8x128xf32>
    %448 = math.exp %447 : vector<8x128xf32>
    %cst_99 = arith.constant 1.000000e+00 : f32
    %449 = vector.broadcast %cst_99 : f32 to vector<8x128xf32>
    %450 = arith.addf %449, %448 : vector<8x128xf32>
    %451 = arith.divf %449, %450 : vector<8x128xf32>
    %452 = arith.mulf %443, %395 : vector<8x128xf32>
    %453 = arith.mulf %437, %445 : vector<8x128xf32>
    %454 = arith.addf %452, %453 : vector<8x128xf32>
    %455 = math.tanh %454 : vector<8x128xf32>
    %456 = arith.mulf %451, %455 : vector<8x128xf32>
    %cst_100 = arith.constant dense<0.000000e+00> : vector<8x512xf32>
    %457 = tpu.matmul %456, %4, %cst_100 {dimension_numbers = #tpu.dot_dimension_numbers<[1], [0], [0], [1], [0, 0, 1, 1], [], []>} : vector<8x128xf32>, vector<128x512xf32>, vector<8x512xf32> -> vector<8x512xf32>
    %458 = arith.addf %457, %426 : vector<8x512xf32>
    %459 = arith.addf %458, %8 : vector<8x512xf32>
    %460 = vector.extract_strided_slice %459 {offsets = [0, 0], sizes = [8, 128], strides = [1, 1]} : vector<8x512xf32> to vector<8x128xf32>
    %461 = arith.negf %460 : vector<8x128xf32>
    %462 = math.exp %461 : vector<8x128xf32>
    %cst_101 = arith.constant 1.000000e+00 : f32
    %463 = vector.broadcast %cst_101 : f32 to vector<8x128xf32>
    %464 = arith.addf %463, %462 : vector<8x128xf32>
    %465 = arith.divf %463, %464 : vector<8x128xf32>
    %466 = vector.extract_strided_slice %459 {offsets = [0, 128], sizes = [8, 128], strides = [1, 1]} : vector<8x512xf32> to vector<8x128xf32>
    %467 = arith.negf %466 : vector<8x128xf32>
    %468 = math.exp %467 : vector<8x128xf32>
    %cst_102 = arith.constant 1.000000e+00 : f32
    %469 = vector.broadcast %cst_102 : f32 to vector<8x128xf32>
    %470 = arith.addf %469, %468 : vector<8x128xf32>
    %471 = arith.divf %469, %470 : vector<8x128xf32>
    %472 = vector.extract_strided_slice %459 {offsets = [0, 256], sizes = [8, 128], strides = [1, 1]} : vector<8x512xf32> to vector<8x128xf32>
    %473 = math.tanh %472 : vector<8x128xf32>
    %474 = vector.extract_strided_slice %459 {offsets = [0, 384], sizes = [8, 128], strides = [1, 1]} : vector<8x512xf32> to vector<8x128xf32>
    %475 = arith.negf %474 : vector<8x128xf32>
    %476 = math.exp %475 : vector<8x128xf32>
    %cst_103 = arith.constant 1.000000e+00 : f32
    %477 = vector.broadcast %cst_103 : f32 to vector<8x128xf32>
    %478 = arith.addf %477, %476 : vector<8x128xf32>
    %479 = arith.divf %477, %478 : vector<8x128xf32>
    %480 = arith.mulf %471, %423 : vector<8x128xf32>
    %481 = arith.mulf %465, %473 : vector<8x128xf32>
    %482 = arith.addf %480, %481 : vector<8x128xf32>
    %483 = math.tanh %482 : vector<8x128xf32>
    %484 = arith.mulf %479, %483 : vector<8x128xf32>
    %c8_i32 = arith.constant 8 : i32
    %c0_104 = arith.constant 0 : index
    %c0_105 = arith.constant 0 : index
    %485 = vector.load %arg10[%c0_104, %c0_105] : memref<8x128xf32, #tpu.memory_space<vmem>>, vector<8x128xf32>
    tpu.vector_store %arg10[%c0_104, %c0_105], %456 {strides = array<i32>} : memref<8x128xf32, #tpu.memory_space<vmem>>, vector<8x128xf32>,
    %c0_106 = arith.constant 0 : index
    %c0_107 = arith.constant 0 : index
    %486 = vector.load %arg11[%c0_106, %c0_107] : memref<8x128xf32, #tpu.memory_space<vmem>>, vector<8x128xf32>
    tpu.vector_store %arg11[%c0_106, %c0_107], %454 {strides = array<i32>} : memref<8x128xf32, #tpu.memory_space<vmem>>, vector<8x128xf32>,
    %c0_108 = arith.constant 0 : index
    %c0_109 = arith.constant 0 : index
    %487 = vector.load %arg12[%c0_108, %c0_109] : memref<8x128xf32, #tpu.memory_space<vmem>>, vector<8x128xf32>
    tpu.vector_store %arg12[%c0_108, %c0_109], %484 {strides = array<i32>} : memref<8x128xf32, #tpu.memory_space<vmem>>, vector<8x128xf32>,
    %c0_110 = arith.constant 0 : index
    %c0_111 = arith.constant 0 : index
    %488 = vector.load %arg13[%c0_110, %c0_111] : memref<8x128xf32, #tpu.memory_space<vmem>>, vector<8x128xf32>
    tpu.vector_store %arg13[%c0_110, %c0_111], %482 {strides = array<i32>} : memref<8x128xf32, #tpu.memory_space<vmem>>, vector<8x128xf32>,
    %c1_i32_112 = arith.constant 1 : i32
    %489 = arith.cmpi eq, %arg1, %c1_i32_112 : i32
    %490 = arith.extui %489 : i1 to i32
    %c0_i32_113 = arith.constant 0 : i32
    %491 = arith.cmpi ne, %490, %c0_i32_113 : i32
    scf.if %491 {
      %c0_114 = arith.constant 0 : index
      %c0_115 = arith.constant 0 : index
      %492 = vector.load %arg7[%c0_114, %c0_115] : memref<1x128xf32, #tpu.memory_space<vmem>>, vector<1x128xf32>
      %493 = vector.broadcast %492 : vector<1x128xf32> to vector<8x128xf32>
      %494 = arith.mulf %484, %493 : vector<8x128xf32>
      %cst_116 = arith.constant dense<0.000000e+00> : vector<8xf32>
      %495 = vector.multi_reduction <add>, %494, %cst_116 [1] : vector<8x128xf32> to vector<8xf32>
      %496 = vector.shape_cast %495 : vector<8xf32> to vector<8x1xf32>
      %c0_117 = arith.constant 0 : index
      %c0_118 = arith.constant 0 : index
      %497 = vector.load %arg8[%c0_117, %c0_118] : memref<1x1xf32, #tpu.memory_space<vmem>>, vector<1x1xf32>
      %498 = vector.broadcast %497 : vector<1x1xf32> to vector<8x1xf32>
      %499 = arith.addf %496, %498 : vector<8x1xf32>
      %500 = arith.negf %499 : vector<8x1xf32>
      %501 = math.exp %500 : vector<8x1xf32>
      %cst_119 = arith.constant 1.000000e+00 : f32
      %502 = vector.broadcast %cst_119 : f32 to vector<8x1xf32>
      %503 = arith.addf %502, %501 : vector<8x1xf32>
      %504 = arith.divf %502, %503 : vector<8x1xf32>
      %c0_120 = arith.constant 0 : index
      %c0_121 = arith.constant 0 : index
      %505 = vector.load %arg9[%c0_120, %c0_121] : memref<8x1xf32, #tpu.memory_space<vmem>>, vector<8x1xf32>
      tpu.vector_store %arg9[%c0_120, %c0_121], %504 {strides = array<i32>} : memref<8x1xf32, #tpu.memory_space<vmem>>, vector<8x1xf32>,
    } else {
    }
    return
  }
  func.func @transform_0(%arg0: i32, %arg1: i32) -> (i32, i32, i32) {
    %c0_i32 = arith.constant 0 : i32
    %c0_i32_0 = arith.constant 0 : i32
    return %arg1, %arg0, %c0_i32 : i32, i32, i32
  }
  func.func @transform_1(%arg0: i32, %arg1: i32) -> (i32, i32) {
    %c0_i32 = arith.constant 0 : i32
    %c0_i32_0 = arith.constant 0 : i32
    %c0_i32_1 = arith.constant 0 : i32
    return %c0_i32, %c0_i32_0 : i32, i32
  }
  func.func @transform_2(%arg0: i32, %arg1: i32) -> (i32, i32) {
    %c0_i32 = arith.constant 0 : i32
    %c0_i32_0 = arith.constant 0 : i32
    %c0_i32_1 = arith.constant 0 : i32
    return %c0_i32, %c0_i32_0 : i32, i32
  }
  func.func @transform_3(%arg0: i32, %arg1: i32) -> (i32, i32) {
    %c0_i32 = arith.constant 0 : i32
    %c0_i32_0 = arith.constant 0 : i32
    %c0_i32_1 = arith.constant 0 : i32
    return %c0_i32, %c0_i32_0 : i32, i32
  }
  func.func @transform_4(%arg0: i32, %arg1: i32) -> (i32, i32) {
    %c0_i32 = arith.constant 0 : i32
    %c0_i32_0 = arith.constant 0 : i32
    %c0_i32_1 = arith.constant 0 : i32
    return %c0_i32, %c0_i32_0 : i32, i32
  }
  func.func @transform_5(%arg0: i32, %arg1: i32) -> (i32, i32) {
    %c0_i32 = arith.constant 0 : i32
    %c0_i32_0 = arith.constant 0 : i32
    %c0_i32_1 = arith.constant 0 : i32
    return %c0_i32, %c0_i32_0 : i32, i32
  }
  func.func @transform_6(%arg0: i32, %arg1: i32) -> (i32, i32) {
    %c0_i32 = arith.constant 0 : i32
    %c0_i32_0 = arith.constant 0 : i32
    %c0_i32_1 = arith.constant 0 : i32
    return %c0_i32, %c0_i32_0 : i32, i32
  }
  func.func @transform_7(%arg0: i32, %arg1: i32) -> (i32, i32) {
    %c0_i32 = arith.constant 0 : i32
    %c0_i32_0 = arith.constant 0 : i32
    return %arg0, %c0_i32 : i32, i32
  }
}

</mosaic_0001>

<llo_original>
// kernel: tpu_custom_call.1
$region0: #{tpu_custom_call.1}
  #allocation0 [shape = 'u32[]', space=smem, size = 0x4, offset = 0x4, fixed_abs, tag = 'smem constant byte address 0x4 - core index']
  #allocation1 [shape = 'u32[144,128]{1,0:T(1,128)}', space=vmem, size = 0x12000, scoped, tag = 'internal scratch']
  #allocation2 [shape = 'f32[8,128]{1,0:T(8,128)}', space=vmem, size = 0x1000, scoped, tag = 'scratch operand']
  #allocation3 [shape = 'f32[8,128]{1,0:T(8,128)}', space=vmem, size = 0x1000, scoped, tag = 'scratch operand']
  #allocation4 [shape = 'f32[8,128]{1,0:T(8,128)}', space=vmem, size = 0x1000, scoped, tag = 'scratch operand']
  #allocation5 [shape = 'f32[8,128]{1,0:T(8,128)}', space=vmem, size = 0x1000, scoped, tag = 'scratch operand']
  #allocation6 [shape = 'f32[1,1]{1,0:T(1,128)S(1)}', space=vmem, size = 0x200, scoped, tag = 'scoped memory for tpu_custom_call.1']
  %s0 = inlined_call_operand.hbm [shape: f32[16,8,512], index: 0, kind: input, shape index: {}]
  %s1 = inlined_call_operand.hbm [shape: f32[128,512], index: 1, kind: input, shape index: {}]
  %s2 = inlined_call_operand.hbm [shape: f32[128,512], index: 2, kind: input, shape index: {}]
  %s3 = inlined_call_operand.hbm [shape: f32[128,512], index: 3, kind: input, shape index: {}]
  %s4 = inlined_call_operand.vmem [shape: f32[1,512], index: 4, kind: input, shape index: {}]
  %s5 = inlined_call_operand.vmem [shape: f32[1,128], index: 5, kind: input, shape index: {}]
  %s6 = inlined_call_operand.<no memory space> [shape: f32[1,1], index: 6, kind: input, shape index: {}]
  %s7 = inlined_call_operand.vmem [shape: f32[8,1], index: 7, kind: output, shape index: {}]
  %s8 = sld [smem:[#allocation0]]
  $region85: #{tpu_custom_call.1} parent=0
    _
  %s10 = ssub.s32 1, %s8
  %s11 = scalar_select 0, %s10, %s8
  %v12 = vstv %s6
  %13 = vst [vmem:[#allocation6] sm:$0x1] %v12
  $region1: #{tpu_custom_call.1} parent=0
    #allocation7 [shape = 'u8[262144]{0}', space=vmem, size = 0x40000, scoped, tag = 'input window, operand 0']
    #allocation8 [shape = 's32[2]{0}', space=sflag, size = 0x8, scoped, tag = 'scoped memory for tpu_custom_call.1']
    #allocation9 [shape = 'u8[262144]{0}', space=vmem, size = 0x40000, scoped, tag = 'input window, operand 1, single buffered']
    #allocation10 [shape = 's32[1]{0}', space=sflag, size = 0x4, scoped, tag = 'scoped memory for tpu_custom_call.1']
    #allocation11 [shape = 'u8[262144]{0}', space=vmem, size = 0x40000, scoped, tag = 'input window, operand 2, single buffered']
    #allocation12 [shape = 'u8[262144]{0}', space=vmem, size = 0x40000, scoped, tag = 'input window, operand 3, single buffered']
    #allocation13 [shape = 's32[1]{0}', space=sflag, size = 0x4, scoped, tag = 'scoped memory for tpu_custom_call.1']
    %14 = vsyncpa [#allocation8], 0
    %s15 = scalar_lea.sflag [#allocation8], 1
    %16 = vsyncpa %s15, 0
    %17 = vsyncpa [#allocation10], 0
    %18 = vsyncpa [#allocation13], 0
    loop: start=0, step=1, limit=4
    $region2: #{tpu_custom_call.1} parent=1 // loop_pre_header
      _
    $region3: #{tpu_custom_call.1} parent=1 // loop_header
      %s20 = sphi 0, %s24
      %p21 = scmp.ge.s32.totalorder %s20, 4
      %s27 = sphi 0, %s39
      %s28 = sphi 0, %s35
      %s29 = sphi 0, %s27
      %s30 = sphi 0, %s28
      %s31 = sphi 0, %s29
      %s32 = sphi 0, %s30
      %s44 = sphi 0, %s46
      %s47 = sphi 0, %s44
      %s48 = sphi 0, %s47
      %s64 = sphi 0, %s48
      %s68 = sphi 0, %s68
      %s70 = sphi 0, %s68
      %s71 = sphi 0, %s70
      %s85 = sphi 0, %s71
      %s89 = sphi 0, %s89
      %s91 = sphi 0, %s89
      %s92 = sphi 0, %s91
      %s106 = sphi 0, %s92
      %s110 = sphi 0, %s110
      %s112 = sphi 0, %s110
      %s113 = sphi 0, %s112
      %s127 = sphi 0, %s113
      %s131 = sphi 0, %s131
      %s133 = sphi 0, %s131
      %s134 = sphi 0, %s133
      %s148 = sphi 0, %s134
      %s152 = sphi 0, %s152
      %s154 = sphi 0, %s152
      %s155 = sphi 0, %s154
      %s169 = sphi 0, %s155
      %s173 = sphi 0, %s173
      %s175 = sphi 0, %s173
      %s176 = sphi 0, %s175
      %s190 = sphi 0, %s176
      %s196 = sphi 0, %s198
      %s199 = sphi 0, %s196
      %s200 = sphi 0, %s199
      %s216 = sphi 0, %s200
    $region4: #{tpu_custom_call.1} parent=1 // loop_header_branch
      %23 = sbr.rel (%p21) target = $region8
    $region5: #{tpu_custom_call.1} parent=1 // loop_body
      %s25 = ssub.s32 %s20, 1
      %s26 = ssub.s32 %s20, 2
      %s33 = sadd.s32 1, %s28
      %p34 = scmp.ge.s32.totalorder %s33, 2
      %s35 = scalar_select %p34, 0, %s33
      %s36 = sadd.s32 1, %s27
      %s37 = scalar_select %p34, %s36, %s27
      %p38 = scmp.ge.s32.totalorder %s37, 1
      %s39 = scalar_select %p38, 0, %s37
      %s40 = ssub.s32 %s28, %s35
      %s41 = ssub.s32 %s27, %s39
      %s42 = sor.u32 %s40, %s41
      %p43 = scmp.eq.s32.totalorder %s42, 0
      %s45 = sadd.s32 %s44, 1
      %s46 = scalar_select %p43, %s44, %s45
      %p49 = pneg %p43
      %p50 = scmp.eq.s32.totalorder %s20, 1
      %p51 = por %p49, %p50
      %p52 = scmp.ne.s32.totalorder %s44, %s47
      %p53 = scmp.eq.s32.totalorder %s20, 0
      %p54 = por %p52, %p53
      %p55 = scmp.ne.s32.totalorder %s44, %s47
      %p56 = scmp.eq.s32.totalorder %s25, 1
      %p57 = por %p55, %p56
      %p58 = scmp.ne.s32.totalorder %s47, %s48
      %p59 = scmp.eq.s32.totalorder %s25, 0
      %p60 = por %p58, %p59
      %p61 = scmp.ne.s32.totalorder %s47, %s48
      %p62 = scmp.eq.s32.totalorder %s26, 1
      %p63 = por %p61, %p62
      %p65 = scmp.ne.s32.totalorder %s48, %s64
      %p66 = scmp.eq.s32.totalorder %s26, 0
      %p67 = por %p65, %p66
      %s69 = sadd.s32 %s68, 1
      %p72 = scmp.eq.s32.totalorder %s20, 1
      %p73 = scmp.ne.s32.totalorder %s68, %s70
      %p74 = scmp.eq.s32.totalorder %s20, 0
      %p75 = por %p73, %p74
      %p76 = scmp.ne.s32.totalorder %s68, %s70
      %p77 = scmp.eq.s32.totalorder %s25, 1
      %p78 = por %p76, %p77
      %p79 = scmp.ne.s32.totalorder %s70, %s71
      %p80 = scmp.eq.s32.totalorder %s25, 0
      %p81 = por %p79, %p80
      %p82 = scmp.ne.s32.totalorder %s70, %s71
      %p83 = scmp.eq.s32.totalorder %s26, 1
      %p84 = por %p82, %p83
      %p86 = scmp.ne.s32.totalorder %s71, %s85
      %p87 = scmp.eq.s32.totalorder %s26, 0
      %p88 = por %p86, %p87
      %s90 = sadd.s32 %s89, 1
      %p93 = scmp.eq.s32.totalorder %s20, 1
      %p94 = scmp.ne.s32.totalorder %s89, %s91
      %p95 = scmp.eq.s32.totalorder %s20, 0
      %p96 = por %p94, %p95
      %p97 = scmp.ne.s32.totalorder %s89, %s91
      %p98 = scmp.eq.s32.totalorder %s25, 1
      %p99 = por %p97, %p98
      %p100 = scmp.ne.s32.totalorder %s91, %s92
      %p101 = scmp.eq.s32.totalorder %s25, 0
      %p102 = por %p100, %p101
      %p103 = scmp.ne.s32.totalorder %s91, %s92
      %p104 = scmp.eq.s32.totalorder %s26, 1
      %p105 = por %p103, %p104
      %p107 = scmp.ne.s32.totalorder %s92, %s106
      %p108 = scmp.eq.s32.totalorder %s26, 0
      %p109 = por %p107, %p108
      %s111 = sadd.s32 %s110, 1
      %p114 = scmp.eq.s32.totalorder %s20, 1
      %p115 = scmp.ne.s32.totalorder %s110, %s112
      %p116 = scmp.eq.s32.totalorder %s20, 0
      %p117 = por %p115, %p116
      %p118 = scmp.ne.s32.totalorder %s110, %s112
      %p119 = scmp.eq.s32.totalorder %s25, 1
      %p120 = por %p118, %p119
      %p121 = scmp.ne.s32.totalorder %s112, %s113
      %p122 = scmp.eq.s32.totalorder %s25, 0
      %p123 = por %p121, %p122
      %p124 = scmp.ne.s32.totalorder %s112, %s113
      %p125 = scmp.eq.s32.totalorder %s26, 1
      %p126 = por %p124, %p125
      %p128 = scmp.ne.s32.totalorder %s113, %s127
      %p129 = scmp.eq.s32.totalorder %s26, 0
      %p130 = por %p128, %p129
      %s132 = sadd.s32 %s131, 1
      %p135 = scmp.eq.s32.totalorder %s20, 1
      %p136 = scmp.ne.s32.totalorder %s131, %s133
      %p137 = scmp.eq.s32.totalorder %s20, 0
      %p138 = por %p136, %p137
      %p139 = scmp.ne.s32.totalorder %s131, %s133
      %p140 = scmp.eq.s32.totalorder %s25, 1
      %p141 = por %p139, %p140
      %p142 = scmp.ne.s32.totalorder %s133, %s134
      %p143 = scmp.eq.s32.totalorder %s25, 0
      %p144 = por %p142, %p143
      %p145 = scmp.ne.s32.totalorder %s133, %s134
      %p146 = scmp.eq.s32.totalorder %s26, 1
      %p147 = por %p145, %p146
      %p149 = scmp.ne.s32.totalorder %s134, %s148
      %p150 = scmp.eq.s32.totalorder %s26, 0
      %p151 = por %p149, %p150
      %s153 = sadd.s32 %s152, 1
      %p156 = scmp.eq.s32.totalorder %s20, 1
      %p157 = scmp.ne.s32.totalorder %s152, %s154
      %p158 = scmp.eq.s32.totalorder %s20, 0
      %p159 = por %p157, %p158
      %p160 = scmp.ne.s32.totalorder %s152, %s154
      %p161 = scmp.eq.s32.totalorder %s25, 1
      %p162 = por %p160, %p161
      %p163 = scmp.ne.s32.totalorder %s154, %s155
      %p164 = scmp.eq.s32.totalorder %s25, 0
      %p165 = por %p163, %p164
      %p166 = scmp.ne.s32.totalorder %s154, %s155
      %p167 = scmp.eq.s32.totalorder %s26, 1
      %p168 = por %p166, %p167
      %p170 = scmp.ne.s32.totalorder %s155, %s169
      %p171 = scmp.eq.s32.totalorder %s26, 0
      %p172 = por %p170, %p171
      %s174 = sadd.s32 %s173, 1
      %p177 = scmp.eq.s32.totalorder %s20, 1
      %p178 = scmp.ne.s32.totalorder %s173, %s175
      %p179 = scmp.eq.s32.totalorder %s20, 0
      %p180 = por %p178, %p179
      %p181 = scmp.ne.s32.totalorder %s173, %s175
      %p182 = scmp.eq.s32.totalorder %s25, 1
      %p183 = por %p181, %p182
      %p184 = scmp.ne.s32.totalorder %s175, %s176
      %p185 = scmp.eq.s32.totalorder %s25, 0
      %p186 = por %p184, %p185
      %p187 = scmp.ne.s32.totalorder %s175, %s176
      %p188 = scmp.eq.s32.totalorder %s26, 1
      %p189 = por %p187, %p188
      %p191 = scmp.ne.s32.totalorder %s176, %s190
      %p192 = scmp.eq.s32.totalorder %s26, 0
      %p193 = por %p191, %p192
      %s194 = ssub.s32 %s27, %s39
      %p195 = scmp.eq.s32.totalorder %s194, 0
      %s197 = sadd.s32 %s196, 1
      %s198 = scalar_select %p195, %s196, %s197
      %p201 = pneg %p195
      %p202 = scmp.eq.s32.totalorder %s20, 1
      %p203 = por %p201, %p202
      %p204 = scmp.ne.s32.totalorder %s196, %s199
      %p205 = scmp.eq.s32.totalorder %s20, 0
      %p206 = por %p204, %p205
      %p207 = scmp.ne.s32.totalorder %s196, %s199
      %p208 = scmp.eq.s32.totalorder %s25, 1
      %p209 = por %p207, %p208
      %p210 = scmp.ne.s32.totalorder %s199, %s200
      %p211 = scmp.eq.s32.totalorder %s25, 0
      %p212 = por %p210, %p211
      %p213 = scmp.ne.s32.totalorder %s199, %s200
      %p214 = scmp.eq.s32.totalorder %s26, 1
      %p215 = por %p213, %p214
      %p217 = scmp.ne.s32.totalorder %s200, %s216
      %p218 = scmp.eq.s32.totalorder %s26, 0
      %p219 = por %p217, %p218
      %p220 = scmp.le.s32.totalorder 1, %s20
      %p221 = scmp.lt.s32.totalorder %s20, 3
      %p222 = pnand %p220, %p221
      %p223 = pneg %p222
      // Predicated region
      $region9: #{tpu_custom_call.1} parent=5 // pred_check
        _
      $region10: #{tpu_custom_call.1} parent=5 // pred_check_branch
        %225 = sbr.rel (%p222) target = $region12
      $region11: #{tpu_custom_call.1} parent=5 // pred_region
        %s226 = ssub.s32 %s20, 1
        // Predicated region
        $region13: #{tpu_custom_call.1} parent=11 // pred_check
          %p227 = pneg %p81
        $region14: #{tpu_custom_call.1} parent=11 // pred_check_branch
          %229 = sbr.rel (%p227) target = $region16
        $region15: #{tpu_custom_call.1} parent=11 // pred_region
          %s231 = ssub.s32 8192, 8192
          %232 = vsyncadd [#allocation10], %s231
          %s233 = sshll.u32 [#allocation9], 4
          %s234 = int_to_ptr.vmem [resolvable:$true] %s233
          %239 = dma.hbm_to_vmem [thread:$0]  %s1, 8192, %s234, [#allocation10], 512, 512, 32
        $region16: #{tpu_custom_call.1} parent=11 // pred_fallthru
          _
        // Predicated region
        $region17: #{tpu_custom_call.1} parent=11 // pred_check
          %p240 = pneg %p102
        $region18: #{tpu_custom_call.1} parent=11 // pred_check_branch
          %242 = sbr.rel (%p240) target = $region20
        $region19: #{tpu_custom_call.1} parent=11 // pred_region
          %s244 = ssub.s32 8192, 8192
          %245 = vsyncadd [#allocation10], %s244
          %s246 = sshll.u32 [#allocation11], 4
          %s247 = int_to_ptr.vmem [resolvable:$true] %s246
          %252 = dma.hbm_to_vmem [thread:$0]  %s2, 8192, %s247, [#allocation10], 512, 512, 32
        $region20: #{tpu_custom_call.1} parent=11 // pred_fallthru
          _
        // Predicated region
        $region21: #{tpu_custom_call.1} parent=11 // pred_check
          %p253 = pneg %p123
        $region22: #{tpu_custom_call.1} parent=11 // pred_check_branch
          %255 = sbr.rel (%p253) target = $region24
        $region23: #{tpu_custom_call.1} parent=11 // pred_region
          %s257 = ssub.s32 8192, 8192
          %258 = vsyncadd [#allocation13], %s257
          %s259 = sshll.u32 [#allocation12], 4
          %s260 = int_to_ptr.vmem [resolvable:$true] %s259
          %265 = dma.hbm_to_vmem [thread:$0]  %s3, 8192, %s260, [#allocation13], 512, 512, 32
        $region24: #{tpu_custom_call.1} parent=11 // pred_fallthru
          _
        // Predicated region
        $region25: #{tpu_custom_call.1} parent=11 // pred_check
          %p266 = pneg %p144
        $region26: #{tpu_custom_call.1} parent=11 // pred_check_branch
          %268 = sbr.rel (%p266) target = $region28
        $region27: #{tpu_custom_call.1} parent=11 // pred_region
          _
        $region28: #{tpu_custom_call.1} parent=11 // pred_fallthru
          _
        // Predicated region
        $region29: #{tpu_custom_call.1} parent=11 // pred_check
          %p269 = pneg %p165
        $region30: #{tpu_custom_call.1} parent=11 // pred_check_branch
          %271 = sbr.rel (%p269) target = $region32
        $region31: #{tpu_custom_call.1} parent=11 // pred_region
          _
        $region32: #{tpu_custom_call.1} parent=11 // pred_fallthru
          _
        // Predicated region
        $region33: #{tpu_custom_call.1} parent=11 // pred_check
          %p272 = pneg %p186
        $region34: #{tpu_custom_call.1} parent=11 // pred_check_branch
          %274 = sbr.rel (%p272) target = $region36
        $region35: #{tpu_custom_call.1} parent=11 // pred_region
          _
        $region36: #{tpu_custom_call.1} parent=11 // pred_fallthru
          _
      $region12: #{tpu_custom_call.1} parent=5 // pred_fallthru
        _
      %p275 = scmp.lt.s32.totalorder %s20, 2
      // Predicated region
      $region37: #{tpu_custom_call.1} parent=5 // pred_check
        %p276 = pneg %p275
      $region38: #{tpu_custom_call.1} parent=5 // pred_check_branch
        %278 = sbr.rel (%p276) target = $region40
      $region39: #{tpu_custom_call.1} parent=5 // pred_region
        // Predicated region
        $region41: #{tpu_custom_call.1} parent=39 // pred_check
          %p279 = pneg %p54
        $region42: #{tpu_custom_call.1} parent=39 // pred_check_branch
          %281 = sbr.rel (%p279) target = $region44
        $region43: #{tpu_custom_call.1} parent=39 // pred_region
          %s282 = sand.u32 %s44, 1
          %s283 = scalar_lea.sflag [#allocation8], %s282
          %s284 = sand.u32 %s44, 1
          %s285 = smul.addr %s284, 256
          %s286 = scalar_lea.vmem [#allocation7], %s285
          %s287 = smul.u32 8, %s28
          %s289 = ssub.s32 4096, 4096
          %290 = vsyncadd %s283, %s289
          %s291 = smul.addr %s27, 4
          %s292 = smul.addr %s287, 4
          %s293 = sadd.s32 %s291, %s292
          %s294 = smul.addr %s293, 128
          %s295 = scalar_lea.hbm %s0, %s294
          %s296 = sshll.u32 %s286, 4
          %s297 = int_to_ptr.vmem [resolvable:$true] %s296
          %302 = dma.hbm_to_vmem [thread:$0]  %s295, 4096, %s297, %s283, 512, 512, 32
        $region44: #{tpu_custom_call.1} parent=39 // pred_fallthru
          _
      $region40: #{tpu_custom_call.1} parent=5 // pred_fallthru
        _
      %p303 = scmp.le.s32.totalorder 1, %s20
      %p304 = scmp.lt.s32.totalorder %s20, 3
      %p305 = pnand %p303, %p304
      %p306 = pneg %p305
      // Predicated region
      $region45: #{tpu_custom_call.1} parent=5 // pred_check
        _
      $region46: #{tpu_custom_call.1} parent=5 // pred_check_branch
        %308 = sbr.rel (%p305) target = $region48
      $region47: #{tpu_custom_call.1} parent=5 // pred_region
        %s309 = ssub.s32 %s20, 1
        %s310 = sand.u32 %s47, 1
        %s311 = scalar_lea.sflag [#allocation8], %s310
        %s312 = sand.u32 %s47, 1
        %s313 = smul.addr %s312, 256
        %s314 = scalar_lea.vmem [#allocation7], %s313
        // Predicated region
        $region49: #{tpu_custom_call.1} parent=47 // pred_check
          %p315 = pneg %p60
        $region50: #{tpu_custom_call.1} parent=47 // pred_check_branch
          %317 = sbr.rel (%p315) target = $region52
        $region51: #{tpu_custom_call.1} parent=47 // pred_region
          %318 = dma.done %s311, 4096
        $region52: #{tpu_custom_call.1} parent=47 // pred_fallthru
          _
        // Predicated region
        $region53: #{tpu_custom_call.1} parent=47 // pred_check
          %p319 = pneg %p81
        $region54: #{tpu_custom_call.1} parent=47 // pred_check_branch
          %321 = sbr.rel (%p319) target = $region56
        $region55: #{tpu_custom_call.1} parent=47 // pred_region
          %322 = dma.done [#allocation10], 8192
        $region56: #{tpu_custom_call.1} parent=47 // pred_fallthru
          _
        // Predicated region
        $region57: #{tpu_custom_call.1} parent=47 // pred_check
          %p323 = pneg %p102
        $region58: #{tpu_custom_call.1} parent=47 // pred_check_branch
          %325 = sbr.rel (%p323) target = $region60
        $region59: #{tpu_custom_call.1} parent=47 // pred_region
          %326 = dma.done [#allocation10], 8192
        $region60: #{tpu_custom_call.1} parent=47 // pred_fallthru
          _
        // Predicated region
        $region61: #{tpu_custom_call.1} parent=47 // pred_check
          %p327 = pneg %p123
        $region62: #{tpu_custom_call.1} parent=47 // pred_check_branch
          %329 = sbr.rel (%p327) target = $region64
        $region63: #{tpu_custom_call.1} parent=47 // pred_region
          %330 = dma.done [#allocation13], 8192
        $region64: #{tpu_custom_call.1} parent=47 // pred_fallthru
          _
        %s331 = sand.u32 %s47, 1
        %s332 = scalar_lea.sflag [#allocation8], %s331
        %s333 = sand.u32 %s47, 1
        %s334 = smul.addr %s333, 256
        %s335 = scalar_lea.vmem [#allocation7], %s334
        %p336 = pneg %p60
        %p337 = pneg %p57
        %p338 = pneg %p81
        %p339 = pneg %p78
        %p340 = pneg %p102
        %p341 = pneg %p99
        %p342 = pneg %p123
        %p343 = pneg %p120
        %p344 = pneg %p144
        %p345 = pneg %p141
        %p346 = pneg %p165
        %p347 = pneg %p162
        %p348 = pneg %p186
        %p349 = pneg %p183
        %p350 = pneg %p212
        %p351 = pneg %p209
        %p352 = scmp.lt.s32.totalorder %s29, 0
        %s353 = scalar_select %p352, %s29, 0
        %s354 = smul.addr %s353, 8
        %s355 = scalar_lea.vmem %s7, %s354
        %s356 = smul.u32 8, %s30
        %p357 = scmp.lt.s32.totalorder %s29, 0
        %s358 = scalar_select %p357, %s29, 0
        %s359 = smul.addr %s358, 8
        %s360 = scalar_lea.vmem %s7, %s359
        %p361 = scmp.eq.s32.totalorder %s30, 0
        // Predicated region
        $region65: #{tpu_custom_call.1} parent=47 // pred_check
          %p362 = pneg %p361
        $region66: #{tpu_custom_call.1} parent=47 // pred_check_branch
          %364 = sbr.rel (%p362) target = $region68
        $region67: #{tpu_custom_call.1} parent=47 // pred_region
          %365 = vst [vmem:[#allocation2] sm:$0xff] 0.0
          %366 = vst [vmem:[#allocation3] sm:$0xff] 0.0
          %367 = vst [vmem:[#allocation4] sm:$0xff] 0.0
          %368 = vst [vmem:[#allocation5] sm:$0xff] 0.0
        $region68: #{tpu_custom_call.1} parent=47 // pred_fallthru
          _
        %v369 = vld [vmem:[#allocation9] sm:$0xff]
        %v370 = vld [vmem:[#allocation9 + $0x8] sm:$0xff]
        %v371 = vld [vmem:[#allocation9 + $0x10] sm:$0xff]
        %v372 = vld [vmem:[#allocation9 + $0x18] sm:$0xff]
        %v373 = vld [vmem:[#allocation9 + $0x20] sm:$0xff]
        %v374 = vld [vmem:[#allocation9 + $0x28] sm:$0xff]
        %v375 = vld [vmem:[#allocation9 + $0x30] sm:$0xff]
        %v376 = vld [vmem:[#allocation9 + $0x38] sm:$0xff]
        %v377 = vld [vmem:[#allocation9 + $0x40] sm:$0xff]
        %v378 = vld [vmem:[#allocation9 + $0x48] sm:$0xff]
        %v379 = vld [vmem:[#allocation9 + $0x50] sm:$0xff]
        %v380 = vld [vmem:[#allocation9 + $0x58] sm:$0xff]
        %v381 = vld [vmem:[#allocation9 + $0x60] sm:$0xff]
        %v382 = vld [vmem:[#allocation9 + $0x68] sm:$0xff]
        %v383 = vld [vmem:[#allocation9 + $0x70] sm:$0xff]
        %v384 = vld [vmem:[#allocation9 + $0x78] sm:$0xff]
        %v385 = vld [vmem:[#allocation9 + $0x80] sm:$0xff]
        %v386 = vld [vmem:[#allocation9 + $0x88] sm:$0xff]
        %v387 = vld [vmem:[#allocation9 + $0x90] sm:$0xff]
        %v388 = vld [vmem:[#allocation9 + $0x98] sm:$0xff]
        %v389 = vld [vmem:[#allocation9 + $0xa0] sm:$0xff]
        %v390 = vld [vmem:[#allocation9 + $0xa8] sm:$0xff]
        %v391 = vld [vmem:[#allocation9 + $0xb0] sm:$0xff]
        %v392 = vld [vmem:[#allocation9 + $0xb8] sm:$0xff]
        %v393 = vld [vmem:[#allocation9 + $0xc0] sm:$0xff]
        %v394 = vld [vmem:[#allocation9 + $0xc8] sm:$0xff]
        %v395 = vld [vmem:[#allocation9 + $0xd0] sm:$0xff]
        %v396 = vld [vmem:[#allocation9 + $0xd8] sm:$0xff]
        %v397 = vld [vmem:[#allocation9 + $0xe0] sm:$0xff]
        %v398 = vld [vmem:[#allocation9 + $0xe8] sm:$0xff]
        %v399 = vld [vmem:[#allocation9 + $0xf0] sm:$0xff]
        %v400 = vld [vmem:[#allocation9 + $0xf8] sm:$0xff]
        %v401 = vld [vmem:[#allocation9 + $0x100] sm:$0xff]
        %v402 = vld [vmem:[#allocation9 + $0x108] sm:$0xff]
        %v403 = vld [vmem:[#allocation9 + $0x110] sm:$0xff]
        %v404 = vld [vmem:[#allocation9 + $0x118] sm:$0xff]
        %v405 = vld [vmem:[#allocation9 + $0x120] sm:$0xff]
        %v406 = vld [vmem:[#allocation9 + $0x128] sm:$0xff]
        %v407 = vld [vmem:[#allocation9 + $0x130] sm:$0xff]
        %v408 = vld [vmem:[#allocation9 + $0x138] sm:$0xff]
        %v409 = vld [vmem:[#allocation9 + $0x140] sm:$0xff]
        %v410 = vld [vmem:[#allocation9 + $0x148] sm:$0xff]
        %v411 = vld [vmem:[#allocation9 + $0x150] sm:$0xff]
        %v412 = vld [vmem:[#allocation9 + $0x158] sm:$0xff]
        %v413 = vld [vmem:[#allocation9 + $0x160] sm:$0xff]
        %v414 = vld [vmem:[#allocation9 + $0x168] sm:$0xff]
        %v415 = vld [vmem:[#allocation9 + $0x170] sm:$0xff]
        %v416 = vld [vmem:[#allocation9 + $0x178] sm:$0xff]
        %v417 = vld [vmem:[#allocation9 + $0x180] sm:$0xff]
        %v418 = vld [vmem:[#allocation9 + $0x188] sm:$0xff]
        %v419 = vld [vmem:[#allocation9 + $0x190] sm:$0xff]
        %v420 = vld [vmem:[#allocation9 + $0x198] sm:$0xff]
        %v421 = vld [vmem:[#allocation9 + $0x1a0] sm:$0xff]
        %v422 = vld [vmem:[#allocation9 + $0x1a8] sm:$0xff]
        %v423 = vld [vmem:[#allocation9 + $0x1b0] sm:$0xff]
        %v424 = vld [vmem:[#allocation9 + $0x1b8] sm:$0xff]
        %v425 = vld [vmem:[#allocation9 + $0x1c0] sm:$0xff]
        %v426 = vld [vmem:[#allocation9 + $0x1c8] sm:$0xff]
        %v427 = vld [vmem:[#allocation9 + $0x1d0] sm:$0xff]
        %v428 = vld [vmem:[#allocation9 + $0x1d8] sm:$0xff]
        %v429 = vld [vmem:[#allocation9 + $0x1e0] sm:$0xff]
        %v430 = vld [vmem:[#allocation9 + $0x1e8] sm:$0xff]
        %v431 = vld [vmem:[#allocation9 + $0x1f0] sm:$0xff]
        %v432 = vld [vmem:[#allocation9 + $0x1f8] sm:$0xff]
        %v433 = vld [vmem:[#allocation11] sm:$0xff]
        %v434 = vld [vmem:[#allocation11 + $0x8] sm:$0xff]
        %v435 = vld [vmem:[#allocation11 + $0x10] sm:$0xff]
        %v436 = vld [vmem:[#allocation11 + $0x18] sm:$0xff]
        %v437 = vld [vmem:[#allocation11 + $0x20] sm:$0xff]
        %v438 = vld [vmem:[#allocation11 + $0x28] sm:$0xff]
        %v439 = vld [vmem:[#allocation11 + $0x30] sm:$0xff]
        %v440 = vld [vmem:[#allocation11 + $0x38] sm:$0xff]
        %v441 = vld [vmem:[#allocation11 + $0x40] sm:$0xff]
        %v442 = vld [vmem:[#allocation11 + $0x48] sm:$0xff]
        %v443 = vld [vmem:[#allocation11 + $0x50] sm:$0xff]
        %v444 = vld [vmem:[#allocation11 + $0x58] sm:$0xff]
        %v445 = vld [vmem:[#allocation11 + $0x60] sm:$0xff]
        %v446 = vld [vmem:[#allocation11 + $0x68] sm:$0xff]
        %v447 = vld [vmem:[#allocation11 + $0x70] sm:$0xff]
        %v448 = vld [vmem:[#allocation11 + $0x78] sm:$0xff]
        %v449 = vld [vmem:[#allocation11 + $0x80] sm:$0xff]
        %v450 = vld [vmem:[#allocation11 + $0x88] sm:$0xff]
        %v451 = vld [vmem:[#allocation11 + $0x90] sm:$0xff]
        %v452 = vld [vmem:[#allocation11 + $0x98] sm:$0xff]
        %v453 = vld [vmem:[#allocation11 + $0xa0] sm:$0xff]
        %v454 = vld [vmem:[#allocation11 + $0xa8] sm:$0xff]
        %v455 = vld [vmem:[#allocation11 + $0xb0] sm:$0xff]
        %v456 = vld [vmem:[#allocation11 + $0xb8] sm:$0xff]
        %v457 = vld [vmem:[#allocation11 + $0xc0] sm:$0xff]
        %v458 = vld [vmem:[#allocation11 + $0xc8] sm:$0xff]
        %v459 = vld [vmem:[#allocation11 + $0xd0] sm:$0xff]
        %v460 = vld [vmem:[#allocation11 + $0xd8] sm:$0xff]
        %v461 = vld [vmem:[#allocation11 + $0xe0] sm:$0xff]
        %v462 = vld [vmem:[#allocation11 + $0xe8] sm:$0xff]
        %v463 = vld [vmem:[#allocation11 + $0xf0] sm:$0xff]
        %v464 = vld [vmem:[#allocation11 + $0xf8] sm:$0xff]
        %v465 = vld [vmem:[#allocation11 + $0x100] sm:$0xff]
        %v466 = vld [vmem:[#allocation11 + $0x108] sm:$0xff]
        %v467 = vld [vmem:[#allocation11 + $0x110] sm:$0xff]
        %v468 = vld [vmem:[#allocation11 + $0x118] sm:$0xff]
        %v469 = vld [vmem:[#allocation11 + $0x120] sm:$0xff]
        %v470 = vld [vmem:[#allocation11 + $0x128] sm:$0xff]
        %v471 = vld [vmem:[#allocation11 + $0x130] sm:$0xff]
        %v472 = vld [vmem:[#allocation11 + $0x138] sm:$0xff]
        %v473 = vld [vmem:[#allocation11 + $0x140] sm:$0xff]
        %v474 = vld [vmem:[#allocation11 + $0x148] sm:$0xff]
        %v475 = vld [vmem:[#allocation11 + $0x150] sm:$0xff]
        %v476 = vld [vmem:[#allocation11 + $0x158] sm:$0xff]
        %v477 = vld [vmem:[#allocation11 + $0x160] sm:$0xff]
        %v478 = vld [vmem:[#allocation11 + $0x168] sm:$0xff]
        %v479 = vld [vmem:[#allocation11 + $0x170] sm:$0xff]
        %v480 = vld [vmem:[#allocation11 + $0x178] sm:$0xff]
        %v481 = vld [vmem:[#allocation11 + $0x180] sm:$0xff]
        %v482 = vld [vmem:[#allocation11 + $0x188] sm:$0xff]
        %v483 = vld [vmem:[#allocation11 + $0x190] sm:$0xff]
        %v484 = vld [vmem:[#allocation11 + $0x198] sm:$0xff]
        %v485 = vld [vmem:[#allocation11 + $0x1a0] sm:$0xff]
        %v486 = vld [vmem:[#allocation11 + $0x1a8] sm:$0xff]
        %v487 = vld [vmem:[#allocation11 + $0x1b0] sm:$0xff]
        %v488 = vld [vmem:[#allocation11 + $0x1b8] sm:$0xff]
        %v489 = vld [vmem:[#allocation11 + $0x1c0] sm:$0xff]
        %v490 = vld [vmem:[#allocation11 + $0x1c8] sm:$0xff]
        %v491 = vld [vmem:[#allocation11 + $0x1d0] sm:$0xff]
        %v492 = vld [vmem:[#allocation11 + $0x1d8] sm:$0xff]
        %v493 = vld [vmem:[#allocation11 + $0x1e0] sm:$0xff]
        %v494 = vld [vmem:[#allocation11 + $0x1e8] sm:$0xff]
        %v495 = vld [vmem:[#allocation11 + $0x1f0] sm:$0xff]
        %v496 = vld [vmem:[#allocation11 + $0x1f8] sm:$0xff]
        %v497 = vld [vmem:[#allocation12] sm:$0xff]
        %v498 = vld [vmem:[#allocation12 + $0x8] sm:$0xff]
        %v499 = vld [vmem:[#allocation12 + $0x10] sm:$0xff]
        %v500 = vld [vmem:[#allocation12 + $0x18] sm:$0xff]
        %v501 = vld [vmem:[#allocation12 + $0x20] sm:$0xff]
        %v502 = vld [vmem:[#allocation12 + $0x28] sm:$0xff]
        %v503 = vld [vmem:[#allocation12 + $0x30] sm:$0xff]
        %v504 = vld [vmem:[#allocation12 + $0x38] sm:$0xff]
        %v505 = vld [vmem:[#allocation12 + $0x40] sm:$0xff]
        %v506 = vld [vmem:[#allocation12 + $0x48] sm:$0xff]
        %v507 = vld [vmem:[#allocation12 + $0x50] sm:$0xff]
        %v508 = vld [vmem:[#allocation12 + $0x58] sm:$0xff]
        %v509 = vld [vmem:[#allocation12 + $0x60] sm:$0xff]
        %v510 = vld [vmem:[#allocation12 + $0x68] sm:$0xff]
        %v511 = vld [vmem:[#allocation12 + $0x70] sm:$0xff]
        %v512 = vld [vmem:[#allocation12 + $0x78] sm:$0xff]
        %v513 = vld [vmem:[#allocation12 + $0x80] sm:$0xff]
        %v514 = vld [vmem:[#allocation12 + $0x88] sm:$0xff]
        %v515 = vld [vmem:[#allocation12 + $0x90] sm:$0xff]
        %v516 = vld [vmem:[#allocation12 + $0x98] sm:$0xff]
        %v517 = vld [vmem:[#allocation12 + $0xa0] sm:$0xff]
        %v518 = vld [vmem:[#allocation12 + $0xa8] sm:$0xff]
        %v519 = vld [vmem:[#allocation12 + $0xb0] sm:$0xff]
        %v520 = vld [vmem:[#allocation12 + $0xb8] sm:$0xff]
        %v521 = vld [vmem:[#allocation12 + $0xc0] sm:$0xff]
        %v522 = vld [vmem:[#allocation12 + $0xc8] sm:$0xff]
        %v523 = vld [vmem:[#allocation12 + $0xd0] sm:$0xff]
        %v524 = vld [vmem:[#allocation12 + $0xd8] sm:$0xff]
        %v525 = vld [vmem:[#allocation12 + $0xe0] sm:$0xff]
        %v526 = vld [vmem:[#allocation12 + $0xe8] sm:$0xff]
        %v527 = vld [vmem:[#allocation12 + $0xf0] sm:$0xff]
        %v528 = vld [vmem:[#allocation12 + $0xf8] sm:$0xff]
        %v529 = vld [vmem:[#allocation12 + $0x100] sm:$0xff]
        %v530 = vld [vmem:[#allocation12 + $0x108] sm:$0xff]
        %v531 = vld [vmem:[#allocation12 + $0x110] sm:$0xff]
        %v532 = vld [vmem:[#allocation12 + $0x118] sm:$0xff]
        %v533 = vld [vmem:[#allocation12 + $0x120] sm:$0xff]
        %v534 = vld [vmem:[#allocation12 + $0x128] sm:$0xff]
        %v535 = vld [vmem:[#allocation12 + $0x130] sm:$0xff]
        %v536 = vld [vmem:[#allocation12 + $0x138] sm:$0xff]
        %v537 = vld [vmem:[#allocation12 + $0x140] sm:$0xff]
        %v538 = vld [vmem:[#allocation12 + $0x148] sm:$0xff]
        %v539 = vld [vmem:[#allocation12 + $0x150] sm:$0xff]
        %v540 = vld [vmem:[#allocation12 + $0x158] sm:$0xff]
        %v541 = vld [vmem:[#allocation12 + $0x160] sm:$0xff]
        %v542 = vld [vmem:[#allocation12 + $0x168] sm:$0xff]
        %v543 = vld [vmem:[#allocation12 + $0x170] sm:$0xff]
        %v544 = vld [vmem:[#allocation12 + $0x178] sm:$0xff]
        %v545 = vld [vmem:[#allocation12 + $0x180] sm:$0xff]
        %v546 = vld [vmem:[#allocation12 + $0x188] sm:$0xff]
        %v547 = vld [vmem:[#allocation12 + $0x190] sm:$0xff]
        %v548 = vld [vmem:[#allocation12 + $0x198] sm:$0xff]
        %v549 = vld [vmem:[#allocation12 + $0x1a0] sm:$0xff]
        %v550 = vld [vmem:[#allocation12 + $0x1a8] sm:$0xff]
        %v551 = vld [vmem:[#allocation12 + $0x1b0] sm:$0xff]
        %v552 = vld [vmem:[#allocation12 + $0x1b8] sm:$0xff]
        %v553 = vld [vmem:[#allocation12 + $0x1c0] sm:$0xff]
        %v554 = vld [vmem:[#allocation12 + $0x1c8] sm:$0xff]
        %v555 = vld [vmem:[#allocation12 + $0x1d0] sm:$0xff]
        %v556 = vld [vmem:[#allocation12 + $0x1d8] sm:$0xff]
        %v557 = vld [vmem:[#allocation12 + $0x1e0] sm:$0xff]
        %v558 = vld [vmem:[#allocation12 + $0x1e8] sm:$0xff]
        %v559 = vld [vmem:[#allocation12 + $0x1f0] sm:$0xff]
        %v560 = vld [vmem:[#allocation12 + $0x1f8] sm:$0xff]
        %v561 = vld [vmem:[%s4] sm:$0xf]
        %v563 = vlaneseq
        %v564 = vshrl.u32 %v563, 7
        %v565 = vsub.s32 0, %v564
        %v566 = vrot.slane %v561, %v565
        %v567 = vlaneseq
        %v568 = vshrl.u32 %v567, 7
        %v569 = vsub.s32 1, %v568
        %v570 = vrot.slane %v561, %v569
        %v571 = vlaneseq
        %v572 = vshrl.u32 %v571, 7
        %v573 = vsub.s32 2, %v572
        %v574 = vrot.slane %v561, %v573
        %v575 = vlaneseq
        %v576 = vshrl.u32 %v575, 7
        %v577 = vsub.s32 3, %v576
        %v578 = vrot.slane %v561, %v577
        %v583 = vld [vmem:[#allocation2] sm:$0xff]
        %v584 = vld [vmem:[#allocation3] sm:$0xff]
        %v585 = vld [vmem:[#allocation4] sm:$0xff]
        %v586 = vld [vmem:[#allocation5] sm:$0xff]
        %587 = vmatprep.subr.mxu0 %v498
        %588 = vmatpush1.msra.mxu0 %v497
        %589 = vmatprep.subr.mxu0 %v502
        %590 = vmatpush1.msra.mxu0 %v501
        %591 = vmatprep.subr.mxu0 %v506
        %592 = vmatpush1.msra.mxu0 %v505
        %593 = vmatprep.subr.mxu0 %v510
        %594 = vmatpush1.msra.mxu0 %v509
        %595 = vmatprep.subr.mxu0 %v514
        %596 = vmatpush1.msra.mxu0 %v513
        %597 = vmatprep.subr.mxu0 %v518
        %598 = vmatpush1.msra.mxu0 %v517
        %599 = vmatprep.subr.mxu0 %v522
        %600 = vmatpush1.msra.mxu0 %v521
        %601 = vmatprep.subr.mxu0 %v526
        %602 = vmatpush1.msra.mxu0 %v525
        %603 = vmatprep.subr.mxu0 %v530
        %604 = vmatpush1.msra.mxu0 %v529
        %605 = vmatprep.subr.mxu0 %v534
        %606 = vmatpush1.msra.mxu0 %v533
        %607 = vmatprep.subr.mxu0 %v538
        %608 = vmatpush1.msra.mxu0 %v537
        %609 = vmatprep.subr.mxu0 %v542
        %610 = vmatpush1.msra.mxu0 %v541
        %611 = vmatprep.subr.mxu0 %v546
        %612 = vmatpush1.msra.mxu0 %v545
        %613 = vmatprep.subr.mxu0 %v550
        %614 = vmatpush1.msra.mxu0 %v549
        %615 = vmatprep.subr.mxu0 %v554
        %616 = vmatpush1.msra.mxu0 %v553
        %617 = vmatprep.subr.mxu0 %v558
        %618 = vmatpush1.msra.mxu0 %v557
        %619 = vmatprep.subr.mxu0 0.0
        %620 = vmatpush1.msra.mxu0 0.0
        %621 = vmatprep.subr.mxu0 0.0
        %622 = vmatpush1.msra.mxu0 0.0
        %623 = vmatprep.subr.mxu0 0.0
        %624 = vmatpush1.msra.mxu0 0.0
        %625 = vmatprep.subr.mxu0 0.0
        %626 = vmatpush1.msra.mxu0 0.0
        %627 = vmatprep.subr.mxu0 0.0
        %628 = vmatpush1.msra.mxu0 0.0
        %629 = vmatprep.subr.mxu0 0.0
        %630 = vmatpush1.msra.mxu0 0.0
        %631 = vmatprep.subr.mxu0 0.0
        %632 = vmatpush1.msra.mxu0 0.0
        %633 = vmatprep.subr.mxu0 0.0
        %634 = vmatpush1.msra.mxu0 0.0
        %635 = vmatprep.subr.mxu0 0.0
        %636 = vmatpush1.msra.mxu0 0.0
        %637 = vmatprep.subr.mxu0 0.0
        %638 = vmatpush1.msra.mxu0 0.0
        %639 = vmatprep.subr.mxu0 0.0
        %640 = vmatpush1.msra.mxu0 0.0
        %641 = vmatprep.subr.mxu0 0.0
        %642 = vmatpush1.msra.mxu0 0.0
        %643 = vmatprep.subr.mxu0 0.0
        %644 = vmatpush1.msra.mxu0 0.0
        %645 = vmatprep.subr.mxu0 0.0
        %646 = vmatpush1.msra.mxu0 0.0
        %647 = vmatprep.subr.mxu0 0.0
        %648 = vmatpush1.msra.mxu0 0.0
        %649 = vmatprep.subr.mxu0 0.0
        %650 = vmatpush1.msra.mxu0 0.0
        %651 = vmatprep.mubr.f32.mxu0 0.0
        %652 = vmatmul.mubr.f32.gmra.mrb[0].mxu0 %v585
        %v653 = vpop.f32.mrb[0].mxu0
        %v654 = vadd.f32 0.0, %v653
        %v655 = vpop.f32.mrb[0].mxu0
        %v656 = vadd.f32 0.0, %v655
        %657 = vdwg.mxu0
        %658 = vmatprep.subr.mxu0 %v500
        %659 = vmatpush1.msra.mxu0 %v499
        %660 = vmatprep.subr.mxu0 %v504
        %661 = vmatpush1.msra.mxu0 %v503
        %662 = vmatprep.subr.mxu0 %v508
        %663 = vmatpush1.msra.mxu0 %v507
        %664 = vmatprep.subr.mxu0 %v512
        %665 = vmatpush1.msra.mxu0 %v511
        %666 = vmatprep.subr.mxu0 %v516
        %667 = vmatpush1.msra.mxu0 %v515
        %668 = vmatprep.subr.mxu0 %v520
        %669 = vmatpush1.msra.mxu0 %v519
        %670 = vmatprep.subr.mxu0 %v524
        %671 = vmatpush1.msra.mxu0 %v523
        %672 = vmatprep.subr.mxu0 %v528
        %673 = vmatpush1.msra.mxu0 %v527
        %674 = vmatprep.subr.mxu0 %v532
        %675 = vmatpush1.msra.mxu0 %v531
        %676 = vmatprep.subr.mxu0 %v536
        %677 = vmatpush1.msra.mxu0 %v535
        %678 = vmatprep.subr.mxu0 %v540
        %679 = vmatpush1.msra.mxu0 %v539
        %680 = vmatprep.subr.mxu0 %v544
        %681 = vmatpush1.msra.mxu0 %v543
        %682 = vmatprep.subr.mxu0 %v548
        %683 = vmatpush1.msra.mxu0 %v547
        %684 = vmatprep.subr.mxu0 %v552
        %685 = vmatpush1.msra.mxu0 %v551
        %686 = vmatprep.subr.mxu0 %v556
        %687 = vmatpush1.msra.mxu0 %v555
        %688 = vmatprep.subr.mxu0 %v560
        %689 = vmatpush1.msra.mxu0 %v559
        %690 = vmatprep.subr.mxu0 0.0
        %691 = vmatpush1.msra.mxu0 0.0
        %692 = vmatprep.subr.mxu0 0.0
        %693 = vmatpush1.msra.mxu0 0.0
        %694 = vmatprep.subr.mxu0 0.0
        %695 = vmatpush1.msra.mxu0 0.0
        %696 = vmatprep.subr.mxu0 0.0
        %697 = vmatpush1.msra.mxu0 0.0
        %698 = vmatprep.subr.mxu0 0.0
        %699 = vmatpush1.msra.mxu0 0.0
        %700 = vmatprep.subr.mxu0 0.0
        %701 = vmatpush1.msra.mxu0 0.0
        %702 = vmatprep.subr.mxu0 0.0
        %703 = vmatpush1.msra.mxu0 0.0
        %704 = vmatprep.subr.mxu0 0.0
        %705 = vmatpush1.msra.mxu0 0.0
        %706 = vmatprep.subr.mxu0 0.0
        %707 = vmatpush1.msra.mxu0 0.0
        %708 = vmatprep.subr.mxu0 0.0
        %709 = vmatpush1.msra.mxu0 0.0
        %710 = vmatprep.subr.mxu0 0.0
        %711 = vmatpush1.msra.mxu0 0.0
        %712 = vmatprep.subr.mxu0 0.0
        %713 = vmatpush1.msra.mxu0 0.0
        %714 = vmatprep.subr.mxu0 0.0
        %715 = vmatpush1.msra.mxu0 0.0
        %716 = vmatprep.subr.mxu0 0.0
        %717 = vmatpush1.msra.mxu0 0.0
        %718 = vmatprep.subr.mxu0 0.0
        %719 = vmatpush1.msra.mxu0 0.0
        %720 = vmatprep.subr.mxu0 0.0
        %721 = vmatpush1.msra.mxu0 0.0
        %722 = vmatprep.mubr.f32.mxu0 0.0
        %723 = vmatmul.mubr.f32.gmra.mrb[0].mxu0 %v585
        %v724 = vpop.f32.mrb[0].mxu0
        %v725 = vadd.f32 0.0, %v724
        %v726 = vpop.f32.mrb[0].mxu0
        %v727 = vadd.f32 0.0, %v726
        %728 = vdwg.mxu0
        %v729 = vld [vmem:[%s314] sm:$0xff]
        %v730 = vld [vmem:[%s314 + $0x8] sm:$0xff]
        %v731 = vld [vmem:[%s314 + $0x10] sm:$0xff]
        %v732 = vld [vmem:[%s314 + $0x18] sm:$0xff]
        %733 = vmatprep.subr.mxu0 %v370
        %734 = vmatpush1.msra.mxu0 %v369
        %735 = vmatprep.subr.mxu0 %v374
        %736 = vmatpush1.msra.mxu0 %v373
        %737 = vmatprep.subr.mxu0 %v378
        %738 = vmatpush1.msra.mxu0 %v377
        %739 = vmatprep.subr.mxu0 %v382
        %740 = vmatpush1.msra.mxu0 %v381
        %741 = vmatprep.subr.mxu0 %v386
        %742 = vmatpush1.msra.mxu0 %v385
        %743 = vmatprep.subr.mxu0 %v390
        %744 = vmatpush1.msra.mxu0 %v389
        %745 = vmatprep.subr.mxu0 %v394
        %746 = vmatpush1.msra.mxu0 %v393
        %747 = vmatprep.subr.mxu0 %v398
        %748 = vmatpush1.msra.mxu0 %v397
        %749 = vmatprep.subr.mxu0 %v402
        %750 = vmatpush1.msra.mxu0 %v401
        %751 = vmatprep.subr.mxu0 %v406
        %752 = vmatpush1.msra.mxu0 %v405
        %753 = vmatprep.subr.mxu0 %v410
        %754 = vmatpush1.msra.mxu0 %v409
        %755 = vmatprep.subr.mxu0 %v414
        %756 = vmatpush1.msra.mxu0 %v413
        %757 = vmatprep.subr.mxu0 %v418
        %758 = vmatpush1.msra.mxu0 %v417
        %759 = vmatprep.subr.mxu0 %v422
        %760 = vmatpush1.msra.mxu0 %v421
        %761 = vmatprep.subr.mxu0 %v426
        %762 = vmatpush1.msra.mxu0 %v425
        %763 = vmatprep.subr.mxu0 %v430
        %764 = vmatpush1.msra.mxu0 %v429
        %765 = vmatprep.subr.mxu0 0.0
        %766 = vmatpush1.msra.mxu0 0.0
        %767 = vmatprep.subr.mxu0 0.0
        %768 = vmatpush1.msra.mxu0 0.0
        %769 = vmatprep.subr.mxu0 0.0
        %770 = vmatpush1.msra.mxu0 0.0
        %771 = vmatprep.subr.mxu0 0.0
        %772 = vmatpush1.msra.mxu0 0.0
        %773 = vmatprep.subr.mxu0 0.0
        %774 = vmatpush1.msra.mxu0 0.0
        %775 = vmatprep.subr.mxu0 0.0
        %776 = vmatpush1.msra.mxu0 0.0
        %777 = vmatprep.subr.mxu0 0.0
        %778 = vmatpush1.msra.mxu0 0.0
        %779 = vmatprep.subr.mxu0 0.0
        %780 = vmatpush1.msra.mxu0 0.0
        %781 = vmatprep.subr.mxu0 0.0
        %782 = vmatpush1.msra.mxu0 0.0
        %783 = vmatprep.subr.mxu0 0.0
        %784 = vmatpush1.msra.mxu0 0.0
        %785 = vmatprep.subr.mxu0 0.0
        %786 = vmatpush1.msra.mxu0 0.0
        %787 = vmatprep.subr.mxu0 0.0
        %788 = vmatpush1.msra.mxu0 0.0
        %789 = vmatprep.subr.mxu0 0.0
        %790 = vmatpush1.msra.mxu0 0.0
        %791 = vmatprep.subr.mxu0 0.0
        %792 = vmatpush1.msra.mxu0 0.0
        %793 = vmatprep.subr.mxu0 0.0
        %794 = vmatpush1.msra.mxu0 0.0
        %795 = vmatprep.subr.mxu0 0.0
        %796 = vmatpush1.msra.mxu0 0.0
        %797 = vmatprep.mubr.f32.mxu0 0.0
        %798 = vmatmul.mubr.f32.gmra.mrb[0].mxu0 %v583
        %v799 = vpop.f32.mrb[0].mxu0
        %v800 = vadd.f32 0.0, %v799
        %v801 = vpop.f32.mrb[0].mxu0
        %v802 = vadd.f32 0.0, %v801
        %803 = vdwg.mxu0
        %804 = vmatprep.subr.mxu0 %v372
        %805 = vmatpush1.msra.mxu0 %v371
        %806 = vmatprep.subr.mxu0 %v376
        %807 = vmatpush1.msra.mxu0 %v375
        %808 = vmatprep.subr.mxu0 %v380
        %809 = vmatpush1.msra.mxu0 %v379
        %810 = vmatprep.subr.mxu0 %v384
        %811 = vmatpush1.msra.mxu0 %v383
        %812 = vmatprep.subr.mxu0 %v388
        %813 = vmatpush1.msra.mxu0 %v387
        %814 = vmatprep.subr.mxu0 %v392
        %815 = vmatpush1.msra.mxu0 %v391
        %816 = vmatprep.subr.mxu0 %v396
        %817 = vmatpush1.msra.mxu0 %v395
        %818 = vmatprep.subr.mxu0 %v400
        %819 = vmatpush1.msra.mxu0 %v399
        %820 = vmatprep.subr.mxu0 %v404
        %821 = vmatpush1.msra.mxu0 %v403
        %822 = vmatprep.subr.mxu0 %v408
        %823 = vmatpush1.msra.mxu0 %v407
        %824 = vmatprep.subr.mxu0 %v412
        %825 = vmatpush1.msra.mxu0 %v411
        %826 = vmatprep.subr.mxu0 %v416
        %827 = vmatpush1.msra.mxu0 %v415
        %828 = vmatprep.subr.mxu0 %v420
        %829 = vmatpush1.msra.mxu0 %v419
        %830 = vmatprep.subr.mxu0 %v424
        %831 = vmatpush1.msra.mxu0 %v423
        %832 = vmatprep.subr.mxu0 %v428
        %833 = vmatpush1.msra.mxu0 %v427
        %834 = vmatprep.subr.mxu0 %v432
        %835 = vmatpush1.msra.mxu0 %v431
        %836 = vmatprep.subr.mxu0 0.0
        %837 = vmatpush1.msra.mxu0 0.0
        %838 = vmatprep.subr.mxu0 0.0
        %839 = vmatpush1.msra.mxu0 0.0
        %840 = vmatprep.subr.mxu0 0.0
        %841 = vmatpush1.msra.mxu0 0.0
        %842 = vmatprep.subr.mxu0 0.0
        %843 = vmatpush1.msra.mxu0 0.0
        %844 = vmatprep.subr.mxu0 0.0
        %845 = vmatpush1.msra.mxu0 0.0
        %846 = vmatprep.subr.mxu0 0.0
        %847 = vmatpush1.msra.mxu0 0.0
        %848 = vmatprep.subr.mxu0 0.0
        %849 = vmatpush1.msra.mxu0 0.0
        %850 = vmatprep.subr.mxu0 0.0
        %851 = vmatpush1.msra.mxu0 0.0
        %852 = vmatprep.subr.mxu0 0.0
        %853 = vmatpush1.msra.mxu0 0.0
        %854 = vmatprep.subr.mxu0 0.0
        %855 = vmatpush1.msra.mxu0 0.0
        %856 = vmatprep.subr.mxu0 0.0
        %857 = vmatpush1.msra.mxu0 0.0
        %858 = vmatprep.subr.mxu0 0.0
        %859 = vmatpush1.msra.mxu0 0.0
        %860 = vmatprep.subr.mxu0 0.0
        %861 = vmatpush1.msra.mxu0 0.0
        %862 = vmatprep.subr.mxu0 0.0
        %863 = vmatpush1.msra.mxu0 0.0
        %864 = vmatprep.subr.mxu0 0.0
        %865 = vmatpush1.msra.mxu0 0.0
        %866 = vmatprep.subr.mxu0 0.0
        %867 = vmatpush1.msra.mxu0 0.0
        %868 = vmatprep.mubr.f32.mxu0 0.0
        %869 = vmatmul.mubr.f32.gmra.mrb[0].mxu0 %v583
        %v870 = vpop.f32.mrb[0].mxu0
        %v871 = vadd.f32 0.0, %v870
        %v872 = vpop.f32.mrb[0].mxu0
        %v873 = vadd.f32 0.0, %v872
        %874 = vdwg.mxu0
        %v875 = vadd.f32 %v729, %v800
        %v876 = vadd.f32 %v730, %v802
        %v877 = vadd.f32 %v731, %v871
        %v878 = vadd.f32 %v732, %v873
        %v879 = vxor.u32 %v875, 2147483648
        %v880 = vmul.f32 %v879, 1.442695
        %v881 = vpow.pop %v880
        %v882 = vadd.f32 %v881, 1.0
        %v883 = vrcp.pop %v882
        %v884 = vmul.f32 1.0, %v883
        %v885 = vxor.u32 %v876, 2147483648
        %v886 = vmul.f32 %v885, 1.442695
        %v887 = vpow.pop %v886
        %v888 = vadd.f32 %v887, 1.0
        %v889 = vrcp.pop %v888
        %v890 = vmul.f32 1.0, %v889
        %v891 = vtanh.pop %v877
        %v892 = vxor.u32 %v878, 2147483648
        %v893 = vmul.f32 %v892, 1.442695
        %v894 = vpow.pop %v893
        %v895 = vadd.f32 %v894, 1.0
        %v896 = vrcp.pop %v895
        %v897 = vmul.f32 1.0, %v896
        %v898 = vmul.f32 %v890, %v584
        %v899 = vmul.f32 %v884, %v891
        %v900 = vadd.f32 %v898, %v899
        %v901 = vtanh.pop %v900
        %v902 = vmul.f32 %v897, %v901
        %903 = vmatprep.subr.mxu0 %v434
        %904 = vmatpush1.msra.mxu0 %v433
        %905 = vmatprep.subr.mxu0 %v438
        %906 = vmatpush1.msra.mxu0 %v437
        %907 = vmatprep.subr.mxu0 %v442
        %908 = vmatpush1.msra.mxu0 %v441
        %909 = vmatprep.subr.mxu0 %v446
        %910 = vmatpush1.msra.mxu0 %v445
        %911 = vmatprep.subr.mxu0 %v450
        %912 = vmatpush1.msra.mxu0 %v449
        %913 = vmatprep.subr.mxu0 %v454
        %914 = vmatpush1.msra.mxu0 %v453
        %915 = vmatprep.subr.mxu0 %v458
        %916 = vmatpush1.msra.mxu0 %v457
        %917 = vmatprep.subr.mxu0 %v462
        %918 = vmatpush1.msra.mxu0 %v461
        %919 = vmatprep.subr.mxu0 %v466
        %920 = vmatpush1.msra.mxu0 %v465
        %921 = vmatprep.subr.mxu0 %v470
        %922 = vmatpush1.msra.mxu0 %v469
        %923 = vmatprep.subr.mxu0 %v474
        %924 = vmatpush1.msra.mxu0 %v473
        %925 = vmatprep.subr.mxu0 %v478
        %926 = vmatpush1.msra.mxu0 %v477
        %927 = vmatprep.subr.mxu0 %v482
        %928 = vmatpush1.msra.mxu0 %v481
        %929 = vmatprep.subr.mxu0 %v486
        %930 = vmatpush1.msra.mxu0 %v485
        %931 = vmatprep.subr.mxu0 %v490
        %932 = vmatpush1.msra.mxu0 %v489
        %933 = vmatprep.subr.mxu0 %v494
        %934 = vmatpush1.msra.mxu0 %v493
        %935 = vmatprep.subr.mxu0 0.0
        %936 = vmatpush1.msra.mxu0 0.0
        %937 = vmatprep.subr.mxu0 0.0
        %938 = vmatpush1.msra.mxu0 0.0
        %939 = vmatprep.subr.mxu0 0.0
        %940 = vmatpush1.msra.mxu0 0.0
        %941 = vmatprep.subr.mxu0 0.0
        %942 = vmatpush1.msra.mxu0 0.0
        %943 = vmatprep.subr.mxu0 0.0
        %944 = vmatpush1.msra.mxu0 0.0
        %945 = vmatprep.subr.mxu0 0.0
        %946 = vmatpush1.msra.mxu0 0.0
        %947 = vmatprep.subr.mxu0 0.0
        %948 = vmatpush1.msra.mxu0 0.0
        %949 = vmatprep.subr.mxu0 0.0
        %950 = vmatpush1.msra.mxu0 0.0
        %951 = vmatprep.subr.mxu0 0.0
        %952 = vmatpush1.msra.mxu0 0.0
        %953 = vmatprep.subr.mxu0 0.0
        %954 = vmatpush1.msra.mxu0 0.0
        %955 = vmatprep.subr.mxu0 0.0
        %956 = vmatpush1.msra.mxu0 0.0
        %957 = vmatprep.subr.mxu0 0.0
        %958 = vmatpush1.msra.mxu0 0.0
        %959 = vmatprep.subr.mxu0 0.0
        %960 = vmatpush1.msra.mxu0 0.0
        %961 = vmatprep.subr.mxu0 0.0
        %962 = vmatpush1.msra.mxu0 0.0
        %963 = vmatprep.subr.mxu0 0.0
        %964 = vmatpush1.msra.mxu0 0.0
        %965 = vmatprep.subr.mxu0 0.0
        %966 = vmatpush1.msra.mxu0 0.0
        %967 = vmatprep.mubr.f32.mxu0 0.0
        %968 = vmatmul.mubr.f32.gmra.mrb[0].mxu0 %v902
        %v969 = vpop.f32.mrb[0].mxu0
        %v970 = vadd.f32 %v654, %v969
        %v971 = vpop.f32.mrb[0].mxu0
        %v972 = vadd.f32 %v656, %v971
        %973 = vdwg.mxu0
        %974 = vmatprep.subr.mxu0 %v436
        %975 = vmatpush1.msra.mxu0 %v435
        %976 = vmatprep.subr.mxu0 %v440
        %977 = vmatpush1.msra.mxu0 %v439
        %978 = vmatprep.subr.mxu0 %v444
        %979 = vmatpush1.msra.mxu0 %v443
        %980 = vmatprep.subr.mxu0 %v448
        %981 = vmatpush1.msra.mxu0 %v447
        %982 = vmatprep.subr.mxu0 %v452
        %983 = vmatpush1.msra.mxu0 %v451
        %984 = vmatprep.subr.mxu0 %v456
        %985 = vmatpush1.msra.mxu0 %v455
        %986 = vmatprep.subr.mxu0 %v460
        %987 = vmatpush1.msra.mxu0 %v459
        %988 = vmatprep.subr.mxu0 %v464
        %989 = vmatpush1.msra.mxu0 %v463
        %990 = vmatprep.subr.mxu0 %v468
        %991 = vmatpush1.msra.mxu0 %v467
        %992 = vmatprep.subr.mxu0 %v472
        %993 = vmatpush1.msra.mxu0 %v471
        %994 = vmatprep.subr.mxu0 %v476
        %995 = vmatpush1.msra.mxu0 %v475
        %996 = vmatprep.subr.mxu0 %v480
        %997 = vmatpush1.msra.mxu0 %v479
        %998 = vmatprep.subr.mxu0 %v484
        %999 = vmatpush1.msra.mxu0 %v483
        %1000 = vmatprep.subr.mxu0 %v488
        %1001 = vmatpush1.msra.mxu0 %v487
        %1002 = vmatprep.subr.mxu0 %v492
        %1003 = vmatpush1.msra.mxu0 %v491
        %1004 = vmatprep.subr.mxu0 %v496
        %1005 = vmatpush1.msra.mxu0 %v495
        %1006 = vmatprep.subr.mxu0 0.0
        %1007 = vmatpush1.msra.mxu0 0.0
        %1008 = vmatprep.subr.mxu0 0.0
        %1009 = vmatpush1.msra.mxu0 0.0
        %1010 = vmatprep.subr.mxu0 0.0
        %1011 = vmatpush1.msra.mxu0 0.0
        %1012 = vmatprep.subr.mxu0 0.0
        %1013 = vmatpush1.msra.mxu0 0.0
        %1014 = vmatprep.subr.mxu0 0.0
        %1015 = vmatpush1.msra.mxu0 0.0
        %1016 = vmatprep.subr.mxu0 0.0
        %1017 = vmatpush1.msra.mxu0 0.0
        %1018 = vmatprep.subr.mxu0 0.0
        %1019 = vmatpush1.msra.mxu0 0.0
        %1020 = vmatprep.subr.mxu0 0.0
        %1021 = vmatpush1.msra.mxu0 0.0
        %1022 = vmatprep.subr.mxu0 0.0
        %1023 = vmatpush1.msra.mxu0 0.0
        %1024 = vmatprep.subr.mxu0 0.0
        %1025 = vmatpush1.msra.mxu0 0.0
        %1026 = vmatprep.subr.mxu0 0.0
        %1027 = vmatpush1.msra.mxu0 0.0
        %1028 = vmatprep.subr.mxu0 0.0
        %1029 = vmatpush1.msra.mxu0 0.0
        %1030 = vmatprep.subr.mxu0 0.0
        %1031 = vmatpush1.msra.mxu0 0.0
        %1032 = vmatprep.subr.mxu0 0.0
        %1033 = vmatpush1.msra.mxu0 0.0
        %1034 = vmatprep.subr.mxu0 0.0
        %1035 = vmatpush1.msra.mxu0 0.0
        %1036 = vmatprep.subr.mxu0 0.0
        %1037 = vmatpush1.msra.mxu0 0.0
        %1038 = vmatprep.mubr.f32.mxu0 0.0
        %1039 = vmatmul.mubr.f32.gmra.mrb[0].mxu0 %v902
        %v1040 = vpop.f32.mrb[0].mxu0
        %v1041 = vadd.f32 %v725, %v1040
        %v1042 = vpop.f32.mrb[0].mxu0
        %v1043 = vadd.f32 %v727, %v1042
        %1044 = vdwg.mxu0
        %v1045 = vadd.f32 %v970, %v566
        %v1046 = vadd.f32 %v972, %v570
        %v1047 = vadd.f32 %v1041, %v574
        %v1048 = vadd.f32 %v1043, %v578
        %v1049 = vxor.u32 %v1045, 2147483648
        %v1050 = vmul.f32 %v1049, 1.442695
        %v1051 = vpow.pop %v1050
        %v1052 = vadd.f32 %v1051, 1.0
        %v1053 = vrcp.pop %v1052
        %v1054 = vmul.f32 1.0, %v1053
        %v1055 = vxor.u32 %v1046, 2147483648
        %v1056 = vmul.f32 %v1055, 1.442695
        %v1057 = vpow.pop %v1056
        %v1058 = vadd.f32 %v1057, 1.0
        %v1059 = vrcp.pop %v1058
        %v1060 = vmul.f32 1.0, %v1059
        %v1061 = vtanh.pop %v1047
        %v1062 = vxor.u32 %v1048, 2147483648
        %v1063 = vmul.f32 %v1062, 1.442695
        %v1064 = vpow.pop %v1063
        %v1065 = vadd.f32 %v1064, 1.0
        %v1066 = vrcp.pop %v1065
        %v1067 = vmul.f32 1.0, %v1066
        %v1068 = vmul.f32 %v1060, %v586
        %v1069 = vmul.f32 %v1054, %v1061
        %v1070 = vadd.f32 %v1068, %v1069
        %v1071 = vtanh.pop %v1070
        %v1072 = vmul.f32 %v1067, %v1071
        %1073 = vmatprep.subr.mxu0 %v498
        %1074 = vmatpush1.msra.mxu0 %v497
        %1075 = vmatprep.subr.mxu0 %v502
        %1076 = vmatpush1.msra.mxu0 %v501
        %1077 = vmatprep.subr.mxu0 %v506
        %1078 = vmatpush1.msra.mxu0 %v505
        %1079 = vmatprep.subr.mxu0 %v510
        %1080 = vmatpush1.msra.mxu0 %v509
        %1081 = vmatprep.subr.mxu0 %v514
        %1082 = vmatpush1.msra.mxu0 %v513
        %1083 = vmatprep.subr.mxu0 %v518
        %1084 = vmatpush1.msra.mxu0 %v517
        %1085 = vmatprep.subr.mxu0 %v522
        %1086 = vmatpush1.msra.mxu0 %v521
        %1087 = vmatprep.subr.mxu0 %v526
        %1088 = vmatpush1.msra.mxu0 %v525
        %1089 = vmatprep.subr.mxu0 %v530
        %1090 = vmatpush1.msra.mxu0 %v529
        %1091 = vmatprep.subr.mxu0 %v534
        %1092 = vmatpush1.msra.mxu0 %v533
        %1093 = vmatprep.subr.mxu0 %v538
        %1094 = vmatpush1.msra.mxu0 %v537
        %1095 = vmatprep.subr.mxu0 %v542
        %1096 = vmatpush1.msra.mxu0 %v541
        %1097 = vmatprep.subr.mxu0 %v546
        %1098 = vmatpush1.msra.mxu0 %v545
        %1099 = vmatprep.subr.mxu0 %v550
        %1100 = vmatpush1.msra.mxu0 %v549
        %1101 = vmatprep.subr.mxu0 %v554
        %1102 = vmatpush1.msra.mxu0 %v553
        %1103 = vmatprep.subr.mxu0 %v558
        %1104 = vmatpush1.msra.mxu0 %v557
        %1105 = vmatprep.subr.mxu0 0.0
        %1106 = vmatpush1.msra.mxu0 0.0
        %1107 = vmatprep.subr.mxu0 0.0
        %1108 = vmatpush1.msra.mxu0 0.0
        %1109 = vmatprep.subr.mxu0 0.0
        %1110 = vmatpush1.msra.mxu0 0.0
        %1111 = vmatprep.subr.mxu0 0.0
        %1112 = vmatpush1.msra.mxu0 0.0
        %1113 = vmatprep.subr.mxu0 0.0
        %1114 = vmatpush1.msra.mxu0 0.0
        %1115 = vmatprep.subr.mxu0 0.0
        %1116 = vmatpush1.msra.mxu0 0.0
        %1117 = vmatprep.subr.mxu0 0.0
        %1118 = vmatpush1.msra.mxu0 0.0
        %1119 = vmatprep.subr.mxu0 0.0
        %1120 = vmatpush1.msra.mxu0 0.0
        %1121 = vmatprep.subr.mxu0 0.0
        %1122 = vmatpush1.msra.mxu0 0.0
        %1123 = vmatprep.subr.mxu0 0.0
        %1124 = vmatpush1.msra.mxu0 0.0
        %1125 = vmatprep.subr.mxu0 0.0
        %1126 = vmatpush1.msra.mxu0 0.0
        %1127 = vmatprep.subr.mxu0 0.0
        %1128 = vmatpush1.msra.mxu0 0.0
        %1129 = vmatprep.subr.mxu0 0.0
        %1130 = vmatpush1.msra.mxu0 0.0
        %1131 = vmatprep.subr.mxu0 0.0
        %1132 = vmatpush1.msra.mxu0 0.0
        %1133 = vmatprep.subr.mxu0 0.0
        %1134 = vmatpush1.msra.mxu0 0.0
        %1135 = vmatprep.subr.mxu0 0.0
        %1136 = vmatpush1.msra.mxu0 0.0
        %1137 = vmatprep.mubr.f32.mxu0 0.0
        %1138 = vmatmul.mubr.f32.gmra.mrb[0].mxu0 %v1072
        %v1139 = vpop.f32.mrb[0].mxu0
        %v1140 = vadd.f32 0.0, %v1139
        %v1141 = vpop.f32.mrb[0].mxu0
        %v1142 = vadd.f32 0.0, %v1141
        %1143 = vdwg.mxu0
        %1144 = vmatprep.subr.mxu0 %v500
        %1145 = vmatpush1.msra.mxu0 %v499
        %1146 = vmatprep.subr.mxu0 %v504
        %1147 = vmatpush1.msra.mxu0 %v503
        %1148 = vmatprep.subr.mxu0 %v508
        %1149 = vmatpush1.msra.mxu0 %v507
        %1150 = vmatprep.subr.mxu0 %v512
        %1151 = vmatpush1.msra.mxu0 %v511
        %1152 = vmatprep.subr.mxu0 %v516
        %1153 = vmatpush1.msra.mxu0 %v515
        %1154 = vmatprep.subr.mxu0 %v520
        %1155 = vmatpush1.msra.mxu0 %v519
        %1156 = vmatprep.subr.mxu0 %v524
        %1157 = vmatpush1.msra.mxu0 %v523
        %1158 = vmatprep.subr.mxu0 %v528
        %1159 = vmatpush1.msra.mxu0 %v527
        %1160 = vmatprep.subr.mxu0 %v532
        %1161 = vmatpush1.msra.mxu0 %v531
        %1162 = vmatprep.subr.mxu0 %v536
        %1163 = vmatpush1.msra.mxu0 %v535
        %1164 = vmatprep.subr.mxu0 %v540
        %1165 = vmatpush1.msra.mxu0 %v539
        %1166 = vmatprep.subr.mxu0 %v544
        %1167 = vmatpush1.msra.mxu0 %v543
        %1168 = vmatprep.subr.mxu0 %v548
        %1169 = vmatpush1.msra.mxu0 %v547
        %1170 = vmatprep.subr.mxu0 %v552
        %1171 = vmatpush1.msra.mxu0 %v551
        %1172 = vmatprep.subr.mxu0 %v556
        %1173 = vmatpush1.msra.mxu0 %v555
        %1174 = vmatprep.subr.mxu0 %v560
        %1175 = vmatpush1.msra.mxu0 %v559
        %1176 = vmatprep.subr.mxu0 0.0
        %1177 = vmatpush1.msra.mxu0 0.0
        %1178 = vmatprep.subr.mxu0 0.0
        %1179 = vmatpush1.msra.mxu0 0.0
        %1180 = vmatprep.subr.mxu0 0.0
        %1181 = vmatpush1.msra.mxu0 0.0
        %1182 = vmatprep.subr.mxu0 0.0
        %1183 = vmatpush1.msra.mxu0 0.0
        %1184 = vmatprep.subr.mxu0 0.0
        %1185 = vmatpush1.msra.mxu0 0.0
        %1186 = vmatprep.subr.mxu0 0.0
        %1187 = vmatpush1.msra.mxu0 0.0
        %1188 = vmatprep.subr.mxu0 0.0
        %1189 = vmatpush1.msra.mxu0 0.0
        %1190 = vmatprep.subr.mxu0 0.0
        %1191 = vmatpush1.msra.mxu0 0.0
        %1192 = vmatprep.subr.mxu0 0.0
        %1193 = vmatpush1.msra.mxu0 0.0
        %1194 = vmatprep.subr.mxu0 0.0
        %1195 = vmatpush1.msra.mxu0 0.0
        %1196 = vmatprep.subr.mxu0 0.0
        %1197 = vmatpush1.msra.mxu0 0.0
        %1198 = vmatprep.subr.mxu0 0.0
        %1199 = vmatpush1.msra.mxu0 0.0
        %1200 = vmatprep.subr.mxu0 0.0
        %1201 = vmatpush1.msra.mxu0 0.0
        %1202 = vmatprep.subr.mxu0 0.0
        %1203 = vmatpush1.msra.mxu0 0.0
        %1204 = vmatprep.subr.mxu0 0.0
        %1205 = vmatpush1.msra.mxu0 0.0
        %1206 = vmatprep.subr.mxu0 0.0
        %1207 = vmatpush1.msra.mxu0 0.0
        %1208 = vmatprep.mubr.f32.mxu0 0.0
        %1209 = vmatmul.mubr.f32.gmra.mrb[0].mxu0 %v1072
        %v1210 = vpop.f32.mrb[0].mxu0
        %v1211 = vadd.f32 0.0, %v1210
        %v1212 = vpop.f32.mrb[0].mxu0
        %v1213 = vadd.f32 0.0, %v1212
        %1214 = vdwg.mxu0
        %s1215 = scalar_lea.vmem %s314, 32 [#allocation7]
        %v1216 = vld [vmem:[%s1215] sm:$0xff]
        %v1217 = vld [vmem:[%s1215 + $0x8] sm:$0xff]
        %v1218 = vld [vmem:[%s1215 + $0x10] sm:$0xff]
        %v1219 = vld [vmem:[%s1215 + $0x18] sm:$0xff]
        %1220 = vmatprep.subr.mxu0 %v370
        %1221 = vmatpush1.msra.mxu0 %v369
        %1222 = vmatprep.subr.mxu0 %v374
        %1223 = vmatpush1.msra.mxu0 %v373
        %1224 = vmatprep.subr.mxu0 %v378
        %1225 = vmatpush1.msra.mxu0 %v377
        %1226 = vmatprep.subr.mxu0 %v382
        %1227 = vmatpush1.msra.mxu0 %v381
        %1228 = vmatprep.subr.mxu0 %v386
        %1229 = vmatpush1.msra.mxu0 %v385
        %1230 = vmatprep.subr.mxu0 %v390
        %1231 = vmatpush1.msra.mxu0 %v389
        %1232 = vmatprep.subr.mxu0 %v394
        %1233 = vmatpush1.msra.mxu0 %v393
        %1234 = vmatprep.subr.mxu0 %v398
        %1235 = vmatpush1.msra.mxu0 %v397
        %1236 = vmatprep.subr.mxu0 %v402
        %1237 = vmatpush1.msra.mxu0 %v401
        %1238 = vmatprep.subr.mxu0 %v406
        %1239 = vmatpush1.msra.mxu0 %v405
        %1240 = vmatprep.subr.mxu0 %v410
        %1241 = vmatpush1.msra.mxu0 %v409
        %1242 = vmatprep.subr.mxu0 %v414
        %1243 = vmatpush1.msra.mxu0 %v413
        %1244 = vmatprep.subr.mxu0 %v418
        %1245 = vmatpush1.msra.mxu0 %v417
        %1246 = vmatprep.subr.mxu0 %v422
        %1247 = vmatpush1.msra.mxu0 %v421
        %1248 = vmatprep.subr.mxu0 %v426
        %1249 = vmatpush1.msra.mxu0 %v425
        %1250 = vmatprep.subr.mxu0 %v430
        %1251 = vmatpush1.msra.mxu0 %v429
        %1252 = vmatprep.subr.mxu0 0.0
        %1253 = vmatpush1.msra.mxu0 0.0
        %1254 = vmatprep.subr.mxu0 0.0
        %1255 = vmatpush1.msra.mxu0 0.0
        %1256 = vmatprep.subr.mxu0 0.0
        %1257 = vmatpush1.msra.mxu0 0.0
        %1258 = vmatprep.subr.mxu0 0.0
        %1259 = vmatpush1.msra.mxu0 0.0
        %1260 = vmatprep.subr.mxu0 0.0
        %1261 = vmatpush1.msra.mxu0 0.0
        %1262 = vmatprep.subr.mxu0 0.0
        %1263 = vmatpush1.msra.mxu0 0.0
        %1264 = vmatprep.subr.mxu0 0.0
        %1265 = vmatpush1.msra.mxu0 0.0
        %1266 = vmatprep.subr.mxu0 0.0
        %1267 = vmatpush1.msra.mxu0 0.0
        %1268 = vmatprep.subr.mxu0 0.0
        %1269 = vmatpush1.msra.mxu0 0.0
        %1270 = vmatprep.subr.mxu0 0.0
        %1271 = vmatpush1.msra.mxu0 0.0
        %1272 = vmatprep.subr.mxu0 0.0
        %1273 = vmatpush1.msra.mxu0 0.0
        %1274 = vmatprep.subr.mxu0 0.0
        %1275 = vmatpush1.msra.mxu0 0.0
        %1276 = vmatprep.subr.mxu0 0.0
        %1277 = vmatpush1.msra.mxu0 0.0
        %1278 = vmatprep.subr.mxu0 0.0
        %1279 = vmatpush1.msra.mxu0 0.0
        %1280 = vmatprep.subr.mxu0 0.0
        %1281 = vmatpush1.msra.mxu0 0.0
        %1282 = vmatprep.subr.mxu0 0.0
        %1283 = vmatpush1.msra.mxu0 0.0
        %1284 = vmatprep.mubr.f32.mxu0 0.0
        %1285 = vmatmul.mubr.f32.gmra.mrb[0].mxu0 %v902
        %v1286 = vpop.f32.mrb[0].mxu0
        %v1287 = vadd.f32 0.0, %v1286
        %v1288 = vpop.f32.mrb[0].mxu0
        %v1289 = vadd.f32 0.0, %v1288
        %1290 = vdwg.mxu0
        %1291 = vmatprep.subr.mxu0 %v372
        %1292 = vmatpush1.msra.mxu0 %v371
        %1293 = vmatprep.subr.mxu0 %v376
        %1294 = vmatpush1.msra.mxu0 %v375
        %1295 = vmatprep.subr.mxu0 %v380
        %1296 = vmatpush1.msra.mxu0 %v379
        %1297 = vmatprep.subr.mxu0 %v384
        %1298 = vmatpush1.msra.mxu0 %v383
        %1299 = vmatprep.subr.mxu0 %v388
        %1300 = vmatpush1.msra.mxu0 %v387
        %1301 = vmatprep.subr.mxu0 %v392
        %1302 = vmatpush1.msra.mxu0 %v391
        %1303 = vmatprep.subr.mxu0 %v396
        %1304 = vmatpush1.msra.mxu0 %v395
        %1305 = vmatprep.subr.mxu0 %v400
        %1306 = vmatpush1.msra.mxu0 %v399
        %1307 = vmatprep.subr.mxu0 %v404
        %1308 = vmatpush1.msra.mxu0 %v403
        %1309 = vmatprep.subr.mxu0 %v408
        %1310 = vmatpush1.msra.mxu0 %v407
        %1311 = vmatprep.subr.mxu0 %v412
        %1312 = vmatpush1.msra.mxu0 %v411
        %1313 = vmatprep.subr.mxu0 %v416
        %1314 = vmatpush1.msra.mxu0 %v415
        %1315 = vmatprep.subr.mxu0 %v420
        %1316 = vmatpush1.msra.mxu0 %v419
        %1317 = vmatprep.subr.mxu0 %v424
        %1318 = vmatpush1.msra.mxu0 %v423
        %1319 = vmatprep.subr.mxu0 %v428
        %1320 = vmatpush1.msra.mxu0 %v427
        %1321 = vmatprep.subr.mxu0 %v432
        %1322 = vmatpush1.msra.mxu0 %v431
        %1323 = vmatprep.subr.mxu0 0.0
        %1324 = vmatpush1.msra.mxu0 0.0
        %1325 = vmatprep.subr.mxu0 0.0
        %1326 = vmatpush1.msra.mxu0 0.0
        %1327 = vmatprep.subr.mxu0 0.0
        %1328 = vmatpush1.msra.mxu0 0.0
        %1329 = vmatprep.subr.mxu0 0.0
        %1330 = vmatpush1.msra.mxu0 0.0
        %1331 = vmatprep.subr.mxu0 0.0
        %1332 = vmatpush1.msra.mxu0 0.0
        %1333 = vmatprep.subr.mxu0 0.0
        %1334 = vmatpush1.msra.mxu0 0.0
        %1335 = vmatprep.subr.mxu0 0.0
        %1336 = vmatpush1.msra.mxu0 0.0
        %1337 = vmatprep.subr.mxu0 0.0
        %1338 = vmatpush1.msra.mxu0 0.0
        %1339 = vmatprep.subr.mxu0 0.0
        %1340 = vmatpush1.msra.mxu0 0.0
        %1341 = vmatprep.subr.mxu0 0.0
        %1342 = vmatpush1.msra.mxu0 0.0
        %1343 = vmatprep.subr.mxu0 0.0
        %1344 = vmatpush1.msra.mxu0 0.0
        %1345 = vmatprep.subr.mxu0 0.0
        %1346 = vmatpush1.msra.mxu0 0.0
        %1347 = vmatprep.subr.mxu0 0.0
        %1348 = vmatpush1.msra.mxu0 0.0
        %1349 = vmatprep.subr.mxu0 0.0
        %1350 = vmatpush1.msra.mxu0 0.0
        %1351 = vmatprep.subr.mxu0 0.0
        %1352 = vmatpush1.msra.mxu0 0.0
        %1353 = vmatprep.subr.mxu0 0.0
        %1354 = vmatpush1.msra.mxu0 0.0
        %1355 = vmatprep.mubr.f32.mxu0 0.0
        %1356 = vmatmul.mubr.f32.gmra.mrb[0].mxu0 %v902
        %v1357 = vpop.f32.mrb[0].mxu0
        %v1358 = vadd.f32 0.0, %v1357
        %v1359 = vpop.f32.mrb[0].mxu0
        %v1360 = vadd.f32 0.0, %v1359
        %1361 = vdwg.mxu0
        %v1362 = vadd.f32 %v1216, %v1287
        %v1363 = vadd.f32 %v1217, %v1289
        %v1364 = vadd.f32 %v1218, %v1358
        %v1365 = vadd.f32 %v1219, %v1360
        %v1366 = vxor.u32 %v1362, 2147483648
        %v1367 = vmul.f32 %v1366, 1.442695
        %v1368 = vpow.pop %v1367
        %v1369 = vadd.f32 %v1368, 1.0
        %v1370 = vrcp.pop %v1369
        %v1371 = vmul.f32 1.0, %v1370
        %v1372 = vxor.u32 %v1363, 2147483648
        %v1373 = vmul.f32 %v1372, 1.442695
        %v1374 = vpow.pop %v1373
        %v1375 = vadd.f32 %v1374, 1.0
        %v1376 = vrcp.pop %v1375
        %v1377 = vmul.f32 1.0, %v1376
        %v1378 = vtanh.pop %v1364
        %v1379 = vxor.u32 %v1365, 2147483648
        %v1380 = vmul.f32 %v1379, 1.442695
        %v1381 = vpow.pop %v1380
        %v1382 = vadd.f32 %v1381, 1.0
        %v1383 = vrcp.pop %v1382
        %v1384 = vmul.f32 1.0, %v1383
        %v1385 = vmul.f32 %v1377, %v900
        %v1386 = vmul.f32 %v1371, %v1378
        %v1387 = vadd.f32 %v1385, %v1386
        %v1388 = vtanh.pop %v1387
        %v1389 = vmul.f32 %v1384, %v1388
        %1390 = vmatprep.subr.mxu0 %v434
        %1391 = vmatpush1.msra.mxu0 %v433
        %1392 = vmatprep.subr.mxu0 %v438
        %1393 = vmatpush1.msra.mxu0 %v437
        %1394 = vmatprep.subr.mxu0 %v442
        %1395 = vmatpush1.msra.mxu0 %v441
        %1396 = vmatprep.subr.mxu0 %v446
        %1397 = vmatpush1.msra.mxu0 %v445
        %1398 = vmatprep.subr.mxu0 %v450
        %1399 = vmatpush1.msra.mxu0 %v449
        %1400 = vmatprep.subr.mxu0 %v454
        %1401 = vmatpush1.msra.mxu0 %v453
        %1402 = vmatprep.subr.mxu0 %v458
        %1403 = vmatpush1.msra.mxu0 %v457
        %1404 = vmatprep.subr.mxu0 %v462
        %1405 = vmatpush1.msra.mxu0 %v461
        %1406 = vmatprep.subr.mxu0 %v466
        %1407 = vmatpush1.msra.mxu0 %v465
        %1408 = vmatprep.subr.mxu0 %v470
        %1409 = vmatpush1.msra.mxu0 %v469
        %1410 = vmatprep.subr.mxu0 %v474
        %1411 = vmatpush1.msra.mxu0 %v473
        %1412 = vmatprep.subr.mxu0 %v478
        %1413 = vmatpush1.msra.mxu0 %v477
        %1414 = vmatprep.subr.mxu0 %v482
        %1415 = vmatpush1.msra.mxu0 %v481
        %1416 = vmatprep.subr.mxu0 %v486
        %1417 = vmatpush1.msra.mxu0 %v485
        %1418 = vmatprep.subr.mxu0 %v490
        %1419 = vmatpush1.msra.mxu0 %v489
        %1420 = vmatprep.subr.mxu0 %v494
        %1421 = vmatpush1.msra.mxu0 %v493
        %1422 = vmatprep.subr.mxu0 0.0
        %1423 = vmatpush1.msra.mxu0 0.0
        %1424 = vmatprep.subr.mxu0 0.0
        %1425 = vmatpush1.msra.mxu0 0.0
        %1426 = vmatprep.subr.mxu0 0.0
        %1427 = vmatpush1.msra.mxu0 0.0
        %1428 = vmatprep.subr.mxu0 0.0
        %1429 = vmatpush1.msra.mxu0 0.0
        %1430 = vmatprep.subr.mxu0 0.0
        %1431 = vmatpush1.msra.mxu0 0.0
        %1432 = vmatprep.subr.mxu0 0.0
        %1433 = vmatpush1.msra.mxu0 0.0
        %1434 = vmatprep.subr.mxu0 0.0
        %1435 = vmatpush1.msra.mxu0 0.0
        %1436 = vmatprep.subr.mxu0 0.0
        %1437 = vmatpush1.msra.mxu0 0.0
        %1438 = vmatprep.subr.mxu0 0.0
        %1439 = vmatpush1.msra.mxu0 0.0
        %1440 = vmatprep.subr.mxu0 0.0
        %1441 = vmatpush1.msra.mxu0 0.0
        %1442 = vmatprep.subr.mxu0 0.0
        %1443 = vmatpush1.msra.mxu0 0.0
        %1444 = vmatprep.subr.mxu0 0.0
        %1445 = vmatpush1.msra.mxu0 0.0
        %1446 = vmatprep.subr.mxu0 0.0
        %1447 = vmatpush1.msra.mxu0 0.0
        %1448 = vmatprep.subr.mxu0 0.0
        %1449 = vmatpush1.msra.mxu0 0.0
        %1450 = vmatprep.subr.mxu0 0.0
        %1451 = vmatpush1.msra.mxu0 0.0
        %1452 = vmatprep.subr.mxu0 0.0
        %1453 = vmatpush1.msra.mxu0 0.0
        %1454 = vmatprep.mubr.f32.mxu0 0.0
        %1455 = vmatmul.mubr.f32.gmra.mrb[0].mxu0 %v1389
        %v1456 = vpop.f32.mrb[0].mxu0
        %v1457 = vadd.f32 %v1140, %v1456
        %v1458 = vpop.f32.mrb[0].mxu0
        %v1459 = vadd.f32 %v1142, %v1458
        %1460 = vdwg.mxu0
        %1461 = vmatprep.subr.mxu0 %v436
        %1462 = vmatpush1.msra.mxu0 %v435
        %1463 = vmatprep.subr.mxu0 %v440
        %1464 = vmatpush1.msra.mxu0 %v439
        %1465 = vmatprep.subr.mxu0 %v444
        %1466 = vmatpush1.msra.mxu0 %v443
        %1467 = vmatprep.subr.mxu0 %v448
        %1468 = vmatpush1.msra.mxu0 %v447
        %1469 = vmatprep.subr.mxu0 %v452
        %1470 = vmatpush1.msra.mxu0 %v451
        %1471 = vmatprep.subr.mxu0 %v456
        %1472 = vmatpush1.msra.mxu0 %v455
        %1473 = vmatprep.subr.mxu0 %v460
        %1474 = vmatpush1.msra.mxu0 %v459
        %1475 = vmatprep.subr.mxu0 %v464
        %1476 = vmatpush1.msra.mxu0 %v463
        %1477 = vmatprep.subr.mxu0 %v468
        %1478 = vmatpush1.msra.mxu0 %v467
        %1479 = vmatprep.subr.mxu0 %v472
        %1480 = vmatpush1.msra.mxu0 %v471
        %1481 = vmatprep.subr.mxu0 %v476
        %1482 = vmatpush1.msra.mxu0 %v475
        %1483 = vmatprep.subr.mxu0 %v480
        %1484 = vmatpush1.msra.mxu0 %v479
        %1485 = vmatprep.subr.mxu0 %v484
        %1486 = vmatpush1.msra.mxu0 %v483
        %1487 = vmatprep.subr.mxu0 %v488
        %1488 = vmatpush1.msra.mxu0 %v487
        %1489 = vmatprep.subr.mxu0 %v492
        %1490 = vmatpush1.msra.mxu0 %v491
        %1491 = vmatprep.subr.mxu0 %v496
        %1492 = vmatpush1.msra.mxu0 %v495
        %1493 = vmatprep.subr.mxu0 0.0
        %1494 = vmatpush1.msra.mxu0 0.0
        %1495 = vmatprep.subr.mxu0 0.0
        %1496 = vmatpush1.msra.mxu0 0.0
        %1497 = vmatprep.subr.mxu0 0.0
        %1498 = vmatpush1.msra.mxu0 0.0
        %1499 = vmatprep.subr.mxu0 0.0
        %1500 = vmatpush1.msra.mxu0 0.0
        %1501 = vmatprep.subr.mxu0 0.0
        %1502 = vmatpush1.msra.mxu0 0.0
        %1503 = vmatprep.subr.mxu0 0.0
        %1504 = vmatpush1.msra.mxu0 0.0
        %1505 = vmatprep.subr.mxu0 0.0
        %1506 = vmatpush1.msra.mxu0 0.0
        %1507 = vmatprep.subr.mxu0 0.0
        %1508 = vmatpush1.msra.mxu0 0.0
        %1509 = vmatprep.subr.mxu0 0.0
        %1510 = vmatpush1.msra.mxu0 0.0
        %1511 = vmatprep.subr.mxu0 0.0
        %1512 = vmatpush1.msra.mxu0 0.0
        %1513 = vmatprep.subr.mxu0 0.0
        %1514 = vmatpush1.msra.mxu0 0.0
        %1515 = vmatprep.subr.mxu0 0.0
        %1516 = vmatpush1.msra.mxu0 0.0
        %1517 = vmatprep.subr.mxu0 0.0
        %1518 = vmatpush1.msra.mxu0 0.0
        %1519 = vmatprep.subr.mxu0 0.0
        %1520 = vmatpush1.msra.mxu0 0.0
        %1521 = vmatprep.subr.mxu0 0.0
        %1522 = vmatpush1.msra.mxu0 0.0
        %1523 = vmatprep.subr.mxu0 0.0
        %1524 = vmatpush1.msra.mxu0 0.0
        %1525 = vmatprep.mubr.f32.mxu0 0.0
        %1526 = vmatmul.mubr.f32.gmra.mrb[0].mxu0 %v1389
        %v1527 = vpop.f32.mrb[0].mxu0
        %v1528 = vadd.f32 %v1211, %v1527
        %v1529 = vpop.f32.mrb[0].mxu0
        %v1530 = vadd.f32 %v1213, %v1529
        %1531 = vdwg.mxu0
        %v1532 = vadd.f32 %v1457, %v566
        %v1533 = vadd.f32 %v1459, %v570
        %v1534 = vadd.f32 %v1528, %v574
        %v1535 = vadd.f32 %v1530, %v578
        %v1536 = vxor.u32 %v1532, 2147483648
        %v1537 = vmul.f32 %v1536, 1.442695
        %v1538 = vpow.pop %v1537
        %v1539 = vadd.f32 %v1538, 1.0
        %v1540 = vrcp.pop %v1539
        %v1541 = vmul.f32 1.0, %v1540
        %v1542 = vxor.u32 %v1533, 2147483648
        %v1543 = vmul.f32 %v1542, 1.442695
        %v1544 = vpow.pop %v1543
        %v1545 = vadd.f32 %v1544, 1.0
        %v1546 = vrcp.pop %v1545
        %v1547 = vmul.f32 1.0, %v1546
        %v1548 = vtanh.pop %v1534
        %v1549 = vxor.u32 %v1535, 2147483648
        %v1550 = vmul.f32 %v1549, 1.442695
        %v1551 = vpow.pop %v1550
        %v1552 = vadd.f32 %v1551, 1.0
        %v1553 = vrcp.pop %v1552
        %v1554 = vmul.f32 1.0, %v1553
        %v1555 = vmul.f32 %v1547, %v1070
        %v1556 = vmul.f32 %v1541, %v1548
        %v1557 = vadd.f32 %v1555, %v1556
        %v1558 = vtanh.pop %v1557
        %v1559 = vmul.f32 %v1554, %v1558
        %1560 = vmatprep.subr.mxu0 %v498
        %1561 = vmatpush1.msra.mxu0 %v497
        %1562 = vmatprep.subr.mxu0 %v502
        %1563 = vmatpush1.msra.mxu0 %v501
        %1564 = vmatprep.subr.mxu0 %v506
        %1565 = vmatpush1.msra.mxu0 %v505
        %1566 = vmatprep.subr.mxu0 %v510
        %1567 = vmatpush1.msra.mxu0 %v509
        %1568 = vmatprep.subr.mxu0 %v514
        %1569 = vmatpush1.msra.mxu0 %v513
        %1570 = vmatprep.subr.mxu0 %v518
        %1571 = vmatpush1.msra.mxu0 %v517
        %1572 = vmatprep.subr.mxu0 %v522
        %1573 = vmatpush1.msra.mxu0 %v521
        %1574 = vmatprep.subr.mxu0 %v526
        %1575 = vmatpush1.msra.mxu0 %v525
        %1576 = vmatprep.subr.mxu0 %v530
        %1577 = vmatpush1.msra.mxu0 %v529
        %1578 = vmatprep.subr.mxu0 %v534
        %1579 = vmatpush1.msra.mxu0 %v533
        %1580 = vmatprep.subr.mxu0 %v538
        %1581 = vmatpush1.msra.mxu0 %v537
        %1582 = vmatprep.subr.mxu0 %v542
        %1583 = vmatpush1.msra.mxu0 %v541
        %1584 = vmatprep.subr.mxu0 %v546
        %1585 = vmatpush1.msra.mxu0 %v545
        %1586 = vmatprep.subr.mxu0 %v550
        %1587 = vmatpush1.msra.mxu0 %v549
        %1588 = vmatprep.subr.mxu0 %v554
        %1589 = vmatpush1.msra.mxu0 %v553
        %1590 = vmatprep.subr.mxu0 %v558
        %1591 = vmatpush1.msra.mxu0 %v557
        %1592 = vmatprep.subr.mxu0 0.0
        %1593 = vmatpush1.msra.mxu0 0.0
        %1594 = vmatprep.subr.mxu0 0.0
        %1595 = vmatpush1.msra.mxu0 0.0
        %1596 = vmatprep.subr.mxu0 0.0
        %1597 = vmatpush1.msra.mxu0 0.0
        %1598 = vmatprep.subr.mxu0 0.0
        %1599 = vmatpush1.msra.mxu0 0.0
        %1600 = vmatprep.subr.mxu0 0.0
        %1601 = vmatpush1.msra.mxu0 0.0
        %1602 = vmatprep.subr.mxu0 0.0
        %1603 = vmatpush1.msra.mxu0 0.0
        %1604 = vmatprep.subr.mxu0 0.0
        %1605 = vmatpush1.msra.mxu0 0.0
        %1606 = vmatprep.subr.mxu0 0.0
        %1607 = vmatpush1.msra.mxu0 0.0
        %1608 = vmatprep.subr.mxu0 0.0
        %1609 = vmatpush1.msra.mxu0 0.0
        %1610 = vmatprep.subr.mxu0 0.0
        %1611 = vmatpush1.msra.mxu0 0.0
        %1612 = vmatprep.subr.mxu0 0.0
        %1613 = vmatpush1.msra.mxu0 0.0
        %1614 = vmatprep.subr.mxu0 0.0
        %1615 = vmatpush1.msra.mxu0 0.0
        %1616 = vmatprep.subr.mxu0 0.0
        %1617 = vmatpush1.msra.mxu0 0.0
        %1618 = vmatprep.subr.mxu0 0.0
        %1619 = vmatpush1.msra.mxu0 0.0
        %1620 = vmatprep.subr.mxu0 0.0
        %1621 = vmatpush1.msra.mxu0 0.0
        %1622 = vmatprep.subr.mxu0 0.0
        %1623 = vmatpush1.msra.mxu0 0.0
        %1624 = vmatprep.mubr.f32.mxu0 0.0
        %1625 = vmatmul.mubr.f32.gmra.mrb[0].mxu0 %v1559
        %v1626 = vpop.f32.mrb[0].mxu0
        %v1627 = vadd.f32 0.0, %v1626
        %v1628 = vpop.f32.mrb[0].mxu0
        %v1629 = vadd.f32 0.0, %v1628
        %1630 = vdwg.mxu0
        %1631 = vmatprep.subr.mxu0 %v500
        %1632 = vmatpush1.msra.mxu0 %v499
        %1633 = vmatprep.subr.mxu0 %v504
        %1634 = vmatpush1.msra.mxu0 %v503
        %1635 = vmatprep.subr.mxu0 %v508
        %1636 = vmatpush1.msra.mxu0 %v507
        %1637 = vmatprep.subr.mxu0 %v512
        %1638 = vmatpush1.msra.mxu0 %v511
        %1639 = vmatprep.subr.mxu0 %v516
        %1640 = vmatpush1.msra.mxu0 %v515
        %1641 = vmatprep.subr.mxu0 %v520
        %1642 = vmatpush1.msra.mxu0 %v519
        %1643 = vmatprep.subr.mxu0 %v524
        %1644 = vmatpush1.msra.mxu0 %v523
        %1645 = vmatprep.subr.mxu0 %v528
        %1646 = vmatpush1.msra.mxu0 %v527
        %1647 = vmatprep.subr.mxu0 %v532
        %1648 = vmatpush1.msra.mxu0 %v531
        %1649 = vmatprep.subr.mxu0 %v536
        %1650 = vmatpush1.msra.mxu0 %v535
        %1651 = vmatprep.subr.mxu0 %v540
        %1652 = vmatpush1.msra.mxu0 %v539
        %1653 = vmatprep.subr.mxu0 %v544
        %1654 = vmatpush1.msra.mxu0 %v543
        %1655 = vmatprep.subr.mxu0 %v548
        %1656 = vmatpush1.msra.mxu0 %v547
        %1657 = vmatprep.subr.mxu0 %v552
        %1658 = vmatpush1.msra.mxu0 %v551
        %1659 = vmatprep.subr.mxu0 %v556
        %1660 = vmatpush1.msra.mxu0 %v555
        %1661 = vmatprep.subr.mxu0 %v560
        %1662 = vmatpush1.msra.mxu0 %v559
        %1663 = vmatprep.subr.mxu0 0.0
        %1664 = vmatpush1.msra.mxu0 0.0
        %1665 = vmatprep.subr.mxu0 0.0
        %1666 = vmatpush1.msra.mxu0 0.0
        %1667 = vmatprep.subr.mxu0 0.0
        %1668 = vmatpush1.msra.mxu0 0.0
        %1669 = vmatprep.subr.mxu0 0.0
        %1670 = vmatpush1.msra.mxu0 0.0
        %1671 = vmatprep.subr.mxu0 0.0
        %1672 = vmatpush1.msra.mxu0 0.0
        %1673 = vmatprep.subr.mxu0 0.0
        %1674 = vmatpush1.msra.mxu0 0.0
        %1675 = vmatprep.subr.mxu0 0.0
        %1676 = vmatpush1.msra.mxu0 0.0
        %1677 = vmatprep.subr.mxu0 0.0
        %1678 = vmatpush1.msra.mxu0 0.0
        %1679 = vmatprep.subr.mxu0 0.0
        %1680 = vmatpush1.msra.mxu0 0.0
        %1681 = vmatprep.subr.mxu0 0.0
        %1682 = vmatpush1.msra.mxu0 0.0
        %1683 = vmatprep.subr.mxu0 0.0
        %1684 = vmatpush1.msra.mxu0 0.0
        %1685 = vmatprep.subr.mxu0 0.0
        %1686 = vmatpush1.msra.mxu0 0.0
        %1687 = vmatprep.subr.mxu0 0.0
        %1688 = vmatpush1.msra.mxu0 0.0
        %1689 = vmatprep.subr.mxu0 0.0
        %1690 = vmatpush1.msra.mxu0 0.0
        %1691 = vmatprep.subr.mxu0 0.0
        %1692 = vmatpush1.msra.mxu0 0.0
        %1693 = vmatprep.subr.mxu0 0.0
        %1694 = vmatpush1.msra.mxu0 0.0
        %1695 = vmatprep.mubr.f32.mxu0 0.0
        %1696 = vmatmul.mubr.f32.gmra.mrb[0].mxu0 %v1559
        %v1697 = vpop.f32.mrb[0].mxu0
        %v1698 = vadd.f32 0.0, %v1697
        %v1699 = vpop.f32.mrb[0].mxu0
        %v1700 = vadd.f32 0.0, %v1699
        %1701 = vdwg.mxu0
        %s1702 = scalar_lea.vmem %s314, 64 [#allocation7]
        %v1703 = vld [vmem:[%s1702] sm:$0xff]
        %v1704 = vld [vmem:[%s1702 + $0x8] sm:$0xff]
        %v1705 = vld [vmem:[%s1702 + $0x10] sm:$0xff]
        %v1706 = vld [vmem:[%s1702 + $0x18] sm:$0xff]
        %1707 = vmatprep.subr.mxu0 %v370
        %1708 = vmatpush1.msra.mxu0 %v369
        %1709 = vmatprep.subr.mxu0 %v374
        %1710 = vmatpush1.msra.mxu0 %v373
        %1711 = vmatprep.subr.mxu0 %v378
        %1712 = vmatpush1.msra.mxu0 %v377
        %1713 = vmatprep.subr.mxu0 %v382
        %1714 = vmatpush1.msra.mxu0 %v381
        %1715 = vmatprep.subr.mxu0 %v386
        %1716 = vmatpush1.msra.mxu0 %v385
        %1717 = vmatprep.subr.mxu0 %v390
        %1718 = vmatpush1.msra.mxu0 %v389
        %1719 = vmatprep.subr.mxu0 %v394
        %1720 = vmatpush1.msra.mxu0 %v393
        %1721 = vmatprep.subr.mxu0 %v398
        %1722 = vmatpush1.msra.mxu0 %v397
        %1723 = vmatprep.subr.mxu0 %v402
        %1724 = vmatpush1.msra.mxu0 %v401
        %1725 = vmatprep.subr.mxu0 %v406
        %1726 = vmatpush1.msra.mxu0 %v405
        %1727 = vmatprep.subr.mxu0 %v410
        %1728 = vmatpush1.msra.mxu0 %v409
        %1729 = vmatprep.subr.mxu0 %v414
        %1730 = vmatpush1.msra.mxu0 %v413
        %1731 = vmatprep.subr.mxu0 %v418
        %1732 = vmatpush1.msra.mxu0 %v417
        %1733 = vmatprep.subr.mxu0 %v422
        %1734 = vmatpush1.msra.mxu0 %v421
        %1735 = vmatprep.subr.mxu0 %v426
        %1736 = vmatpush1.msra.mxu0 %v425
        %1737 = vmatprep.subr.mxu0 %v430
        %1738 = vmatpush1.msra.mxu0 %v429
        %1739 = vmatprep.subr.mxu0 0.0
        %1740 = vmatpush1.msra.mxu0 0.0
        %1741 = vmatprep.subr.mxu0 0.0
        %1742 = vmatpush1.msra.mxu0 0.0
        %1743 = vmatprep.subr.mxu0 0.0
        %1744 = vmatpush1.msra.mxu0 0.0
        %1745 = vmatprep.subr.mxu0 0.0
        %1746 = vmatpush1.msra.mxu0 0.0
        %1747 = vmatprep.subr.mxu0 0.0
        %1748 = vmatpush1.msra.mxu0 0.0
        %1749 = vmatprep.subr.mxu0 0.0
        %1750 = vmatpush1.msra.mxu0 0.0
        %1751 = vmatprep.subr.mxu0 0.0
        %1752 = vmatpush1.msra.mxu0 0.0
        %1753 = vmatprep.subr.mxu0 0.0
        %1754 = vmatpush1.msra.mxu0 0.0
        %1755 = vmatprep.subr.mxu0 0.0
        %1756 = vmatpush1.msra.mxu0 0.0
        %1757 = vmatprep.subr.mxu0 0.0
        %1758 = vmatpush1.msra.mxu0 0.0
        %1759 = vmatprep.subr.mxu0 0.0
        %1760 = vmatpush1.msra.mxu0 0.0
        %1761 = vmatprep.subr.mxu0 0.0
        %1762 = vmatpush1.msra.mxu0 0.0
        %1763 = vmatprep.subr.mxu0 0.0
        %1764 = vmatpush1.msra.mxu0 0.0
        %1765 = vmatprep.subr.mxu0 0.0
        %1766 = vmatpush1.msra.mxu0 0.0
        %1767 = vmatprep.subr.mxu0 0.0
        %1768 = vmatpush1.msra.mxu0 0.0
        %1769 = vmatprep.subr.mxu0 0.0
        %1770 = vmatpush1.msra.mxu0 0.0
        %1771 = vmatprep.mubr.f32.mxu0 0.0
        %1772 = vmatmul.mubr.f32.gmra.mrb[0].mxu0 %v1389
        %v1773 = vpop.f32.mrb[0].mxu0
        %v1774 = vadd.f32 0.0, %v1773
        %v1775 = vpop.f32.mrb[0].mxu0
        %v1776 = vadd.f32 0.0, %v1775
        %1777 = vdwg.mxu0
        %1778 = vmatprep.subr.mxu0 %v372
        %1779 = vmatpush1.msra.mxu0 %v371
        %1780 = vmatprep.subr.mxu0 %v376
        %1781 = vmatpush1.msra.mxu0 %v375
        %1782 = vmatprep.subr.mxu0 %v380
        %1783 = vmatpush1.msra.mxu0 %v379
        %1784 = vmatprep.subr.mxu0 %v384
        %1785 = vmatpush1.msra.mxu0 %v383
        %1786 = vmatprep.subr.mxu0 %v388
        %1787 = vmatpush1.msra.mxu0 %v387
        %1788 = vmatprep.subr.mxu0 %v392
        %1789 = vmatpush1.msra.mxu0 %v391
        %1790 = vmatprep.subr.mxu0 %v396
        %1791 = vmatpush1.msra.mxu0 %v395
        %1792 = vmatprep.subr.mxu0 %v400
        %1793 = vmatpush1.msra.mxu0 %v399
        %1794 = vmatprep.subr.mxu0 %v404
        %1795 = vmatpush1.msra.mxu0 %v403
        %1796 = vmatprep.subr.mxu0 %v408
        %1797 = vmatpush1.msra.mxu0 %v407
        %1798 = vmatprep.subr.mxu0 %v412
        %1799 = vmatpush1.msra.mxu0 %v411
        %1800 = vmatprep.subr.mxu0 %v416
        %1801 = vmatpush1.msra.mxu0 %v415
        %1802 = vmatprep.subr.mxu0 %v420
        %1803 = vmatpush1.msra.mxu0 %v419
        %1804 = vmatprep.subr.mxu0 %v424
        %1805 = vmatpush1.msra.mxu0 %v423
        %1806 = vmatprep.subr.mxu0 %v428
        %1807 = vmatpush1.msra.mxu0 %v427
        %1808 = vmatprep.subr.mxu0 %v432
        %1809 = vmatpush1.msra.mxu0 %v431
        %1810 = vmatprep.subr.mxu0 0.0
        %1811 = vmatpush1.msra.mxu0 0.0
        %1812 = vmatprep.subr.mxu0 0.0
        %1813 = vmatpush1.msra.mxu0 0.0
        %1814 = vmatprep.subr.mxu0 0.0
        %1815 = vmatpush1.msra.mxu0 0.0
        %1816 = vmatprep.subr.mxu0 0.0
        %1817 = vmatpush1.msra.mxu0 0.0
        %1818 = vmatprep.subr.mxu0 0.0
        %1819 = vmatpush1.msra.mxu0 0.0
        %1820 = vmatprep.subr.mxu0 0.0
        %1821 = vmatpush1.msra.mxu0 0.0
        %1822 = vmatprep.subr.mxu0 0.0
        %1823 = vmatpush1.msra.mxu0 0.0
        %1824 = vmatprep.subr.mxu0 0.0
        %1825 = vmatpush1.msra.mxu0 0.0
        %1826 = vmatprep.subr.mxu0 0.0
        %1827 = vmatpush1.msra.mxu0 0.0
        %1828 = vmatprep.subr.mxu0 0.0
        %1829 = vmatpush1.msra.mxu0 0.0
        %1830 = vmatprep.subr.mxu0 0.0
        %1831 = vmatpush1.msra.mxu0 0.0
        %1832 = vmatprep.subr.mxu0 0.0
        %1833 = vmatpush1.msra.mxu0 0.0
        %1834 = vmatprep.subr.mxu0 0.0
        %1835 = vmatpush1.msra.mxu0 0.0
        %1836 = vmatprep.subr.mxu0 0.0
        %1837 = vmatpush1.msra.mxu0 0.0
        %1838 = vmatprep.subr.mxu0 0.0
        %1839 = vmatpush1.msra.mxu0 0.0
        %1840 = vmatprep.subr.mxu0 0.0
        %1841 = vmatpush1.msra.mxu0 0.0
        %1842 = vmatprep.mubr.f32.mxu0 0.0
        %1843 = vmatmul.mubr.f32.gmra.mrb[0].mxu0 %v1389
        %v1844 = vpop.f32.mrb[0].mxu0
        %v1845 = vadd.f32 0.0, %v1844
        %v1846 = vpop.f32.mrb[0].mxu0
        %v1847 = vadd.f32 0.0, %v1846
        %1848 = vdwg.mxu0
        %v1849 = vadd.f32 %v1703, %v1774
        %v1850 = vadd.f32 %v1704, %v1776
        %v1851 = vadd.f32 %v1705, %v1845
        %v1852 = vadd.f32 %v1706, %v1847
        %v1853 = vxor.u32 %v1849, 2147483648
        %v1854 = vmul.f32 %v1853, 1.442695
        %v1855 = vpow.pop %v1854
        %v1856 = vadd.f32 %v1855, 1.0
        %v1857 = vrcp.pop %v1856
        %v1858 = vmul.f32 1.0, %v1857
        %v1859 = vxor.u32 %v1850, 2147483648
        %v1860 = vmul.f32 %v1859, 1.442695
        %v1861 = vpow.pop %v1860
        %v1862 = vadd.f32 %v1861, 1.0
        %v1863 = vrcp.pop %v1862
        %v1864 = vmul.f32 1.0, %v1863
        %v1865 = vtanh.pop %v1851
        %v1866 = vxor.u32 %v1852, 2147483648
        %v1867 = vmul.f32 %v1866, 1.442695
        %v1868 = vpow.pop %v1867
        %v1869 = vadd.f32 %v1868, 1.0
        %v1870 = vrcp.pop %v1869
        %v1871 = vmul.f32 1.0, %v1870
        %v1872 = vmul.f32 %v1864, %v1387
        %v1873 = vmul.f32 %v1858, %v1865
        %v1874 = vadd.f32 %v1872, %v1873
        %v1875 = vtanh.pop %v1874
        %v1876 = vmul.f32 %v1871, %v1875
        %1877 = vmatprep.subr.mxu0 %v434
        %1878 = vmatpush1.msra.mxu0 %v433
        %1879 = vmatprep.subr.mxu0 %v438
        %1880 = vmatpush1.msra.mxu0 %v437
        %1881 = vmatprep.subr.mxu0 %v442
        %1882 = vmatpush1.msra.mxu0 %v441
        %1883 = vmatprep.subr.mxu0 %v446
        %1884 = vmatpush1.msra.mxu0 %v445
        %1885 = vmatprep.subr.mxu0 %v450
        %1886 = vmatpush1.msra.mxu0 %v449
        %1887 = vmatprep.subr.mxu0 %v454
        %1888 = vmatpush1.msra.mxu0 %v453
        %1889 = vmatprep.subr.mxu0 %v458
        %1890 = vmatpush1.msra.mxu0 %v457
        %1891 = vmatprep.subr.mxu0 %v462
        %1892 = vmatpush1.msra.mxu0 %v461
        %1893 = vmatprep.subr.mxu0 %v466
        %1894 = vmatpush1.msra.mxu0 %v465
        %1895 = vmatprep.subr.mxu0 %v470
        %1896 = vmatpush1.msra.mxu0 %v469
        %1897 = vmatprep.subr.mxu0 %v474
        %1898 = vmatpush1.msra.mxu0 %v473
        %1899 = vmatprep.subr.mxu0 %v478
        %1900 = vmatpush1.msra.mxu0 %v477
        %1901 = vmatprep.subr.mxu0 %v482
        %1902 = vmatpush1.msra.mxu0 %v481
        %1903 = vmatprep.subr.mxu0 %v486
        %1904 = vmatpush1.msra.mxu0 %v485
        %1905 = vmatprep.subr.mxu0 %v490
        %1906 = vmatpush1.msra.mxu0 %v489
        %1907 = vmatprep.subr.mxu0 %v494
        %1908 = vmatpush1.msra.mxu0 %v493
        %1909 = vmatprep.subr.mxu0 0.0
        %1910 = vmatpush1.msra.mxu0 0.0
        %1911 = vmatprep.subr.mxu0 0.0
        %1912 = vmatpush1.msra.mxu0 0.0
        %1913 = vmatprep.subr.mxu0 0.0
        %1914 = vmatpush1.msra.mxu0 0.0
        %1915 = vmatprep.subr.mxu0 0.0
        %1916 = vmatpush1.msra.mxu0 0.0
        %1917 = vmatprep.subr.mxu0 0.0
        %1918 = vmatpush1.msra.mxu0 0.0
        %1919 = vmatprep.subr.mxu0 0.0
        %1920 = vmatpush1.msra.mxu0 0.0
        %1921 = vmatprep.subr.mxu0 0.0
        %1922 = vmatpush1.msra.mxu0 0.0
        %1923 = vmatprep.subr.mxu0 0.0
        %1924 = vmatpush1.msra.mxu0 0.0
        %1925 = vmatprep.subr.mxu0 0.0
        %1926 = vmatpush1.msra.mxu0 0.0
        %1927 = vmatprep.subr.mxu0 0.0
        %1928 = vmatpush1.msra.mxu0 0.0
        %1929 = vmatprep.subr.mxu0 0.0
        %1930 = vmatpush1.msra.mxu0 0.0
        %1931 = vmatprep.subr.mxu0 0.0
        %1932 = vmatpush1.msra.mxu0 0.0
        %1933 = vmatprep.subr.mxu0 0.0
        %1934 = vmatpush1.msra.mxu0 0.0
        %1935 = vmatprep.subr.mxu0 0.0
        %1936 = vmatpush1.msra.mxu0 0.0
        %1937 = vmatprep.subr.mxu0 0.0
        %1938 = vmatpush1.msra.mxu0 0.0
        %1939 = vmatprep.subr.mxu0 0.0
        %1940 = vmatpush1.msra.mxu0 0.0
        %1941 = vmatprep.mubr.f32.mxu0 0.0
        %1942 = vmatmul.mubr.f32.gmra.mrb[0].mxu0 %v1876
        %v1943 = vpop.f32.mrb[0].mxu0
        %v1944 = vadd.f32 %v1627, %v1943
        %v1945 = vpop.f32.mrb[0].mxu0
        %v1946 = vadd.f32 %v1629, %v1945
        %1947 = vdwg.mxu0
        %1948 = vmatprep.subr.mxu0 %v436
        %1949 = vmatpush1.msra.mxu0 %v435
        %1950 = vmatprep.subr.mxu0 %v440
        %1951 = vmatpush1.msra.mxu0 %v439
        %1952 = vmatprep.subr.mxu0 %v444
        %1953 = vmatpush1.msra.mxu0 %v443
        %1954 = vmatprep.subr.mxu0 %v448
        %1955 = vmatpush1.msra.mxu0 %v447
        %1956 = vmatprep.subr.mxu0 %v452
        %1957 = vmatpush1.msra.mxu0 %v451
        %1958 = vmatprep.subr.mxu0 %v456
        %1959 = vmatpush1.msra.mxu0 %v455
        %1960 = vmatprep.subr.mxu0 %v460
        %1961 = vmatpush1.msra.mxu0 %v459
        %1962 = vmatprep.subr.mxu0 %v464
        %1963 = vmatpush1.msra.mxu0 %v463
        %1964 = vmatprep.subr.mxu0 %v468
        %1965 = vmatpush1.msra.mxu0 %v467
        %1966 = vmatprep.subr.mxu0 %v472
        %1967 = vmatpush1.msra.mxu0 %v471
        %1968 = vmatprep.subr.mxu0 %v476
        %1969 = vmatpush1.msra.mxu0 %v475
        %1970 = vmatprep.subr.mxu0 %v480
        %1971 = vmatpush1.msra.mxu0 %v479
        %1972 = vmatprep.subr.mxu0 %v484
        %1973 = vmatpush1.msra.mxu0 %v483
        %1974 = vmatprep.subr.mxu0 %v488
        %1975 = vmatpush1.msra.mxu0 %v487
        %1976 = vmatprep.subr.mxu0 %v492
        %1977 = vmatpush1.msra.mxu0 %v491
        %1978 = vmatprep.subr.mxu0 %v496
        %1979 = vmatpush1.msra.mxu0 %v495
        %1980 = vmatprep.subr.mxu0 0.0
        %1981 = vmatpush1.msra.mxu0 0.0
        %1982 = vmatprep.subr.mxu0 0.0
        %1983 = vmatpush1.msra.mxu0 0.0
        %1984 = vmatprep.subr.mxu0 0.0
        %1985 = vmatpush1.msra.mxu0 0.0
        %1986 = vmatprep.subr.mxu0 0.0
        %1987 = vmatpush1.msra.mxu0 0.0
        %1988 = vmatprep.subr.mxu0 0.0
        %1989 = vmatpush1.msra.mxu0 0.0
        %1990 = vmatprep.subr.mxu0 0.0
        %1991 = vmatpush1.msra.mxu0 0.0
        %1992 = vmatprep.subr.mxu0 0.0
        %1993 = vmatpush1.msra.mxu0 0.0
        %1994 = vmatprep.subr.mxu0 0.0
        %1995 = vmatpush1.msra.mxu0 0.0
        %1996 = vmatprep.subr.mxu0 0.0
        %1997 = vmatpush1.msra.mxu0 0.0
        %1998 = vmatprep.subr.mxu0 0.0
        %1999 = vmatpush1.msra.mxu0 0.0
        %2000 = vmatprep.subr.mxu0 0.0
        %2001 = vmatpush1.msra.mxu0 0.0
        %2002 = vmatprep.subr.mxu0 0.0
        %2003 = vmatpush1.msra.mxu0 0.0
        %2004 = vmatprep.subr.mxu0 0.0
        %2005 = vmatpush1.msra.mxu0 0.0
        %2006 = vmatprep.subr.mxu0 0.0
        %2007 = vmatpush1.msra.mxu0 0.0
        %2008 = vmatprep.subr.mxu0 0.0
        %2009 = vmatpush1.msra.mxu0 0.0
        %2010 = vmatprep.subr.mxu0 0.0
        %2011 = vmatpush1.msra.mxu0 0.0
        %2012 = vmatprep.mubr.f32.mxu0 0.0
        %2013 = vmatmul.mubr.f32.gmra.mrb[0].mxu0 %v1876
        %v2014 = vpop.f32.mrb[0].mxu0
        %v2015 = vadd.f32 %v1698, %v2014
        %v2016 = vpop.f32.mrb[0].mxu0
        %v2017 = vadd.f32 %v1700, %v2016
        %2018 = vdwg.mxu0
        %v2019 = vadd.f32 %v1944, %v566
        %v2020 = vadd.f32 %v1946, %v570
        %v2021 = vadd.f32 %v2015, %v574
        %v2022 = vadd.f32 %v2017, %v578
        %v2023 = vxor.u32 %v2019, 2147483648
        %v2024 = vmul.f32 %v2023, 1.442695
        %v2025 = vpow.pop %v2024
        %v2026 = vadd.f32 %v2025, 1.0
        %v2027 = vrcp.pop %v2026
        %v2028 = vmul.f32 1.0, %v2027
        %v2029 = vxor.u32 %v2020, 2147483648
        %v2030 = vmul.f32 %v2029, 1.442695
        %v2031 = vpow.pop %v2030
        %v2032 = vadd.f32 %v2031, 1.0
        %v2033 = vrcp.pop %v2032
        %v2034 = vmul.f32 1.0, %v2033
        %v2035 = vtanh.pop %v2021
        %v2036 = vxor.u32 %v2022, 2147483648
        %v2037 = vmul.f32 %v2036, 1.442695
        %v2038 = vpow.pop %v2037
        %v2039 = vadd.f32 %v2038, 1.0
        %v2040 = vrcp.pop %v2039
        %v2041 = vmul.f32 1.0, %v2040
        %v2042 = vmul.f32 %v2034, %v1557
        %v2043 = vmul.f32 %v2028, %v2035
        %v2044 = vadd.f32 %v2042, %v2043
        %v2045 = vtanh.pop %v2044
        %v2046 = vmul.f32 %v2041, %v2045
        %2047 = vmatprep.subr.mxu0 %v498
        %2048 = vmatpush1.msra.mxu0 %v497
        %2049 = vmatprep.subr.mxu0 %v502
        %2050 = vmatpush1.msra.mxu0 %v501
        %2051 = vmatprep.subr.mxu0 %v506
        %2052 = vmatpush1.msra.mxu0 %v505
        %2053 = vmatprep.subr.mxu0 %v510
        %2054 = vmatpush1.msra.mxu0 %v509
        %2055 = vmatprep.subr.mxu0 %v514
        %2056 = vmatpush1.msra.mxu0 %v513
        %2057 = vmatprep.subr.mxu0 %v518
        %2058 = vmatpush1.msra.mxu0 %v517
        %2059 = vmatprep.subr.mxu0 %v522
        %2060 = vmatpush1.msra.mxu0 %v521
        %2061 = vmatprep.subr.mxu0 %v526
        %2062 = vmatpush1.msra.mxu0 %v525
        %2063 = vmatprep.subr.mxu0 %v530
        %2064 = vmatpush1.msra.mxu0 %v529
        %2065 = vmatprep.subr.mxu0 %v534
        %2066 = vmatpush1.msra.mxu0 %v533
        %2067 = vmatprep.subr.mxu0 %v538
        %2068 = vmatpush1.msra.mxu0 %v537
        %2069 = vmatprep.subr.mxu0 %v542
        %2070 = vmatpush1.msra.mxu0 %v541
        %2071 = vmatprep.subr.mxu0 %v546
        %2072 = vmatpush1.msra.mxu0 %v545
        %2073 = vmatprep.subr.mxu0 %v550
        %2074 = vmatpush1.msra.mxu0 %v549
        %2075 = vmatprep.subr.mxu0 %v554
        %2076 = vmatpush1.msra.mxu0 %v553
        %2077 = vmatprep.subr.mxu0 %v558
        %2078 = vmatpush1.msra.mxu0 %v557
        %2079 = vmatprep.subr.mxu0 0.0
        %2080 = vmatpush1.msra.mxu0 0.0
        %2081 = vmatprep.subr.mxu0 0.0
        %2082 = vmatpush1.msra.mxu0 0.0
        %2083 = vmatprep.subr.mxu0 0.0
        %2084 = vmatpush1.msra.mxu0 0.0
        %2085 = vmatprep.subr.mxu0 0.0
        %2086 = vmatpush1.msra.mxu0 0.0
        %2087 = vmatprep.subr.mxu0 0.0
        %2088 = vmatpush1.msra.mxu0 0.0
        %2089 = vmatprep.subr.mxu0 0.0
        %2090 = vmatpush1.msra.mxu0 0.0
        %2091 = vmatprep.subr.mxu0 0.0
        %2092 = vmatpush1.msra.mxu0 0.0
        %2093 = vmatprep.subr.mxu0 0.0
        %2094 = vmatpush1.msra.mxu0 0.0
        %2095 = vmatprep.subr.mxu0 0.0
        %2096 = vmatpush1.msra.mxu0 0.0
        %2097 = vmatprep.subr.mxu0 0.0
        %2098 = vmatpush1.msra.mxu0 0.0
        %2099 = vmatprep.subr.mxu0 0.0
        %2100 = vmatpush1.msra.mxu0 0.0
        %2101 = vmatprep.subr.mxu0 0.0
        %2102 = vmatpush1.msra.mxu0 0.0
        %2103 = vmatprep.subr.mxu0 0.0
        %2104 = vmatpush1.msra.mxu0 0.0
        %2105 = vmatprep.subr.mxu0 0.0
        %2106 = vmatpush1.msra.mxu0 0.0
        %2107 = vmatprep.subr.mxu0 0.0
        %2108 = vmatpush1.msra.mxu0 0.0
        %2109 = vmatprep.subr.mxu0 0.0
        %2110 = vmatpush1.msra.mxu0 0.0
        %2111 = vmatprep.mubr.f32.mxu0 0.0
        %2112 = vmatmul.mubr.f32.gmra.mrb[0].mxu0 %v2046
        %v2113 = vpop.f32.mrb[0].mxu0
        %v2114 = vadd.f32 0.0, %v2113
        %v2115 = vpop.f32.mrb[0].mxu0
        %v2116 = vadd.f32 0.0, %v2115
        %2117 = vdwg.mxu0
        %2118 = vmatprep.subr.mxu0 %v500
        %2119 = vmatpush1.msra.mxu0 %v499
        %2120 = vmatprep.subr.mxu0 %v504
        %2121 = vmatpush1.msra.mxu0 %v503
        %2122 = vmatprep.subr.mxu0 %v508
        %2123 = vmatpush1.msra.mxu0 %v507
        %2124 = vmatprep.subr.mxu0 %v512
        %2125 = vmatpush1.msra.mxu0 %v511
        %2126 = vmatprep.subr.mxu0 %v516
        %2127 = vmatpush1.msra.mxu0 %v515
        %2128 = vmatprep.subr.mxu0 %v520
        %2129 = vmatpush1.msra.mxu0 %v519
        %2130 = vmatprep.subr.mxu0 %v524
        %2131 = vmatpush1.msra.mxu0 %v523
        %2132 = vmatprep.subr.mxu0 %v528
        %2133 = vmatpush1.msra.mxu0 %v527
        %2134 = vmatprep.subr.mxu0 %v532
        %2135 = vmatpush1.msra.mxu0 %v531
        %2136 = vmatprep.subr.mxu0 %v536
        %2137 = vmatpush1.msra.mxu0 %v535
        %2138 = vmatprep.subr.mxu0 %v540
        %2139 = vmatpush1.msra.mxu0 %v539
        %2140 = vmatprep.subr.mxu0 %v544
        %2141 = vmatpush1.msra.mxu0 %v543
        %2142 = vmatprep.subr.mxu0 %v548
        %2143 = vmatpush1.msra.mxu0 %v547
        %2144 = vmatprep.subr.mxu0 %v552
        %2145 = vmatpush1.msra.mxu0 %v551
        %2146 = vmatprep.subr.mxu0 %v556
        %2147 = vmatpush1.msra.mxu0 %v555
        %2148 = vmatprep.subr.mxu0 %v560
        %2149 = vmatpush1.msra.mxu0 %v559
        %2150 = vmatprep.subr.mxu0 0.0
        %2151 = vmatpush1.msra.mxu0 0.0
        %2152 = vmatprep.subr.mxu0 0.0
        %2153 = vmatpush1.msra.mxu0 0.0
        %2154 = vmatprep.subr.mxu0 0.0
        %2155 = vmatpush1.msra.mxu0 0.0
        %2156 = vmatprep.subr.mxu0 0.0
        %2157 = vmatpush1.msra.mxu0 0.0
        %2158 = vmatprep.subr.mxu0 0.0
        %2159 = vmatpush1.msra.mxu0 0.0
        %2160 = vmatprep.subr.mxu0 0.0
        %2161 = vmatpush1.msra.mxu0 0.0
        %2162 = vmatprep.subr.mxu0 0.0
        %2163 = vmatpush1.msra.mxu0 0.0
        %2164 = vmatprep.subr.mxu0 0.0
        %2165 = vmatpush1.msra.mxu0 0.0
        %2166 = vmatprep.subr.mxu0 0.0
        %2167 = vmatpush1.msra.mxu0 0.0
        %2168 = vmatprep.subr.mxu0 0.0
        %2169 = vmatpush1.msra.mxu0 0.0
        %2170 = vmatprep.subr.mxu0 0.0
        %2171 = vmatpush1.msra.mxu0 0.0
        %2172 = vmatprep.subr.mxu0 0.0
        %2173 = vmatpush1.msra.mxu0 0.0
        %2174 = vmatprep.subr.mxu0 0.0
        %2175 = vmatpush1.msra.mxu0 0.0
        %2176 = vmatprep.subr.mxu0 0.0
        %2177 = vmatpush1.msra.mxu0 0.0
        %2178 = vmatprep.subr.mxu0 0.0
        %2179 = vmatpush1.msra.mxu0 0.0
        %2180 = vmatprep.subr.mxu0 0.0
        %2181 = vmatpush1.msra.mxu0 0.0
        %2182 = vmatprep.mubr.f32.mxu0 0.0
        %2183 = vmatmul.mubr.f32.gmra.mrb[0].mxu0 %v2046
        %v2184 = vpop.f32.mrb[0].mxu0
        %v2185 = vadd.f32 0.0, %v2184
        %v2186 = vpop.f32.mrb[0].mxu0
        %v2187 = vadd.f32 0.0, %v2186
        %2188 = vdwg.mxu0
        %s2189 = scalar_lea.vmem %s314, 96 [#allocation7]
        %v2190 = vld [vmem:[%s2189] sm:$0xff]
        %v2191 = vld [vmem:[%s2189 + $0x8] sm:$0xff]
        %v2192 = vld [vmem:[%s2189 + $0x10] sm:$0xff]
        %v2193 = vld [vmem:[%s2189 + $0x18] sm:$0xff]
        %2194 = vmatprep.subr.mxu0 %v370
        %2195 = vmatpush1.msra.mxu0 %v369
        %2196 = vmatprep.subr.mxu0 %v374
        %2197 = vmatpush1.msra.mxu0 %v373
        %2198 = vmatprep.subr.mxu0 %v378
        %2199 = vmatpush1.msra.mxu0 %v377
        %2200 = vmatprep.subr.mxu0 %v382
        %2201 = vmatpush1.msra.mxu0 %v381
        %2202 = vmatprep.subr.mxu0 %v386
        %2203 = vmatpush1.msra.mxu0 %v385
        %2204 = vmatprep.subr.mxu0 %v390
        %2205 = vmatpush1.msra.mxu0 %v389
        %2206 = vmatprep.subr.mxu0 %v394
        %2207 = vmatpush1.msra.mxu0 %v393
        %2208 = vmatprep.subr.mxu0 %v398
        %2209 = vmatpush1.msra.mxu0 %v397
        %2210 = vmatprep.subr.mxu0 %v402
        %2211 = vmatpush1.msra.mxu0 %v401
        %2212 = vmatprep.subr.mxu0 %v406
        %2213 = vmatpush1.msra.mxu0 %v405
        %2214 = vmatprep.subr.mxu0 %v410
        %2215 = vmatpush1.msra.mxu0 %v409
        %2216 = vmatprep.subr.mxu0 %v414
        %2217 = vmatpush1.msra.mxu0 %v413
        %2218 = vmatprep.subr.mxu0 %v418
        %2219 = vmatpush1.msra.mxu0 %v417
        %2220 = vmatprep.subr.mxu0 %v422
        %2221 = vmatpush1.msra.mxu0 %v421
        %2222 = vmatprep.subr.mxu0 %v426
        %2223 = vmatpush1.msra.mxu0 %v425
        %2224 = vmatprep.subr.mxu0 %v430
        %2225 = vmatpush1.msra.mxu0 %v429
        %2226 = vmatprep.subr.mxu0 0.0
        %2227 = vmatpush1.msra.mxu0 0.0
        %2228 = vmatprep.subr.mxu0 0.0
        %2229 = vmatpush1.msra.mxu0 0.0
        %2230 = vmatprep.subr.mxu0 0.0
        %2231 = vmatpush1.msra.mxu0 0.0
        %2232 = vmatprep.subr.mxu0 0.0
        %2233 = vmatpush1.msra.mxu0 0.0
        %2234 = vmatprep.subr.mxu0 0.0
        %2235 = vmatpush1.msra.mxu0 0.0
        %2236 = vmatprep.subr.mxu0 0.0
        %2237 = vmatpush1.msra.mxu0 0.0
        %2238 = vmatprep.subr.mxu0 0.0
        %2239 = vmatpush1.msra.mxu0 0.0
        %2240 = vmatprep.subr.mxu0 0.0
        %2241 = vmatpush1.msra.mxu0 0.0
        %2242 = vmatprep.subr.mxu0 0.0
        %2243 = vmatpush1.msra.mxu0 0.0
        %2244 = vmatprep.subr.mxu0 0.0
        %2245 = vmatpush1.msra.mxu0 0.0
        %2246 = vmatprep.subr.mxu0 0.0
        %2247 = vmatpush1.msra.mxu0 0.0
        %2248 = vmatprep.subr.mxu0 0.0
        %2249 = vmatpush1.msra.mxu0 0.0
        %2250 = vmatprep.subr.mxu0 0.0
        %2251 = vmatpush1.msra.mxu0 0.0
        %2252 = vmatprep.subr.mxu0 0.0
        %2253 = vmatpush1.msra.mxu0 0.0
        %2254 = vmatprep.subr.mxu0 0.0
        %2255 = vmatpush1.msra.mxu0 0.0
        %2256 = vmatprep.subr.mxu0 0.0
        %2257 = vmatpush1.msra.mxu0 0.0
        %2258 = vmatprep.mubr.f32.mxu0 0.0
        %2259 = vmatmul.mubr.f32.gmra.mrb[0].mxu0 %v1876
        %v2260 = vpop.f32.mrb[0].mxu0
        %v2261 = vadd.f32 0.0, %v2260
        %v2262 = vpop.f32.mrb[0].mxu0
        %v2263 = vadd.f32 0.0, %v2262
        %2264 = vdwg.mxu0
        %2265 = vmatprep.subr.mxu0 %v372
        %2266 = vmatpush1.msra.mxu0 %v371
        %2267 = vmatprep.subr.mxu0 %v376
        %2268 = vmatpush1.msra.mxu0 %v375
        %2269 = vmatprep.subr.mxu0 %v380
        %2270 = vmatpush1.msra.mxu0 %v379
        %2271 = vmatprep.subr.mxu0 %v384
        %2272 = vmatpush1.msra.mxu0 %v383
        %2273 = vmatprep.subr.mxu0 %v388
        %2274 = vmatpush1.msra.mxu0 %v387
        %2275 = vmatprep.subr.mxu0 %v392
        %2276 = vmatpush1.msra.mxu0 %v391
        %2277 = vmatprep.subr.mxu0 %v396
        %2278 = vmatpush1.msra.mxu0 %v395
        %2279 = vmatprep.subr.mxu0 %v400
        %2280 = vmatpush1.msra.mxu0 %v399
        %2281 = vmatprep.subr.mxu0 %v404
        %2282 = vmatpush1.msra.mxu0 %v403
        %2283 = vmatprep.subr.mxu0 %v408
        %2284 = vmatpush1.msra.mxu0 %v407
        %2285 = vmatprep.subr.mxu0 %v412
        %2286 = vmatpush1.msra.mxu0 %v411
        %2287 = vmatprep.subr.mxu0 %v416
        %2288 = vmatpush1.msra.mxu0 %v415
        %2289 = vmatprep.subr.mxu0 %v420
        %2290 = vmatpush1.msra.mxu0 %v419
        %2291 = vmatprep.subr.mxu0 %v424
        %2292 = vmatpush1.msra.mxu0 %v423
        %2293 = vmatprep.subr.mxu0 %v428
        %2294 = vmatpush1.msra.mxu0 %v427
        %2295 = vmatprep.subr.mxu0 %v432
        %2296 = vmatpush1.msra.mxu0 %v431
        %2297 = vmatprep.subr.mxu0 0.0
        %2298 = vmatpush1.msra.mxu0 0.0
        %2299 = vmatprep.subr.mxu0 0.0
        %2300 = vmatpush1.msra.mxu0 0.0
        %2301 = vmatprep.subr.mxu0 0.0
        %2302 = vmatpush1.msra.mxu0 0.0
        %2303 = vmatprep.subr.mxu0 0.0
        %2304 = vmatpush1.msra.mxu0 0.0
        %2305 = vmatprep.subr.mxu0 0.0
        %2306 = vmatpush1.msra.mxu0 0.0
        %2307 = vmatprep.subr.mxu0 0.0
        %2308 = vmatpush1.msra.mxu0 0.0
        %2309 = vmatprep.subr.mxu0 0.0
        %2310 = vmatpush1.msra.mxu0 0.0
        %2311 = vmatprep.subr.mxu0 0.0
        %2312 = vmatpush1.msra.mxu0 0.0
        %2313 = vmatprep.subr.mxu0 0.0
        %2314 = vmatpush1.msra.mxu0 0.0
        %2315 = vmatprep.subr.mxu0 0.0
        %2316 = vmatpush1.msra.mxu0 0.0
        %2317 = vmatprep.subr.mxu0 0.0
        %2318 = vmatpush1.msra.mxu0 0.0
        %2319 = vmatprep.subr.mxu0 0.0
        %2320 = vmatpush1.msra.mxu0 0.0
        %2321 = vmatprep.subr.mxu0 0.0
        %2322 = vmatpush1.msra.mxu0 0.0
        %2323 = vmatprep.subr.mxu0 0.0
        %2324 = vmatpush1.msra.mxu0 0.0
        %2325 = vmatprep.subr.mxu0 0.0
        %2326 = vmatpush1.msra.mxu0 0.0
        %2327 = vmatprep.subr.mxu0 0.0
        %2328 = vmatpush1.msra.mxu0 0.0
        %2329 = vmatprep.mubr.f32.mxu0 0.0
        %2330 = vmatmul.mubr.f32.gmra.mrb[0].mxu0 %v1876
        %v2331 = vpop.f32.mrb[0].mxu0
        %v2332 = vadd.f32 0.0, %v2331
        %v2333 = vpop.f32.mrb[0].mxu0
        %v2334 = vadd.f32 0.0, %v2333
        %2335 = vdwg.mxu0
        %v2336 = vadd.f32 %v2190, %v2261
        %v2337 = vadd.f32 %v2191, %v2263
        %v2338 = vadd.f32 %v2192, %v2332
        %v2339 = vadd.f32 %v2193, %v2334
        %v2340 = vxor.u32 %v2336, 2147483648
        %v2341 = vmul.f32 %v2340, 1.442695
        %v2342 = vpow.pop %v2341
        %v2343 = vadd.f32 %v2342, 1.0
        %v2344 = vrcp.pop %v2343
        %v2345 = vmul.f32 1.0, %v2344
        %v2346 = vxor.u32 %v2337, 2147483648
        %v2347 = vmul.f32 %v2346, 1.442695
        %v2348 = vpow.pop %v2347
        %v2349 = vadd.f32 %v2348, 1.0
        %v2350 = vrcp.pop %v2349
        %v2351 = vmul.f32 1.0, %v2350
        %v2352 = vtanh.pop %v2338
        %v2353 = vxor.u32 %v2339, 2147483648
        %v2354 = vmul.f32 %v2353, 1.442695
        %v2355 = vpow.pop %v2354
        %v2356 = vadd.f32 %v2355, 1.0
        %v2357 = vrcp.pop %v2356
        %v2358 = vmul.f32 1.0, %v2357
        %v2359 = vmul.f32 %v2351, %v1874
        %v2360 = vmul.f32 %v2345, %v2352
        %v2361 = vadd.f32 %v2359, %v2360
        %v2362 = vtanh.pop %v2361
        %v2363 = vmul.f32 %v2358, %v2362
        %2364 = vmatprep.subr.mxu0 %v434
        %2365 = vmatpush1.msra.mxu0 %v433
        %2366 = vmatprep.subr.mxu0 %v438
        %2367 = vmatpush1.msra.mxu0 %v437
        %2368 = vmatprep.subr.mxu0 %v442
        %2369 = vmatpush1.msra.mxu0 %v441
        %2370 = vmatprep.subr.mxu0 %v446
        %2371 = vmatpush1.msra.mxu0 %v445
        %2372 = vmatprep.subr.mxu0 %v450
        %2373 = vmatpush1.msra.mxu0 %v449
        %2374 = vmatprep.subr.mxu0 %v454
        %2375 = vmatpush1.msra.mxu0 %v453
        %2376 = vmatprep.subr.mxu0 %v458
        %2377 = vmatpush1.msra.mxu0 %v457
        %2378 = vmatprep.subr.mxu0 %v462
        %2379 = vmatpush1.msra.mxu0 %v461
        %2380 = vmatprep.subr.mxu0 %v466
        %2381 = vmatpush1.msra.mxu0 %v465
        %2382 = vmatprep.subr.mxu0 %v470
        %2383 = vmatpush1.msra.mxu0 %v469
        %2384 = vmatprep.subr.mxu0 %v474
        %2385 = vmatpush1.msra.mxu0 %v473
        %2386 = vmatprep.subr.mxu0 %v478
        %2387 = vmatpush1.msra.mxu0 %v477
        %2388 = vmatprep.subr.mxu0 %v482
        %2389 = vmatpush1.msra.mxu0 %v481
        %2390 = vmatprep.subr.mxu0 %v486
        %2391 = vmatpush1.msra.mxu0 %v485
        %2392 = vmatprep.subr.mxu0 %v490
        %2393 = vmatpush1.msra.mxu0 %v489
        %2394 = vmatprep.subr.mxu0 %v494
        %2395 = vmatpush1.msra.mxu0 %v493
        %2396 = vmatprep.subr.mxu0 0.0
        %2397 = vmatpush1.msra.mxu0 0.0
        %2398 = vmatprep.subr.mxu0 0.0
        %2399 = vmatpush1.msra.mxu0 0.0
        %2400 = vmatprep.subr.mxu0 0.0
        %2401 = vmatpush1.msra.mxu0 0.0
        %2402 = vmatprep.subr.mxu0 0.0
        %2403 = vmatpush1.msra.mxu0 0.0
        %2404 = vmatprep.subr.mxu0 0.0
        %2405 = vmatpush1.msra.mxu0 0.0
        %2406 = vmatprep.subr.mxu0 0.0
        %2407 = vmatpush1.msra.mxu0 0.0
        %2408 = vmatprep.subr.mxu0 0.0
        %2409 = vmatpush1.msra.mxu0 0.0
        %2410 = vmatprep.subr.mxu0 0.0
        %2411 = vmatpush1.msra.mxu0 0.0
        %2412 = vmatprep.subr.mxu0 0.0
        %2413 = vmatpush1.msra.mxu0 0.0
        %2414 = vmatprep.subr.mxu0 0.0
        %2415 = vmatpush1.msra.mxu0 0.0
        %2416 = vmatprep.subr.mxu0 0.0
        %2417 = vmatpush1.msra.mxu0 0.0
        %2418 = vmatprep.subr.mxu0 0.0
        %2419 = vmatpush1.msra.mxu0 0.0
        %2420 = vmatprep.subr.mxu0 0.0
        %2421 = vmatpush1.msra.mxu0 0.0
        %2422 = vmatprep.subr.mxu0 0.0
        %2423 = vmatpush1.msra.mxu0 0.0
        %2424 = vmatprep.subr.mxu0 0.0
        %2425 = vmatpush1.msra.mxu0 0.0
        %2426 = vmatprep.subr.mxu0 0.0
        %2427 = vmatpush1.msra.mxu0 0.0
        %2428 = vmatprep.mubr.f32.mxu0 0.0
        %2429 = vmatmul.mubr.f32.gmra.mrb[0].mxu0 %v2363
        %v2430 = vpop.f32.mrb[0].mxu0
        %v2431 = vadd.f32 %v2114, %v2430
        %v2432 = vpop.f32.mrb[0].mxu0
        %v2433 = vadd.f32 %v2116, %v2432
        %2434 = vdwg.mxu0
        %2435 = vmatprep.subr.mxu0 %v436
        %2436 = vmatpush1.msra.mxu0 %v435
        %2437 = vmatprep.subr.mxu0 %v440
        %2438 = vmatpush1.msra.mxu0 %v439
        %2439 = vmatprep.subr.mxu0 %v444
        %2440 = vmatpush1.msra.mxu0 %v443
        %2441 = vmatprep.subr.mxu0 %v448
        %2442 = vmatpush1.msra.mxu0 %v447
        %2443 = vmatprep.subr.mxu0 %v452
        %2444 = vmatpush1.msra.mxu0 %v451
        %2445 = vmatprep.subr.mxu0 %v456
        %2446 = vmatpush1.msra.mxu0 %v455
        %2447 = vmatprep.subr.mxu0 %v460
        %2448 = vmatpush1.msra.mxu0 %v459
        %2449 = vmatprep.subr.mxu0 %v464
        %2450 = vmatpush1.msra.mxu0 %v463
        %2451 = vmatprep.subr.mxu0 %v468
        %2452 = vmatpush1.msra.mxu0 %v467
        %2453 = vmatprep.subr.mxu0 %v472
        %2454 = vmatpush1.msra.mxu0 %v471
        %2455 = vmatprep.subr.mxu0 %v476
        %2456 = vmatpush1.msra.mxu0 %v475
        %2457 = vmatprep.subr.mxu0 %v480
        %2458 = vmatpush1.msra.mxu0 %v479
        %2459 = vmatprep.subr.mxu0 %v484
        %2460 = vmatpush1.msra.mxu0 %v483
        %2461 = vmatprep.subr.mxu0 %v488
        %2462 = vmatpush1.msra.mxu0 %v487
        %2463 = vmatprep.subr.mxu0 %v492
        %2464 = vmatpush1.msra.mxu0 %v491
        %2465 = vmatprep.subr.mxu0 %v496
        %2466 = vmatpush1.msra.mxu0 %v495
        %2467 = vmatprep.subr.mxu0 0.0
        %2468 = vmatpush1.msra.mxu0 0.0
        %2469 = vmatprep.subr.mxu0 0.0
        %2470 = vmatpush1.msra.mxu0 0.0
        %2471 = vmatprep.subr.mxu0 0.0
        %2472 = vmatpush1.msra.mxu0 0.0
        %2473 = vmatprep.subr.mxu0 0.0
        %2474 = vmatpush1.msra.mxu0 0.0
        %2475 = vmatprep.subr.mxu0 0.0
        %2476 = vmatpush1.msra.mxu0 0.0
        %2477 = vmatprep.subr.mxu0 0.0
        %2478 = vmatpush1.msra.mxu0 0.0
        %2479 = vmatprep.subr.mxu0 0.0
        %2480 = vmatpush1.msra.mxu0 0.0
        %2481 = vmatprep.subr.mxu0 0.0
        %2482 = vmatpush1.msra.mxu0 0.0
        %2483 = vmatprep.subr.mxu0 0.0
        %2484 = vmatpush1.msra.mxu0 0.0
        %2485 = vmatprep.subr.mxu0 0.0
        %2486 = vmatpush1.msra.mxu0 0.0
        %2487 = vmatprep.subr.mxu0 0.0
        %2488 = vmatpush1.msra.mxu0 0.0
        %2489 = vmatprep.subr.mxu0 0.0
        %2490 = vmatpush1.msra.mxu0 0.0
        %2491 = vmatprep.subr.mxu0 0.0
        %2492 = vmatpush1.msra.mxu0 0.0
        %2493 = vmatprep.subr.mxu0 0.0
        %2494 = vmatpush1.msra.mxu0 0.0
        %2495 = vmatprep.subr.mxu0 0.0
        %2496 = vmatpush1.msra.mxu0 0.0
        %2497 = vmatprep.subr.mxu0 0.0
        %2498 = vmatpush1.msra.mxu0 0.0
        %2499 = vmatprep.mubr.f32.mxu0 0.0
        %2500 = vmatmul.mubr.f32.gmra.mrb[0].mxu0 %v2363
        %v2501 = vpop.f32.mrb[0].mxu0
        %v2502 = vadd.f32 %v2185, %v2501
        %v2503 = vpop.f32.mrb[0].mxu0
        %v2504 = vadd.f32 %v2187, %v2503
        %2505 = vdwg.mxu0
        %v2506 = vadd.f32 %v2431, %v566
        %v2507 = vadd.f32 %v2433, %v570
        %v2508 = vadd.f32 %v2502, %v574
        %v2509 = vadd.f32 %v2504, %v578
        %v2510 = vxor.u32 %v2506, 2147483648
        %v2511 = vmul.f32 %v2510, 1.442695
        %v2512 = vpow.pop %v2511
        %v2513 = vadd.f32 %v2512, 1.0
        %v2514 = vrcp.pop %v2513
        %v2515 = vmul.f32 1.0, %v2514
        %v2516 = vxor.u32 %v2507, 2147483648
        %v2517 = vmul.f32 %v2516, 1.442695
        %v2518 = vpow.pop %v2517
        %v2519 = vadd.f32 %v2518, 1.0
        %v2520 = vrcp.pop %v2519
        %v2521 = vmul.f32 1.0, %v2520
        %v2522 = vtanh.pop %v2508
        %v2523 = vxor.u32 %v2509, 2147483648
        %v2524 = vmul.f32 %v2523, 1.442695
        %v2525 = vpow.pop %v2524
        %v2526 = vadd.f32 %v2525, 1.0
        %v2527 = vrcp.pop %v2526
        %v2528 = vmul.f32 1.0, %v2527
        %v2529 = vmul.f32 %v2521, %v2044
        %v2530 = vmul.f32 %v2515, %v2522
        %v2531 = vadd.f32 %v2529, %v2530
        %v2532 = vtanh.pop %v2531
        %v2533 = vmul.f32 %v2528, %v2532
        %2534 = vmatprep.subr.mxu0 %v498
        %2535 = vmatpush1.msra.mxu0 %v497
        %2536 = vmatprep.subr.mxu0 %v502
        %2537 = vmatpush1.msra.mxu0 %v501
        %2538 = vmatprep.subr.mxu0 %v506
        %2539 = vmatpush1.msra.mxu0 %v505
        %2540 = vmatprep.subr.mxu0 %v510
        %2541 = vmatpush1.msra.mxu0 %v509
        %2542 = vmatprep.subr.mxu0 %v514
        %2543 = vmatpush1.msra.mxu0 %v513
        %2544 = vmatprep.subr.mxu0 %v518
        %2545 = vmatpush1.msra.mxu0 %v517
        %2546 = vmatprep.subr.mxu0 %v522
        %2547 = vmatpush1.msra.mxu0 %v521
        %2548 = vmatprep.subr.mxu0 %v526
        %2549 = vmatpush1.msra.mxu0 %v525
        %2550 = vmatprep.subr.mxu0 %v530
        %2551 = vmatpush1.msra.mxu0 %v529
        %2552 = vmatprep.subr.mxu0 %v534
        %2553 = vmatpush1.msra.mxu0 %v533
        %2554 = vmatprep.subr.mxu0 %v538
        %2555 = vmatpush1.msra.mxu0 %v537
        %2556 = vmatprep.subr.mxu0 %v542
        %2557 = vmatpush1.msra.mxu0 %v541
        %2558 = vmatprep.subr.mxu0 %v546
        %2559 = vmatpush1.msra.mxu0 %v545
        %2560 = vmatprep.subr.mxu0 %v550
        %2561 = vmatpush1.msra.mxu0 %v549
        %2562 = vmatprep.subr.mxu0 %v554
        %2563 = vmatpush1.msra.mxu0 %v553
        %2564 = vmatprep.subr.mxu0 %v558
        %2565 = vmatpush1.msra.mxu0 %v557
        %2566 = vmatprep.subr.mxu0 0.0
        %2567 = vmatpush1.msra.mxu0 0.0
        %2568 = vmatprep.subr.mxu0 0.0
        %2569 = vmatpush1.msra.mxu0 0.0
        %2570 = vmatprep.subr.mxu0 0.0
        %2571 = vmatpush1.msra.mxu0 0.0
        %2572 = vmatprep.subr.mxu0 0.0
        %2573 = vmatpush1.msra.mxu0 0.0
        %2574 = vmatprep.subr.mxu0 0.0
        %2575 = vmatpush1.msra.mxu0 0.0
        %2576 = vmatprep.subr.mxu0 0.0
        %2577 = vmatpush1.msra.mxu0 0.0
        %2578 = vmatprep.subr.mxu0 0.0
        %2579 = vmatpush1.msra.mxu0 0.0
        %2580 = vmatprep.subr.mxu0 0.0
        %2581 = vmatpush1.msra.mxu0 0.0
        %2582 = vmatprep.subr.mxu0 0.0
        %2583 = vmatpush1.msra.mxu0 0.0
        %2584 = vmatprep.subr.mxu0 0.0
        %2585 = vmatpush1.msra.mxu0 0.0
        %2586 = vmatprep.subr.mxu0 0.0
        %2587 = vmatpush1.msra.mxu0 0.0
        %2588 = vmatprep.subr.mxu0 0.0
        %2589 = vmatpush1.msra.mxu0 0.0
        %2590 = vmatprep.subr.mxu0 0.0
        %2591 = vmatpush1.msra.mxu0 0.0
        %2592 = vmatprep.subr.mxu0 0.0
        %2593 = vmatpush1.msra.mxu0 0.0
        %2594 = vmatprep.subr.mxu0 0.0
        %2595 = vmatpush1.msra.mxu0 0.0
        %2596 = vmatprep.subr.mxu0 0.0
        %2597 = vmatpush1.msra.mxu0 0.0
        %2598 = vmatprep.mubr.f32.mxu0 0.0
        %2599 = vmatmul.mubr.f32.gmra.mrb[0].mxu0 %v2533
        %v2600 = vpop.f32.mrb[0].mxu0
        %v2601 = vadd.f32 0.0, %v2600
        %v2602 = vpop.f32.mrb[0].mxu0
        %v2603 = vadd.f32 0.0, %v2602
        %2604 = vdwg.mxu0
        %2605 = vmatprep.subr.mxu0 %v500
        %2606 = vmatpush1.msra.mxu0 %v499
        %2607 = vmatprep.subr.mxu0 %v504
        %2608 = vmatpush1.msra.mxu0 %v503
        %2609 = vmatprep.subr.mxu0 %v508
        %2610 = vmatpush1.msra.mxu0 %v507
        %2611 = vmatprep.subr.mxu0 %v512
        %2612 = vmatpush1.msra.mxu0 %v511
        %2613 = vmatprep.subr.mxu0 %v516
        %2614 = vmatpush1.msra.mxu0 %v515
        %2615 = vmatprep.subr.mxu0 %v520
        %2616 = vmatpush1.msra.mxu0 %v519
        %2617 = vmatprep.subr.mxu0 %v524
        %2618 = vmatpush1.msra.mxu0 %v523
        %2619 = vmatprep.subr.mxu0 %v528
        %2620 = vmatpush1.msra.mxu0 %v527
        %2621 = vmatprep.subr.mxu0 %v532
        %2622 = vmatpush1.msra.mxu0 %v531
        %2623 = vmatprep.subr.mxu0 %v536
        %2624 = vmatpush1.msra.mxu0 %v535
        %2625 = vmatprep.subr.mxu0 %v540
        %2626 = vmatpush1.msra.mxu0 %v539
        %2627 = vmatprep.subr.mxu0 %v544
        %2628 = vmatpush1.msra.mxu0 %v543
        %2629 = vmatprep.subr.mxu0 %v548
        %2630 = vmatpush1.msra.mxu0 %v547
        %2631 = vmatprep.subr.mxu0 %v552
        %2632 = vmatpush1.msra.mxu0 %v551
        %2633 = vmatprep.subr.mxu0 %v556
        %2634 = vmatpush1.msra.mxu0 %v555
        %2635 = vmatprep.subr.mxu0 %v560
        %2636 = vmatpush1.msra.mxu0 %v559
        %2637 = vmatprep.subr.mxu0 0.0
        %2638 = vmatpush1.msra.mxu0 0.0
        %2639 = vmatprep.subr.mxu0 0.0
        %2640 = vmatpush1.msra.mxu0 0.0
        %2641 = vmatprep.subr.mxu0 0.0
        %2642 = vmatpush1.msra.mxu0 0.0
        %2643 = vmatprep.subr.mxu0 0.0
        %2644 = vmatpush1.msra.mxu0 0.0
        %2645 = vmatprep.subr.mxu0 0.0
        %2646 = vmatpush1.msra.mxu0 0.0
        %2647 = vmatprep.subr.mxu0 0.0
        %2648 = vmatpush1.msra.mxu0 0.0
        %2649 = vmatprep.subr.mxu0 0.0
        %2650 = vmatpush1.msra.mxu0 0.0
        %2651 = vmatprep.subr.mxu0 0.0
        %2652 = vmatpush1.msra.mxu0 0.0
        %2653 = vmatprep.subr.mxu0 0.0
        %2654 = vmatpush1.msra.mxu0 0.0
        %2655 = vmatprep.subr.mxu0 0.0
        %2656 = vmatpush1.msra.mxu0 0.0
        %2657 = vmatprep.subr.mxu0 0.0
        %2658 = vmatpush1.msra.mxu0 0.0
        %2659 = vmatprep.subr.mxu0 0.0
        %2660 = vmatpush1.msra.mxu0 0.0
        %2661 = vmatprep.subr.mxu0 0.0
        %2662 = vmatpush1.msra.mxu0 0.0
        %2663 = vmatprep.subr.mxu0 0.0
        %2664 = vmatpush1.msra.mxu0 0.0
        %2665 = vmatprep.subr.mxu0 0.0
        %2666 = vmatpush1.msra.mxu0 0.0
        %2667 = vmatprep.subr.mxu0 0.0
        %2668 = vmatpush1.msra.mxu0 0.0
        %2669 = vmatprep.mubr.f32.mxu0 0.0
        %2670 = vmatmul.mubr.f32.gmra.mrb[0].mxu0 %v2533
        %v2671 = vpop.f32.mrb[0].mxu0
        %v2672 = vadd.f32 0.0, %v2671
        %v2673 = vpop.f32.mrb[0].mxu0
        %v2674 = vadd.f32 0.0, %v2673
        %2675 = vdwg.mxu0
        %s2676 = scalar_lea.vmem %s314, 128 [#allocation7]
        %v2677 = vld [vmem:[%s2676] sm:$0xff]
        %v2678 = vld [vmem:[%s2676 + $0x8] sm:$0xff]
        %v2679 = vld [vmem:[%s2676 + $0x10] sm:$0xff]
        %v2680 = vld [vmem:[%s2676 + $0x18] sm:$0xff]
        %2681 = vmatprep.subr.mxu0 %v370
        %2682 = vmatpush1.msra.mxu0 %v369
        %2683 = vmatprep.subr.mxu0 %v374
        %2684 = vmatpush1.msra.mxu0 %v373
        %2685 = vmatprep.subr.mxu0 %v378
        %2686 = vmatpush1.msra.mxu0 %v377
        %2687 = vmatprep.subr.mxu0 %v382
        %2688 = vmatpush1.msra.mxu0 %v381
        %2689 = vmatprep.subr.mxu0 %v386
        %2690 = vmatpush1.msra.mxu0 %v385
        %2691 = vmatprep.subr.mxu0 %v390
        %2692 = vmatpush1.msra.mxu0 %v389
        %2693 = vmatprep.subr.mxu0 %v394
        %2694 = vmatpush1.msra.mxu0 %v393
        %2695 = vmatprep.subr.mxu0 %v398
        %2696 = vmatpush1.msra.mxu0 %v397
        %2697 = vmatprep.subr.mxu0 %v402
        %2698 = vmatpush1.msra.mxu0 %v401
        %2699 = vmatprep.subr.mxu0 %v406
        %2700 = vmatpush1.msra.mxu0 %v405
        %2701 = vmatprep.subr.mxu0 %v410
        %2702 = vmatpush1.msra.mxu0 %v409
        %2703 = vmatprep.subr.mxu0 %v414
        %2704 = vmatpush1.msra.mxu0 %v413
        %2705 = vmatprep.subr.mxu0 %v418
        %2706 = vmatpush1.msra.mxu0 %v417
        %2707 = vmatprep.subr.mxu0 %v422
        %2708 = vmatpush1.msra.mxu0 %v421
        %2709 = vmatprep.subr.mxu0 %v426
        %2710 = vmatpush1.msra.mxu0 %v425
        %2711 = vmatprep.subr.mxu0 %v430
        %2712 = vmatpush1.msra.mxu0 %v429
        %2713 = vmatprep.subr.mxu0 0.0
        %2714 = vmatpush1.msra.mxu0 0.0
        %2715 = vmatprep.subr.mxu0 0.0
        %2716 = vmatpush1.msra.mxu0 0.0
        %2717 = vmatprep.subr.mxu0 0.0
        %2718 = vmatpush1.msra.mxu0 0.0
        %2719 = vmatprep.subr.mxu0 0.0
        %2720 = vmatpush1.msra.mxu0 0.0
        %2721 = vmatprep.subr.mxu0 0.0
        %2722 = vmatpush1.msra.mxu0 0.0
        %2723 = vmatprep.subr.mxu0 0.0
        %2724 = vmatpush1.msra.mxu0 0.0
        %2725 = vmatprep.subr.mxu0 0.0
        %2726 = vmatpush1.msra.mxu0 0.0
        %2727 = vmatprep.subr.mxu0 0.0
        %2728 = vmatpush1.msra.mxu0 0.0
        %2729 = vmatprep.subr.mxu0 0.0
        %2730 = vmatpush1.msra.mxu0 0.0
        %2731 = vmatprep.subr.mxu0 0.0
        %2732 = vmatpush1.msra.mxu0 0.0
        %2733 = vmatprep.subr.mxu0 0.0
        %2734 = vmatpush1.msra.mxu0 0.0
        %2735 = vmatprep.subr.mxu0 0.0
        %2736 = vmatpush1.msra.mxu0 0.0
        %2737 = vmatprep.subr.mxu0 0.0
        %2738 = vmatpush1.msra.mxu0 0.0
        %2739 = vmatprep.subr.mxu0 0.0
        %2740 = vmatpush1.msra.mxu0 0.0
        %2741 = vmatprep.subr.mxu0 0.0
        %2742 = vmatpush1.msra.mxu0 0.0
        %2743 = vmatprep.subr.mxu0 0.0
        %2744 = vmatpush1.msra.mxu0 0.0
        %2745 = vmatprep.mubr.f32.mxu0 0.0
        %2746 = vmatmul.mubr.f32.gmra.mrb[0].mxu0 %v2363
        %v2747 = vpop.f32.mrb[0].mxu0
        %v2748 = vadd.f32 0.0, %v2747
        %v2749 = vpop.f32.mrb[0].mxu0
        %v2750 = vadd.f32 0.0, %v2749
        %2751 = vdwg.mxu0
        %2752 = vmatprep.subr.mxu0 %v372
        %2753 = vmatpush1.msra.mxu0 %v371
        %2754 = vmatprep.subr.mxu0 %v376
        %2755 = vmatpush1.msra.mxu0 %v375
        %2756 = vmatprep.subr.mxu0 %v380
        %2757 = vmatpush1.msra.mxu0 %v379
        %2758 = vmatprep.subr.mxu0 %v384
        %2759 = vmatpush1.msra.mxu0 %v383
        %2760 = vmatprep.subr.mxu0 %v388
        %2761 = vmatpush1.msra.mxu0 %v387
        %2762 = vmatprep.subr.mxu0 %v392
        %2763 = vmatpush1.msra.mxu0 %v391
        %2764 = vmatprep.subr.mxu0 %v396
        %2765 = vmatpush1.msra.mxu0 %v395
        %2766 = vmatprep.subr.mxu0 %v400
        %2767 = vmatpush1.msra.mxu0 %v399
        %2768 = vmatprep.subr.mxu0 %v404
        %2769 = vmatpush1.msra.mxu0 %v403
        %2770 = vmatprep.subr.mxu0 %v408
        %2771 = vmatpush1.msra.mxu0 %v407
        %2772 = vmatprep.subr.mxu0 %v412
        %2773 = vmatpush1.msra.mxu0 %v411
        %2774 = vmatprep.subr.mxu0 %v416
        %2775 = vmatpush1.msra.mxu0 %v415
        %2776 = vmatprep.subr.mxu0 %v420
        %2777 = vmatpush1.msra.mxu0 %v419
        %2778 = vmatprep.subr.mxu0 %v424
        %2779 = vmatpush1.msra.mxu0 %v423
        %2780 = vmatprep.subr.mxu0 %v428
        %2781 = vmatpush1.msra.mxu0 %v427
        %2782 = vmatprep.subr.mxu0 %v432
        %2783 = vmatpush1.msra.mxu0 %v431
        %2784 = vmatprep.subr.mxu0 0.0
        %2785 = vmatpush1.msra.mxu0 0.0
        %2786 = vmatprep.subr.mxu0 0.0
        %2787 = vmatpush1.msra.mxu0 0.0
        %2788 = vmatprep.subr.mxu0 0.0
        %2789 = vmatpush1.msra.mxu0 0.0
        %2790 = vmatprep.subr.mxu0 0.0
        %2791 = vmatpush1.msra.mxu0 0.0
        %2792 = vmatprep.subr.mxu0 0.0
        %2793 = vmatpush1.msra.mxu0 0.0
        %2794 = vmatprep.subr.mxu0 0.0
        %2795 = vmatpush1.msra.mxu0 0.0
        %2796 = vmatprep.subr.mxu0 0.0
        %2797 = vmatpush1.msra.mxu0 0.0
        %2798 = vmatprep.subr.mxu0 0.0
        %2799 = vmatpush1.msra.mxu0 0.0
        %2800 = vmatprep.subr.mxu0 0.0
        %2801 = vmatpush1.msra.mxu0 0.0
        %2802 = vmatprep.subr.mxu0 0.0
        %2803 = vmatpush1.msra.mxu0 0.0
        %2804 = vmatprep.subr.mxu0 0.0
        %2805 = vmatpush1.msra.mxu0 0.0
        %2806 = vmatprep.subr.mxu0 0.0
        %2807 = vmatpush1.msra.mxu0 0.0
        %2808 = vmatprep.subr.mxu0 0.0
        %2809 = vmatpush1.msra.mxu0 0.0
        %2810 = vmatprep.subr.mxu0 0.0
        %2811 = vmatpush1.msra.mxu0 0.0
        %2812 = vmatprep.subr.mxu0 0.0
        %2813 = vmatpush1.msra.mxu0 0.0
        %2814 = vmatprep.subr.mxu0 0.0
        %2815 = vmatpush1.msra.mxu0 0.0
        %2816 = vmatprep.mubr.f32.mxu0 0.0
        %2817 = vmatmul.mubr.f32.gmra.mrb[0].mxu0 %v2363
        %v2818 = vpop.f32.mrb[0].mxu0
        %v2819 = vadd.f32 0.0, %v2818
        %v2820 = vpop.f32.mrb[0].mxu0
        %v2821 = vadd.f32 0.0, %v2820
        %2822 = vdwg.mxu0
        %v2823 = vadd.f32 %v2677, %v2748
        %v2824 = vadd.f32 %v2678, %v2750
        %v2825 = vadd.f32 %v2679, %v2819
        %v2826 = vadd.f32 %v2680, %v2821
        %v2827 = vxor.u32 %v2823, 2147483648
        %v2828 = vmul.f32 %v2827, 1.442695
        %v2829 = vpow.pop %v2828
        %v2830 = vadd.f32 %v2829, 1.0
        %v2831 = vrcp.pop %v2830
        %v2832 = vmul.f32 1.0, %v2831
        %v2833 = vxor.u32 %v2824, 2147483648
        %v2834 = vmul.f32 %v2833, 1.442695
        %v2835 = vpow.pop %v2834
        %v2836 = vadd.f32 %v2835, 1.0
        %v2837 = vrcp.pop %v2836
        %v2838 = vmul.f32 1.0, %v2837
        %v2839 = vtanh.pop %v2825
        %v2840 = vxor.u32 %v2826, 2147483648
        %v2841 = vmul.f32 %v2840, 1.442695
        %v2842 = vpow.pop %v2841
        %v2843 = vadd.f32 %v2842, 1.0
        %v2844 = vrcp.pop %v2843
        %v2845 = vmul.f32 1.0, %v2844
        %v2846 = vmul.f32 %v2838, %v2361
        %v2847 = vmul.f32 %v2832, %v2839
        %v2848 = vadd.f32 %v2846, %v2847
        %v2849 = vtanh.pop %v2848
        %v2850 = vmul.f32 %v2845, %v2849
        %2851 = vmatprep.subr.mxu0 %v434
        %2852 = vmatpush1.msra.mxu0 %v433
        %2853 = vmatprep.subr.mxu0 %v438
        %2854 = vmatpush1.msra.mxu0 %v437
        %2855 = vmatprep.subr.mxu0 %v442
        %2856 = vmatpush1.msra.mxu0 %v441
        %2857 = vmatprep.subr.mxu0 %v446
        %2858 = vmatpush1.msra.mxu0 %v445
        %2859 = vmatprep.subr.mxu0 %v450
        %2860 = vmatpush1.msra.mxu0 %v449
        %2861 = vmatprep.subr.mxu0 %v454
        %2862 = vmatpush1.msra.mxu0 %v453
        %2863 = vmatprep.subr.mxu0 %v458
        %2864 = vmatpush1.msra.mxu0 %v457
        %2865 = vmatprep.subr.mxu0 %v462
        %2866 = vmatpush1.msra.mxu0 %v461
        %2867 = vmatprep.subr.mxu0 %v466
        %2868 = vmatpush1.msra.mxu0 %v465
        %2869 = vmatprep.subr.mxu0 %v470
        %2870 = vmatpush1.msra.mxu0 %v469
        %2871 = vmatprep.subr.mxu0 %v474
        %2872 = vmatpush1.msra.mxu0 %v473
        %2873 = vmatprep.subr.mxu0 %v478
        %2874 = vmatpush1.msra.mxu0 %v477
        %2875 = vmatprep.subr.mxu0 %v482
        %2876 = vmatpush1.msra.mxu0 %v481
        %2877 = vmatprep.subr.mxu0 %v486
        %2878 = vmatpush1.msra.mxu0 %v485
        %2879 = vmatprep.subr.mxu0 %v490
        %2880 = vmatpush1.msra.mxu0 %v489
        %2881 = vmatprep.subr.mxu0 %v494
        %2882 = vmatpush1.msra.mxu0 %v493
        %2883 = vmatprep.subr.mxu0 0.0
        %2884 = vmatpush1.msra.mxu0 0.0
        %2885 = vmatprep.subr.mxu0 0.0
        %2886 = vmatpush1.msra.mxu0 0.0
        %2887 = vmatprep.subr.mxu0 0.0
        %2888 = vmatpush1.msra.mxu0 0.0
        %2889 = vmatprep.subr.mxu0 0.0
        %2890 = vmatpush1.msra.mxu0 0.0
        %2891 = vmatprep.subr.mxu0 0.0
        %2892 = vmatpush1.msra.mxu0 0.0
        %2893 = vmatprep.subr.mxu0 0.0
        %2894 = vmatpush1.msra.mxu0 0.0
        %2895 = vmatprep.subr.mxu0 0.0
        %2896 = vmatpush1.msra.mxu0 0.0
        %2897 = vmatprep.subr.mxu0 0.0
        %2898 = vmatpush1.msra.mxu0 0.0
        %2899 = vmatprep.subr.mxu0 0.0
        %2900 = vmatpush1.msra.mxu0 0.0
        %2901 = vmatprep.subr.mxu0 0.0
        %2902 = vmatpush1.msra.mxu0 0.0
        %2903 = vmatprep.subr.mxu0 0.0
        %2904 = vmatpush1.msra.mxu0 0.0
        %2905 = vmatprep.subr.mxu0 0.0
        %2906 = vmatpush1.msra.mxu0 0.0
        %2907 = vmatprep.subr.mxu0 0.0
        %2908 = vmatpush1.msra.mxu0 0.0
        %2909 = vmatprep.subr.mxu0 0.0
        %2910 = vmatpush1.msra.mxu0 0.0
        %2911 = vmatprep.subr.mxu0 0.0
        %2912 = vmatpush1.msra.mxu0 0.0
        %2913 = vmatprep.subr.mxu0 0.0
        %2914 = vmatpush1.msra.mxu0 0.0
        %2915 = vmatprep.mubr.f32.mxu0 0.0
        %2916 = vmatmul.mubr.f32.gmra.mrb[0].mxu0 %v2850
        %v2917 = vpop.f32.mrb[0].mxu0
        %v2918 = vadd.f32 %v2601, %v2917
        %v2919 = vpop.f32.mrb[0].mxu0
        %v2920 = vadd.f32 %v2603, %v2919
        %2921 = vdwg.mxu0
        %2922 = vmatprep.subr.mxu0 %v436
        %2923 = vmatpush1.msra.mxu0 %v435
        %2924 = vmatprep.subr.mxu0 %v440
        %2925 = vmatpush1.msra.mxu0 %v439
        %2926 = vmatprep.subr.mxu0 %v444
        %2927 = vmatpush1.msra.mxu0 %v443
        %2928 = vmatprep.subr.mxu0 %v448
        %2929 = vmatpush1.msra.mxu0 %v447
        %2930 = vmatprep.subr.mxu0 %v452
        %2931 = vmatpush1.msra.mxu0 %v451
        %2932 = vmatprep.subr.mxu0 %v456
        %2933 = vmatpush1.msra.mxu0 %v455
        %2934 = vmatprep.subr.mxu0 %v460
        %2935 = vmatpush1.msra.mxu0 %v459
        %2936 = vmatprep.subr.mxu0 %v464
        %2937 = vmatpush1.msra.mxu0 %v463
        %2938 = vmatprep.subr.mxu0 %v468
        %2939 = vmatpush1.msra.mxu0 %v467
        %2940 = vmatprep.subr.mxu0 %v472
        %2941 = vmatpush1.msra.mxu0 %v471
        %2942 = vmatprep.subr.mxu0 %v476
        %2943 = vmatpush1.msra.mxu0 %v475
        %2944 = vmatprep.subr.mxu0 %v480
        %2945 = vmatpush1.msra.mxu0 %v479
        %2946 = vmatprep.subr.mxu0 %v484
        %2947 = vmatpush1.msra.mxu0 %v483
        %2948 = vmatprep.subr.mxu0 %v488
        %2949 = vmatpush1.msra.mxu0 %v487
        %2950 = vmatprep.subr.mxu0 %v492
        %2951 = vmatpush1.msra.mxu0 %v491
        %2952 = vmatprep.subr.mxu0 %v496
        %2953 = vmatpush1.msra.mxu0 %v495
        %2954 = vmatprep.subr.mxu0 0.0
        %2955 = vmatpush1.msra.mxu0 0.0
        %2956 = vmatprep.subr.mxu0 0.0
        %2957 = vmatpush1.msra.mxu0 0.0
        %2958 = vmatprep.subr.mxu0 0.0
        %2959 = vmatpush1.msra.mxu0 0.0
        %2960 = vmatprep.subr.mxu0 0.0
        %2961 = vmatpush1.msra.mxu0 0.0
        %2962 = vmatprep.subr.mxu0 0.0
        %2963 = vmatpush1.msra.mxu0 0.0
        %2964 = vmatprep.subr.mxu0 0.0
        %2965 = vmatpush1.msra.mxu0 0.0
        %2966 = vmatprep.subr.mxu0 0.0
        %2967 = vmatpush1.msra.mxu0 0.0
        %2968 = vmatprep.subr.mxu0 0.0
        %2969 = vmatpush1.msra.mxu0 0.0
        %2970 = vmatprep.subr.mxu0 0.0
        %2971 = vmatpush1.msra.mxu0 0.0
        %2972 = vmatprep.subr.mxu0 0.0
        %2973 = vmatpush1.msra.mxu0 0.0
        %2974 = vmatprep.subr.mxu0 0.0
        %2975 = vmatpush1.msra.mxu0 0.0
        %2976 = vmatprep.subr.mxu0 0.0
        %2977 = vmatpush1.msra.mxu0 0.0
        %2978 = vmatprep.subr.mxu0 0.0
        %2979 = vmatpush1.msra.mxu0 0.0
        %2980 = vmatprep.subr.mxu0 0.0
        %2981 = vmatpush1.msra.mxu0 0.0
        %2982 = vmatprep.subr.mxu0 0.0
        %2983 = vmatpush1.msra.mxu0 0.0
        %2984 = vmatprep.subr.mxu0 0.0
        %2985 = vmatpush1.msra.mxu0 0.0
        %2986 = vmatprep.mubr.f32.mxu0 0.0
        %2987 = vmatmul.mubr.f32.gmra.mrb[0].mxu0 %v2850
        %v2988 = vpop.f32.mrb[0].mxu0
        %v2989 = vadd.f32 %v2672, %v2988
        %v2990 = vpop.f32.mrb[0].mxu0
        %v2991 = vadd.f32 %v2674, %v2990
        %2992 = vdwg.mxu0
        %v2993 = vadd.f32 %v2918, %v566
        %v2994 = vadd.f32 %v2920, %v570
        %v2995 = vadd.f32 %v2989, %v574
        %v2996 = vadd.f32 %v2991, %v578
        %v2997 = vxor.u32 %v2993, 2147483648
        %v2998 = vmul.f32 %v2997, 1.442695
        %v2999 = vpow.pop %v2998
        %v3000 = vadd.f32 %v2999, 1.0
        %v3001 = vrcp.pop %v3000
        %v3002 = vmul.f32 1.0, %v3001
        %v3003 = vxor.u32 %v2994, 2147483648
        %v3004 = vmul.f32 %v3003, 1.442695
        %v3005 = vpow.pop %v3004
        %v3006 = vadd.f32 %v3005, 1.0
        %v3007 = vrcp.pop %v3006
        %v3008 = vmul.f32 1.0, %v3007
        %v3009 = vtanh.pop %v2995
        %v3010 = vxor.u32 %v2996, 2147483648
        %v3011 = vmul.f32 %v3010, 1.442695
        %v3012 = vpow.pop %v3011
        %v3013 = vadd.f32 %v3012, 1.0
        %v3014 = vrcp.pop %v3013
        %v3015 = vmul.f32 1.0, %v3014
        %v3016 = vmul.f32 %v3008, %v2531
        %v3017 = vmul.f32 %v3002, %v3009
        %v3018 = vadd.f32 %v3016, %v3017
        %v3019 = vtanh.pop %v3018
        %v3020 = vmul.f32 %v3015, %v3019
        %3021 = vmatprep.subr.mxu0 %v498
        %3022 = vmatpush1.msra.mxu0 %v497
        %3023 = vmatprep.subr.mxu0 %v502
        %3024 = vmatpush1.msra.mxu0 %v501
        %3025 = vmatprep.subr.mxu0 %v506
        %3026 = vmatpush1.msra.mxu0 %v505
        %3027 = vmatprep.subr.mxu0 %v510
        %3028 = vmatpush1.msra.mxu0 %v509
        %3029 = vmatprep.subr.mxu0 %v514
        %3030 = vmatpush1.msra.mxu0 %v513
        %3031 = vmatprep.subr.mxu0 %v518
        %3032 = vmatpush1.msra.mxu0 %v517
        %3033 = vmatprep.subr.mxu0 %v522
        %3034 = vmatpush1.msra.mxu0 %v521
        %3035 = vmatprep.subr.mxu0 %v526
        %3036 = vmatpush1.msra.mxu0 %v525
        %3037 = vmatprep.subr.mxu0 %v530
        %3038 = vmatpush1.msra.mxu0 %v529
        %3039 = vmatprep.subr.mxu0 %v534
        %3040 = vmatpush1.msra.mxu0 %v533
        %3041 = vmatprep.subr.mxu0 %v538
        %3042 = vmatpush1.msra.mxu0 %v537
        %3043 = vmatprep.subr.mxu0 %v542
        %3044 = vmatpush1.msra.mxu0 %v541
        %3045 = vmatprep.subr.mxu0 %v546
        %3046 = vmatpush1.msra.mxu0 %v545
        %3047 = vmatprep.subr.mxu0 %v550
        %3048 = vmatpush1.msra.mxu0 %v549
        %3049 = vmatprep.subr.mxu0 %v554
        %3050 = vmatpush1.msra.mxu0 %v553
        %3051 = vmatprep.subr.mxu0 %v558
        %3052 = vmatpush1.msra.mxu0 %v557
        %3053 = vmatprep.subr.mxu0 0.0
        %3054 = vmatpush1.msra.mxu0 0.0
        %3055 = vmatprep.subr.mxu0 0.0
        %3056 = vmatpush1.msra.mxu0 0.0
        %3057 = vmatprep.subr.mxu0 0.0
        %3058 = vmatpush1.msra.mxu0 0.0
        %3059 = vmatprep.subr.mxu0 0.0
        %3060 = vmatpush1.msra.mxu0 0.0
        %3061 = vmatprep.subr.mxu0 0.0
        %3062 = vmatpush1.msra.mxu0 0.0
        %3063 = vmatprep.subr.mxu0 0.0
        %3064 = vmatpush1.msra.mxu0 0.0
        %3065 = vmatprep.subr.mxu0 0.0
        %3066 = vmatpush1.msra.mxu0 0.0
        %3067 = vmatprep.subr.mxu0 0.0
        %3068 = vmatpush1.msra.mxu0 0.0
        %3069 = vmatprep.subr.mxu0 0.0
        %3070 = vmatpush1.msra.mxu0 0.0
        %3071 = vmatprep.subr.mxu0 0.0
        %3072 = vmatpush1.msra.mxu0 0.0
        %3073 = vmatprep.subr.mxu0 0.0
        %3074 = vmatpush1.msra.mxu0 0.0
        %3075 = vmatprep.subr.mxu0 0.0
        %3076 = vmatpush1.msra.mxu0 0.0
        %3077 = vmatprep.subr.mxu0 0.0
        %3078 = vmatpush1.msra.mxu0 0.0
        %3079 = vmatprep.subr.mxu0 0.0
        %3080 = vmatpush1.msra.mxu0 0.0
        %3081 = vmatprep.subr.mxu0 0.0
        %3082 = vmatpush1.msra.mxu0 0.0
        %3083 = vmatprep.subr.mxu0 0.0
        %3084 = vmatpush1.msra.mxu0 0.0
        %3085 = vmatprep.mubr.f32.mxu0 0.0
        %3086 = vmatmul.mubr.f32.gmra.mrb[0].mxu0 %v3020
        %v3087 = vpop.f32.mrb[0].mxu0
        %v3088 = vadd.f32 0.0, %v3087
        %v3089 = vpop.f32.mrb[0].mxu0
        %v3090 = vadd.f32 0.0, %v3089
        %3091 = vdwg.mxu0
        %3092 = vmatprep.subr.mxu0 %v500
        %3093 = vmatpush1.msra.mxu0 %v499
        %3094 = vmatprep.subr.mxu0 %v504
        %3095 = vmatpush1.msra.mxu0 %v503
        %3096 = vmatprep.subr.mxu0 %v508
        %3097 = vmatpush1.msra.mxu0 %v507
        %3098 = vmatprep.subr.mxu0 %v512
        %3099 = vmatpush1.msra.mxu0 %v511
        %3100 = vmatprep.subr.mxu0 %v516
        %3101 = vmatpush1.msra.mxu0 %v515
        %3102 = vmatprep.subr.mxu0 %v520
        %3103 = vmatpush1.msra.mxu0 %v519
        %3104 = vmatprep.subr.mxu0 %v524
        %3105 = vmatpush1.msra.mxu0 %v523
        %3106 = vmatprep.subr.mxu0 %v528
        %3107 = vmatpush1.msra.mxu0 %v527
        %3108 = vmatprep.subr.mxu0 %v532
        %3109 = vmatpush1.msra.mxu0 %v531
        %3110 = vmatprep.subr.mxu0 %v536
        %3111 = vmatpush1.msra.mxu0 %v535
        %3112 = vmatprep.subr.mxu0 %v540
        %3113 = vmatpush1.msra.mxu0 %v539
        %3114 = vmatprep.subr.mxu0 %v544
        %3115 = vmatpush1.msra.mxu0 %v543
        %3116 = vmatprep.subr.mxu0 %v548
        %3117 = vmatpush1.msra.mxu0 %v547
        %3118 = vmatprep.subr.mxu0 %v552
        %3119 = vmatpush1.msra.mxu0 %v551
        %3120 = vmatprep.subr.mxu0 %v556
        %3121 = vmatpush1.msra.mxu0 %v555
        %3122 = vmatprep.subr.mxu0 %v560
        %3123 = vmatpush1.msra.mxu0 %v559
        %3124 = vmatprep.subr.mxu0 0.0
        %3125 = vmatpush1.msra.mxu0 0.0
        %3126 = vmatprep.subr.mxu0 0.0
        %3127 = vmatpush1.msra.mxu0 0.0
        %3128 = vmatprep.subr.mxu0 0.0
        %3129 = vmatpush1.msra.mxu0 0.0
        %3130 = vmatprep.subr.mxu0 0.0
        %3131 = vmatpush1.msra.mxu0 0.0
        %3132 = vmatprep.subr.mxu0 0.0
        %3133 = vmatpush1.msra.mxu0 0.0
        %3134 = vmatprep.subr.mxu0 0.0
        %3135 = vmatpush1.msra.mxu0 0.0
        %3136 = vmatprep.subr.mxu0 0.0
        %3137 = vmatpush1.msra.mxu0 0.0
        %3138 = vmatprep.subr.mxu0 0.0
        %3139 = vmatpush1.msra.mxu0 0.0
        %3140 = vmatprep.subr.mxu0 0.0
        %3141 = vmatpush1.msra.mxu0 0.0
        %3142 = vmatprep.subr.mxu0 0.0
        %3143 = vmatpush1.msra.mxu0 0.0
        %3144 = vmatprep.subr.mxu0 0.0
        %3145 = vmatpush1.msra.mxu0 0.0
        %3146 = vmatprep.subr.mxu0 0.0
        %3147 = vmatpush1.msra.mxu0 0.0
        %3148 = vmatprep.subr.mxu0 0.0
        %3149 = vmatpush1.msra.mxu0 0.0
        %3150 = vmatprep.subr.mxu0 0.0
        %3151 = vmatpush1.msra.mxu0 0.0
        %3152 = vmatprep.subr.mxu0 0.0
        %3153 = vmatpush1.msra.mxu0 0.0
        %3154 = vmatprep.subr.mxu0 0.0
        %3155 = vmatpush1.msra.mxu0 0.0
        %3156 = vmatprep.mubr.f32.mxu0 0.0
        %3157 = vmatmul.mubr.f32.gmra.mrb[0].mxu0 %v3020
        %v3158 = vpop.f32.mrb[0].mxu0
        %v3159 = vadd.f32 0.0, %v3158
        %v3160 = vpop.f32.mrb[0].mxu0
        %v3161 = vadd.f32 0.0, %v3160
        %3162 = vdwg.mxu0
        %s3163 = scalar_lea.vmem %s314, 160 [#allocation7]
        %v3164 = vld [vmem:[%s3163] sm:$0xff]
        %v3165 = vld [vmem:[%s3163 + $0x8] sm:$0xff]
        %v3166 = vld [vmem:[%s3163 + $0x10] sm:$0xff]
        %v3167 = vld [vmem:[%s3163 + $0x18] sm:$0xff]
        %3168 = vmatprep.subr.mxu0 %v370
        %3169 = vmatpush1.msra.mxu0 %v369
        %3170 = vmatprep.subr.mxu0 %v374
        %3171 = vmatpush1.msra.mxu0 %v373
        %3172 = vmatprep.subr.mxu0 %v378
        %3173 = vmatpush1.msra.mxu0 %v377
        %3174 = vmatprep.subr.mxu0 %v382
        %3175 = vmatpush1.msra.mxu0 %v381
        %3176 = vmatprep.subr.mxu0 %v386
        %3177 = vmatpush1.msra.mxu0 %v385
        %3178 = vmatprep.subr.mxu0 %v390
        %3179 = vmatpush1.msra.mxu0 %v389
        %3180 = vmatprep.subr.mxu0 %v394
        %3181 = vmatpush1.msra.mxu0 %v393
        %3182 = vmatprep.subr.mxu0 %v398
        %3183 = vmatpush1.msra.mxu0 %v397
        %3184 = vmatprep.subr.mxu0 %v402
        %3185 = vmatpush1.msra.mxu0 %v401
        %3186 = vmatprep.subr.mxu0 %v406
        %3187 = vmatpush1.msra.mxu0 %v405
        %3188 = vmatprep.subr.mxu0 %v410
        %3189 = vmatpush1.msra.mxu0 %v409
        %3190 = vmatprep.subr.mxu0 %v414
        %3191 = vmatpush1.msra.mxu0 %v413
        %3192 = vmatprep.subr.mxu0 %v418
        %3193 = vmatpush1.msra.mxu0 %v417
        %3194 = vmatprep.subr.mxu0 %v422
        %3195 = vmatpush1.msra.mxu0 %v421
        %3196 = vmatprep.subr.mxu0 %v426
        %3197 = vmatpush1.msra.mxu0 %v425
        %3198 = vmatprep.subr.mxu0 %v430
        %3199 = vmatpush1.msra.mxu0 %v429
        %3200 = vmatprep.subr.mxu0 0.0
        %3201 = vmatpush1.msra.mxu0 0.0
        %3202 = vmatprep.subr.mxu0 0.0
        %3203 = vmatpush1.msra.mxu0 0.0
        %3204 = vmatprep.subr.mxu0 0.0
        %3205 = vmatpush1.msra.mxu0 0.0
        %3206 = vmatprep.subr.mxu0 0.0
        %3207 = vmatpush1.msra.mxu0 0.0
        %3208 = vmatprep.subr.mxu0 0.0
        %3209 = vmatpush1.msra.mxu0 0.0
        %3210 = vmatprep.subr.mxu0 0.0
        %3211 = vmatpush1.msra.mxu0 0.0
        %3212 = vmatprep.subr.mxu0 0.0
        %3213 = vmatpush1.msra.mxu0 0.0
        %3214 = vmatprep.subr.mxu0 0.0
        %3215 = vmatpush1.msra.mxu0 0.0
        %3216 = vmatprep.subr.mxu0 0.0
        %3217 = vmatpush1.msra.mxu0 0.0
        %3218 = vmatprep.subr.mxu0 0.0
        %3219 = vmatpush1.msra.mxu0 0.0
        %3220 = vmatprep.subr.mxu0 0.0
        %3221 = vmatpush1.msra.mxu0 0.0
        %3222 = vmatprep.subr.mxu0 0.0
        %3223 = vmatpush1.msra.mxu0 0.0
        %3224 = vmatprep.subr.mxu0 0.0
        %3225 = vmatpush1.msra.mxu0 0.0
        %3226 = vmatprep.subr.mxu0 0.0
        %3227 = vmatpush1.msra.mxu0 0.0
        %3228 = vmatprep.subr.mxu0 0.0
        %3229 = vmatpush1.msra.mxu0 0.0
        %3230 = vmatprep.subr.mxu0 0.0
        %3231 = vmatpush1.msra.mxu0 0.0
        %3232 = vmatprep.mubr.f32.mxu0 0.0
        %3233 = vmatmul.mubr.f32.gmra.mrb[0].mxu0 %v2850
        %v3234 = vpop.f32.mrb[0].mxu0
        %v3235 = vadd.f32 0.0, %v3234
        %v3236 = vpop.f32.mrb[0].mxu0
        %v3237 = vadd.f32 0.0, %v3236
        %3238 = vdwg.mxu0
        %3239 = vmatprep.subr.mxu0 %v372
        %3240 = vmatpush1.msra.mxu0 %v371
        %3241 = vmatprep.subr.mxu0 %v376
        %3242 = vmatpush1.msra.mxu0 %v375
        %3243 = vmatprep.subr.mxu0 %v380
        %3244 = vmatpush1.msra.mxu0 %v379
        %3245 = vmatprep.subr.mxu0 %v384
        %3246 = vmatpush1.msra.mxu0 %v383
        %3247 = vmatprep.subr.mxu0 %v388
        %3248 = vmatpush1.msra.mxu0 %v387
        %3249 = vmatprep.subr.mxu0 %v392
        %3250 = vmatpush1.msra.mxu0 %v391
        %3251 = vmatprep.subr.mxu0 %v396
        %3252 = vmatpush1.msra.mxu0 %v395
        %3253 = vmatprep.subr.mxu0 %v400
        %3254 = vmatpush1.msra.mxu0 %v399
        %3255 = vmatprep.subr.mxu0 %v404
        %3256 = vmatpush1.msra.mxu0 %v403
        %3257 = vmatprep.subr.mxu0 %v408
        %3258 = vmatpush1.msra.mxu0 %v407
        %3259 = vmatprep.subr.mxu0 %v412
        %3260 = vmatpush1.msra.mxu0 %v411
        %3261 = vmatprep.subr.mxu0 %v416
        %3262 = vmatpush1.msra.mxu0 %v415
        %3263 = vmatprep.subr.mxu0 %v420
        %3264 = vmatpush1.msra.mxu0 %v419
        %3265 = vmatprep.subr.mxu0 %v424
        %3266 = vmatpush1.msra.mxu0 %v423
        %3267 = vmatprep.subr.mxu0 %v428
        %3268 = vmatpush1.msra.mxu0 %v427
        %3269 = vmatprep.subr.mxu0 %v432
        %3270 = vmatpush1.msra.mxu0 %v431
        %3271 = vmatprep.subr.mxu0 0.0
        %3272 = vmatpush1.msra.mxu0 0.0
        %3273 = vmatprep.subr.mxu0 0.0
        %3274 = vmatpush1.msra.mxu0 0.0
        %3275 = vmatprep.subr.mxu0 0.0
        %3276 = vmatpush1.msra.mxu0 0.0
        %3277 = vmatprep.subr.mxu0 0.0
        %3278 = vmatpush1.msra.mxu0 0.0
        %3279 = vmatprep.subr.mxu0 0.0
        %3280 = vmatpush1.msra.mxu0 0.0
        %3281 = vmatprep.subr.mxu0 0.0
        %3282 = vmatpush1.msra.mxu0 0.0
        %3283 = vmatprep.subr.mxu0 0.0
        %3284 = vmatpush1.msra.mxu0 0.0
        %3285 = vmatprep.subr.mxu0 0.0
        %3286 = vmatpush1.msra.mxu0 0.0
        %3287 = vmatprep.subr.mxu0 0.0
        %3288 = vmatpush1.msra.mxu0 0.0
        %3289 = vmatprep.subr.mxu0 0.0
        %3290 = vmatpush1.msra.mxu0 0.0
        %3291 = vmatprep.subr.mxu0 0.0
        %3292 = vmatpush1.msra.mxu0 0.0
        %3293 = vmatprep.subr.mxu0 0.0
        %3294 = vmatpush1.msra.mxu0 0.0
        %3295 = vmatprep.subr.mxu0 0.0
        %3296 = vmatpush1.msra.mxu0 0.0
        %3297 = vmatprep.subr.mxu0 0.0
        %3298 = vmatpush1.msra.mxu0 0.0
        %3299 = vmatprep.subr.mxu0 0.0
        %3300 = vmatpush1.msra.mxu0 0.0
        %3301 = vmatprep.subr.mxu0 0.0
        %3302 = vmatpush1.msra.mxu0 0.0
        %3303 = vmatprep.mubr.f32.mxu0 0.0
        %3304 = vmatmul.mubr.f32.gmra.mrb[0].mxu0 %v2850
        %v3305 = vpop.f32.mrb[0].mxu0
        %v3306 = vadd.f32 0.0, %v3305
        %v3307 = vpop.f32.mrb[0].mxu0
        %v3308 = vadd.f32 0.0, %v3307
        %3309 = vdwg.mxu0
        %v3310 = vadd.f32 %v3164, %v3235
        %v3311 = vadd.f32 %v3165, %v3237
        %v3312 = vadd.f32 %v3166, %v3306
        %v3313 = vadd.f32 %v3167, %v3308
        %v3314 = vxor.u32 %v3310, 2147483648
        %v3315 = vmul.f32 %v3314, 1.442695
        %v3316 = vpow.pop %v3315
        %v3317 = vadd.f32 %v3316, 1.0
        %v3318 = vrcp.pop %v3317
        %v3319 = vmul.f32 1.0, %v3318
        %v3320 = vxor.u32 %v3311, 2147483648
        %v3321 = vmul.f32 %v3320, 1.442695
        %v3322 = vpow.pop %v3321
        %v3323 = vadd.f32 %v3322, 1.0
        %v3324 = vrcp.pop %v3323
        %v3325 = vmul.f32 1.0, %v3324
        %v3326 = vtanh.pop %v3312
        %v3327 = vxor.u32 %v3313, 2147483648
        %v3328 = vmul.f32 %v3327, 1.442695
        %v3329 = vpow.pop %v3328
        %v3330 = vadd.f32 %v3329, 1.0
        %v3331 = vrcp.pop %v3330
        %v3332 = vmul.f32 1.0, %v3331
        %v3333 = vmul.f32 %v3325, %v2848
        %v3334 = vmul.f32 %v3319, %v3326
        %v3335 = vadd.f32 %v3333, %v3334
        %v3336 = vtanh.pop %v3335
        %v3337 = vmul.f32 %v3332, %v3336
        %3338 = vmatprep.subr.mxu0 %v434
        %3339 = vmatpush1.msra.mxu0 %v433
        %3340 = vmatprep.subr.mxu0 %v438
        %3341 = vmatpush1.msra.mxu0 %v437
        %3342 = vmatprep.subr.mxu0 %v442
        %3343 = vmatpush1.msra.mxu0 %v441
        %3344 = vmatprep.subr.mxu0 %v446
        %3345 = vmatpush1.msra.mxu0 %v445
        %3346 = vmatprep.subr.mxu0 %v450
        %3347 = vmatpush1.msra.mxu0 %v449
        %3348 = vmatprep.subr.mxu0 %v454
        %3349 = vmatpush1.msra.mxu0 %v453
        %3350 = vmatprep.subr.mxu0 %v458
        %3351 = vmatpush1.msra.mxu0 %v457
        %3352 = vmatprep.subr.mxu0 %v462
        %3353 = vmatpush1.msra.mxu0 %v461
        %3354 = vmatprep.subr.mxu0 %v466
        %3355 = vmatpush1.msra.mxu0 %v465
        %3356 = vmatprep.subr.mxu0 %v470
        %3357 = vmatpush1.msra.mxu0 %v469
        %3358 = vmatprep.subr.mxu0 %v474
        %3359 = vmatpush1.msra.mxu0 %v473
        %3360 = vmatprep.subr.mxu0 %v478
        %3361 = vmatpush1.msra.mxu0 %v477
        %3362 = vmatprep.subr.mxu0 %v482
        %3363 = vmatpush1.msra.mxu0 %v481
        %3364 = vmatprep.subr.mxu0 %v486
        %3365 = vmatpush1.msra.mxu0 %v485
        %3366 = vmatprep.subr.mxu0 %v490
        %3367 = vmatpush1.msra.mxu0 %v489
        %3368 = vmatprep.subr.mxu0 %v494
        %3369 = vmatpush1.msra.mxu0 %v493
        %3370 = vmatprep.subr.mxu0 0.0
        %3371 = vmatpush1.msra.mxu0 0.0
        %3372 = vmatprep.subr.mxu0 0.0
        %3373 = vmatpush1.msra.mxu0 0.0
        %3374 = vmatprep.subr.mxu0 0.0
        %3375 = vmatpush1.msra.mxu0 0.0
        %3376 = vmatprep.subr.mxu0 0.0
        %3377 = vmatpush1.msra.mxu0 0.0
        %3378 = vmatprep.subr.mxu0 0.0
        %3379 = vmatpush1.msra.mxu0 0.0
        %3380 = vmatprep.subr.mxu0 0.0
        %3381 = vmatpush1.msra.mxu0 0.0
        %3382 = vmatprep.subr.mxu0 0.0
        %3383 = vmatpush1.msra.mxu0 0.0
        %3384 = vmatprep.subr.mxu0 0.0
        %3385 = vmatpush1.msra.mxu0 0.0
        %3386 = vmatprep.subr.mxu0 0.0
        %3387 = vmatpush1.msra.mxu0 0.0
        %3388 = vmatprep.subr.mxu0 0.0
        %3389 = vmatpush1.msra.mxu0 0.0
        %3390 = vmatprep.subr.mxu0 0.0
        %3391 = vmatpush1.msra.mxu0 0.0
        %3392 = vmatprep.subr.mxu0 0.0
        %3393 = vmatpush1.msra.mxu0 0.0
        %3394 = vmatprep.subr.mxu0 0.0
        %3395 = vmatpush1.msra.mxu0 0.0
        %3396 = vmatprep.subr.mxu0 0.0
        %3397 = vmatpush1.msra.mxu0 0.0
        %3398 = vmatprep.subr.mxu0 0.0
        %3399 = vmatpush1.msra.mxu0 0.0
        %3400 = vmatprep.subr.mxu0 0.0
        %3401 = vmatpush1.msra.mxu0 0.0
        %3402 = vmatprep.mubr.f32.mxu0 0.0
        %3403 = vmatmul.mubr.f32.gmra.mrb[0].mxu0 %v3337
        %v3404 = vpop.f32.mrb[0].mxu0
        %v3405 = vadd.f32 %v3088, %v3404
        %v3406 = vpop.f32.mrb[0].mxu0
        %v3407 = vadd.f32 %v3090, %v3406
        %3408 = vdwg.mxu0
        %3409 = vmatprep.subr.mxu0 %v436
        %3410 = vmatpush1.msra.mxu0 %v435
        %3411 = vmatprep.subr.mxu0 %v440
        %3412 = vmatpush1.msra.mxu0 %v439
        %3413 = vmatprep.subr.mxu0 %v444
        %3414 = vmatpush1.msra.mxu0 %v443
        %3415 = vmatprep.subr.mxu0 %v448
        %3416 = vmatpush1.msra.mxu0 %v447
        %3417 = vmatprep.subr.mxu0 %v452
        %3418 = vmatpush1.msra.mxu0 %v451
        %3419 = vmatprep.subr.mxu0 %v456
        %3420 = vmatpush1.msra.mxu0 %v455
        %3421 = vmatprep.subr.mxu0 %v460
        %3422 = vmatpush1.msra.mxu0 %v459
        %3423 = vmatprep.subr.mxu0 %v464
        %3424 = vmatpush1.msra.mxu0 %v463
        %3425 = vmatprep.subr.mxu0 %v468
        %3426 = vmatpush1.msra.mxu0 %v467
        %3427 = vmatprep.subr.mxu0 %v472
        %3428 = vmatpush1.msra.mxu0 %v471
        %3429 = vmatprep.subr.mxu0 %v476
        %3430 = vmatpush1.msra.mxu0 %v475
        %3431 = vmatprep.subr.mxu0 %v480
        %3432 = vmatpush1.msra.mxu0 %v479
        %3433 = vmatprep.subr.mxu0 %v484
        %3434 = vmatpush1.msra.mxu0 %v483
        %3435 = vmatprep.subr.mxu0 %v488
        %3436 = vmatpush1.msra.mxu0 %v487
        %3437 = vmatprep.subr.mxu0 %v492
        %3438 = vmatpush1.msra.mxu0 %v491
        %3439 = vmatprep.subr.mxu0 %v496
        %3440 = vmatpush1.msra.mxu0 %v495
        %3441 = vmatprep.subr.mxu0 0.0
        %3442 = vmatpush1.msra.mxu0 0.0
        %3443 = vmatprep.subr.mxu0 0.0
        %3444 = vmatpush1.msra.mxu0 0.0
        %3445 = vmatprep.subr.mxu0 0.0
        %3446 = vmatpush1.msra.mxu0 0.0
        %3447 = vmatprep.subr.mxu0 0.0
        %3448 = vmatpush1.msra.mxu0 0.0
        %3449 = vmatprep.subr.mxu0 0.0
        %3450 = vmatpush1.msra.mxu0 0.0
        %3451 = vmatprep.subr.mxu0 0.0
        %3452 = vmatpush1.msra.mxu0 0.0
        %3453 = vmatprep.subr.mxu0 0.0
        %3454 = vmatpush1.msra.mxu0 0.0
        %3455 = vmatprep.subr.mxu0 0.0
        %3456 = vmatpush1.msra.mxu0 0.0
        %3457 = vmatprep.subr.mxu0 0.0
        %3458 = vmatpush1.msra.mxu0 0.0
        %3459 = vmatprep.subr.mxu0 0.0
        %3460 = vmatpush1.msra.mxu0 0.0
        %3461 = vmatprep.subr.mxu0 0.0
        %3462 = vmatpush1.msra.mxu0 0.0
        %3463 = vmatprep.subr.mxu0 0.0
        %3464 = vmatpush1.msra.mxu0 0.0
        %3465 = vmatprep.subr.mxu0 0.0
        %3466 = vmatpush1.msra.mxu0 0.0
        %3467 = vmatprep.subr.mxu0 0.0
        %3468 = vmatpush1.msra.mxu0 0.0
        %3469 = vmatprep.subr.mxu0 0.0
        %3470 = vmatpush1.msra.mxu0 0.0
        %3471 = vmatprep.subr.mxu0 0.0
        %3472 = vmatpush1.msra.mxu0 0.0
        %3473 = vmatprep.mubr.f32.mxu0 0.0
        %3474 = vmatmul.mubr.f32.gmra.mrb[0].mxu0 %v3337
        %v3475 = vpop.f32.mrb[0].mxu0
        %v3476 = vadd.f32 %v3159, %v3475
        %v3477 = vpop.f32.mrb[0].mxu0
        %v3478 = vadd.f32 %v3161, %v3477
        %3479 = vdwg.mxu0
        %v3480 = vadd.f32 %v3405, %v566
        %v3481 = vadd.f32 %v3407, %v570
        %v3482 = vadd.f32 %v3476, %v574
        %v3483 = vadd.f32 %v3478, %v578
        %v3484 = vxor.u32 %v3480, 2147483648
        %v3485 = vmul.f32 %v3484, 1.442695
        %v3486 = vpow.pop %v3485
        %v3487 = vadd.f32 %v3486, 1.0
        %v3488 = vrcp.pop %v3487
        %v3489 = vmul.f32 1.0, %v3488
        %v3490 = vxor.u32 %v3481, 2147483648
        %v3491 = vmul.f32 %v3490, 1.442695
        %v3492 = vpow.pop %v3491
        %v3493 = vadd.f32 %v3492, 1.0
        %v3494 = vrcp.pop %v3493
        %v3495 = vmul.f32 1.0, %v3494
        %v3496 = vtanh.pop %v3482
        %v3497 = vxor.u32 %v3483, 2147483648
        %v3498 = vmul.f32 %v3497, 1.442695
        %v3499 = vpow.pop %v3498
        %v3500 = vadd.f32 %v3499, 1.0
        %v3501 = vrcp.pop %v3500
        %v3502 = vmul.f32 1.0, %v3501
        %v3503 = vmul.f32 %v3495, %v3018
        %v3504 = vmul.f32 %v3489, %v3496
        %v3505 = vadd.f32 %v3503, %v3504
        %v3506 = vtanh.pop %v3505
        %v3507 = vmul.f32 %v3502, %v3506
        %3508 = vmatprep.subr.mxu0 %v498
        %3509 = vmatpush1.msra.mxu0 %v497
        %3510 = vmatprep.subr.mxu0 %v502
        %3511 = vmatpush1.msra.mxu0 %v501
        %3512 = vmatprep.subr.mxu0 %v506
        %3513 = vmatpush1.msra.mxu0 %v505
        %3514 = vmatprep.subr.mxu0 %v510
        %3515 = vmatpush1.msra.mxu0 %v509
        %3516 = vmatprep.subr.mxu0 %v514
        %3517 = vmatpush1.msra.mxu0 %v513
        %3518 = vmatprep.subr.mxu0 %v518
        %3519 = vmatpush1.msra.mxu0 %v517
        %3520 = vmatprep.subr.mxu0 %v522
        %3521 = vmatpush1.msra.mxu0 %v521
        %3522 = vmatprep.subr.mxu0 %v526
        %3523 = vmatpush1.msra.mxu0 %v525
        %3524 = vmatprep.subr.mxu0 %v530
        %3525 = vmatpush1.msra.mxu0 %v529
        %3526 = vmatprep.subr.mxu0 %v534
        %3527 = vmatpush1.msra.mxu0 %v533
        %3528 = vmatprep.subr.mxu0 %v538
        %3529 = vmatpush1.msra.mxu0 %v537
        %3530 = vmatprep.subr.mxu0 %v542
        %3531 = vmatpush1.msra.mxu0 %v541
        %3532 = vmatprep.subr.mxu0 %v546
        %3533 = vmatpush1.msra.mxu0 %v545
        %3534 = vmatprep.subr.mxu0 %v550
        %3535 = vmatpush1.msra.mxu0 %v549
        %3536 = vmatprep.subr.mxu0 %v554
        %3537 = vmatpush1.msra.mxu0 %v553
        %3538 = vmatprep.subr.mxu0 %v558
        %3539 = vmatpush1.msra.mxu0 %v557
        %3540 = vmatprep.subr.mxu0 0.0
        %3541 = vmatpush1.msra.mxu0 0.0
        %3542 = vmatprep.subr.mxu0 0.0
        %3543 = vmatpush1.msra.mxu0 0.0
        %3544 = vmatprep.subr.mxu0 0.0
        %3545 = vmatpush1.msra.mxu0 0.0
        %3546 = vmatprep.subr.mxu0 0.0
        %3547 = vmatpush1.msra.mxu0 0.0
        %3548 = vmatprep.subr.mxu0 0.0
        %3549 = vmatpush1.msra.mxu0 0.0
        %3550 = vmatprep.subr.mxu0 0.0
        %3551 = vmatpush1.msra.mxu0 0.0
        %3552 = vmatprep.subr.mxu0 0.0
        %3553 = vmatpush1.msra.mxu0 0.0
        %3554 = vmatprep.subr.mxu0 0.0
        %3555 = vmatpush1.msra.mxu0 0.0
        %3556 = vmatprep.subr.mxu0 0.0
        %3557 = vmatpush1.msra.mxu0 0.0
        %3558 = vmatprep.subr.mxu0 0.0
        %3559 = vmatpush1.msra.mxu0 0.0
        %3560 = vmatprep.subr.mxu0 0.0
        %3561 = vmatpush1.msra.mxu0 0.0
        %3562 = vmatprep.subr.mxu0 0.0
        %3563 = vmatpush1.msra.mxu0 0.0
        %3564 = vmatprep.subr.mxu0 0.0
        %3565 = vmatpush1.msra.mxu0 0.0
        %3566 = vmatprep.subr.mxu0 0.0
        %3567 = vmatpush1.msra.mxu0 0.0
        %3568 = vmatprep.subr.mxu0 0.0
        %3569 = vmatpush1.msra.mxu0 0.0
        %3570 = vmatprep.subr.mxu0 0.0
        %3571 = vmatpush1.msra.mxu0 0.0
        %3572 = vmatprep.mubr.f32.mxu0 0.0
        %3573 = vmatmul.mubr.f32.gmra.mrb[0].mxu0 %v3507
        %v3574 = vpop.f32.mrb[0].mxu0
        %v3575 = vadd.f32 0.0, %v3574
        %v3576 = vpop.f32.mrb[0].mxu0
        %v3577 = vadd.f32 0.0, %v3576
        %3578 = vdwg.mxu0
        %3579 = vmatprep.subr.mxu0 %v500
        %3580 = vmatpush1.msra.mxu0 %v499
        %3581 = vmatprep.subr.mxu0 %v504
        %3582 = vmatpush1.msra.mxu0 %v503
        %3583 = vmatprep.subr.mxu0 %v508
        %3584 = vmatpush1.msra.mxu0 %v507
        %3585 = vmatprep.subr.mxu0 %v512
        %3586 = vmatpush1.msra.mxu0 %v511
        %3587 = vmatprep.subr.mxu0 %v516
        %3588 = vmatpush1.msra.mxu0 %v515
        %3589 = vmatprep.subr.mxu0 %v520
        %3590 = vmatpush1.msra.mxu0 %v519
        %3591 = vmatprep.subr.mxu0 %v524
        %3592 = vmatpush1.msra.mxu0 %v523
        %3593 = vmatprep.subr.mxu0 %v528
        %3594 = vmatpush1.msra.mxu0 %v527
        %3595 = vmatprep.subr.mxu0 %v532
        %3596 = vmatpush1.msra.mxu0 %v531
        %3597 = vmatprep.subr.mxu0 %v536
        %3598 = vmatpush1.msra.mxu0 %v535
        %3599 = vmatprep.subr.mxu0 %v540
        %3600 = vmatpush1.msra.mxu0 %v539
        %3601 = vmatprep.subr.mxu0 %v544
        %3602 = vmatpush1.msra.mxu0 %v543
        %3603 = vmatprep.subr.mxu0 %v548
        %3604 = vmatpush1.msra.mxu0 %v547
        %3605 = vmatprep.subr.mxu0 %v552
        %3606 = vmatpush1.msra.mxu0 %v551
        %3607 = vmatprep.subr.mxu0 %v556
        %3608 = vmatpush1.msra.mxu0 %v555
        %3609 = vmatprep.subr.mxu0 %v560
        %3610 = vmatpush1.msra.mxu0 %v559
        %3611 = vmatprep.subr.mxu0 0.0
        %3612 = vmatpush1.msra.mxu0 0.0
        %3613 = vmatprep.subr.mxu0 0.0
        %3614 = vmatpush1.msra.mxu0 0.0
        %3615 = vmatprep.subr.mxu0 0.0
        %3616 = vmatpush1.msra.mxu0 0.0
        %3617 = vmatprep.subr.mxu0 0.0
        %3618 = vmatpush1.msra.mxu0 0.0
        %3619 = vmatprep.subr.mxu0 0.0
        %3620 = vmatpush1.msra.mxu0 0.0
        %3621 = vmatprep.subr.mxu0 0.0
        %3622 = vmatpush1.msra.mxu0 0.0
        %3623 = vmatprep.subr.mxu0 0.0
        %3624 = vmatpush1.msra.mxu0 0.0
        %3625 = vmatprep.subr.mxu0 0.0
        %3626 = vmatpush1.msra.mxu0 0.0
        %3627 = vmatprep.subr.mxu0 0.0
        %3628 = vmatpush1.msra.mxu0 0.0
        %3629 = vmatprep.subr.mxu0 0.0
        %3630 = vmatpush1.msra.mxu0 0.0
        %3631 = vmatprep.subr.mxu0 0.0
        %3632 = vmatpush1.msra.mxu0 0.0
        %3633 = vmatprep.subr.mxu0 0.0
        %3634 = vmatpush1.msra.mxu0 0.0
        %3635 = vmatprep.subr.mxu0 0.0
        %3636 = vmatpush1.msra.mxu0 0.0
        %3637 = vmatprep.subr.mxu0 0.0
        %3638 = vmatpush1.msra.mxu0 0.0
        %3639 = vmatprep.subr.mxu0 0.0
        %3640 = vmatpush1.msra.mxu0 0.0
        %3641 = vmatprep.subr.mxu0 0.0
        %3642 = vmatpush1.msra.mxu0 0.0
        %3643 = vmatprep.mubr.f32.mxu0 0.0
        %3644 = vmatmul.mubr.f32.gmra.mrb[0].mxu0 %v3507
        %v3645 = vpop.f32.mrb[0].mxu0
        %v3646 = vadd.f32 0.0, %v3645
        %v3647 = vpop.f32.mrb[0].mxu0
        %v3648 = vadd.f32 0.0, %v3647
        %3649 = vdwg.mxu0
        %s3650 = scalar_lea.vmem %s314, 192 [#allocation7]
        %v3651 = vld [vmem:[%s3650] sm:$0xff]
        %v3652 = vld [vmem:[%s3650 + $0x8] sm:$0xff]
        %v3653 = vld [vmem:[%s3650 + $0x10] sm:$0xff]
        %v3654 = vld [vmem:[%s3650 + $0x18] sm:$0xff]
        %3655 = vmatprep.subr.mxu0 %v370
        %3656 = vmatpush1.msra.mxu0 %v369
        %3657 = vmatprep.subr.mxu0 %v374
        %3658 = vmatpush1.msra.mxu0 %v373
        %3659 = vmatprep.subr.mxu0 %v378
        %3660 = vmatpush1.msra.mxu0 %v377
        %3661 = vmatprep.subr.mxu0 %v382
        %3662 = vmatpush1.msra.mxu0 %v381
        %3663 = vmatprep.subr.mxu0 %v386
        %3664 = vmatpush1.msra.mxu0 %v385
        %3665 = vmatprep.subr.mxu0 %v390
        %3666 = vmatpush1.msra.mxu0 %v389
        %3667 = vmatprep.subr.mxu0 %v394
        %3668 = vmatpush1.msra.mxu0 %v393
        %3669 = vmatprep.subr.mxu0 %v398
        %3670 = vmatpush1.msra.mxu0 %v397
        %3671 = vmatprep.subr.mxu0 %v402
        %3672 = vmatpush1.msra.mxu0 %v401
        %3673 = vmatprep.subr.mxu0 %v406
        %3674 = vmatpush1.msra.mxu0 %v405
        %3675 = vmatprep.subr.mxu0 %v410
        %3676 = vmatpush1.msra.mxu0 %v409
        %3677 = vmatprep.subr.mxu0 %v414
        %3678 = vmatpush1.msra.mxu0 %v413
        %3679 = vmatprep.subr.mxu0 %v418
        %3680 = vmatpush1.msra.mxu0 %v417
        %3681 = vmatprep.subr.mxu0 %v422
        %3682 = vmatpush1.msra.mxu0 %v421
        %3683 = vmatprep.subr.mxu0 %v426
        %3684 = vmatpush1.msra.mxu0 %v425
        %3685 = vmatprep.subr.mxu0 %v430
        %3686 = vmatpush1.msra.mxu0 %v429
        %3687 = vmatprep.subr.mxu0 0.0
        %3688 = vmatpush1.msra.mxu0 0.0
        %3689 = vmatprep.subr.mxu0 0.0
        %3690 = vmatpush1.msra.mxu0 0.0
        %3691 = vmatprep.subr.mxu0 0.0
        %3692 = vmatpush1.msra.mxu0 0.0
        %3693 = vmatprep.subr.mxu0 0.0
        %3694 = vmatpush1.msra.mxu0 0.0
        %3695 = vmatprep.subr.mxu0 0.0
        %3696 = vmatpush1.msra.mxu0 0.0
        %3697 = vmatprep.subr.mxu0 0.0
        %3698 = vmatpush1.msra.mxu0 0.0
        %3699 = vmatprep.subr.mxu0 0.0
        %3700 = vmatpush1.msra.mxu0 0.0
        %3701 = vmatprep.subr.mxu0 0.0
        %3702 = vmatpush1.msra.mxu0 0.0
        %3703 = vmatprep.subr.mxu0 0.0
        %3704 = vmatpush1.msra.mxu0 0.0
        %3705 = vmatprep.subr.mxu0 0.0
        %3706 = vmatpush1.msra.mxu0 0.0
        %3707 = vmatprep.subr.mxu0 0.0
        %3708 = vmatpush1.msra.mxu0 0.0
        %3709 = vmatprep.subr.mxu0 0.0
        %3710 = vmatpush1.msra.mxu0 0.0
        %3711 = vmatprep.subr.mxu0 0.0
        %3712 = vmatpush1.msra.mxu0 0.0
        %3713 = vmatprep.subr.mxu0 0.0
        %3714 = vmatpush1.msra.mxu0 0.0
        %3715 = vmatprep.subr.mxu0 0.0
        %3716 = vmatpush1.msra.mxu0 0.0
        %3717 = vmatprep.subr.mxu0 0.0
        %3718 = vmatpush1.msra.mxu0 0.0
        %3719 = vmatprep.mubr.f32.mxu0 0.0
        %3720 = vmatmul.mubr.f32.gmra.mrb[0].mxu0 %v3337
        %v3721 = vpop.f32.mrb[0].mxu0
        %v3722 = vadd.f32 0.0, %v3721
        %v3723 = vpop.f32.mrb[0].mxu0
        %v3724 = vadd.f32 0.0, %v3723
        %3725 = vdwg.mxu0
        %3726 = vmatprep.subr.mxu0 %v372
        %3727 = vmatpush1.msra.mxu0 %v371
        %3728 = vmatprep.subr.mxu0 %v376
        %3729 = vmatpush1.msra.mxu0 %v375
        %3730 = vmatprep.subr.mxu0 %v380
        %3731 = vmatpush1.msra.mxu0 %v379
        %3732 = vmatprep.subr.mxu0 %v384
        %3733 = vmatpush1.msra.mxu0 %v383
        %3734 = vmatprep.subr.mxu0 %v388
        %3735 = vmatpush1.msra.mxu0 %v387
        %3736 = vmatprep.subr.mxu0 %v392
        %3737 = vmatpush1.msra.mxu0 %v391
        %3738 = vmatprep.subr.mxu0 %v396
        %3739 = vmatpush1.msra.mxu0 %v395
        %3740 = vmatprep.subr.mxu0 %v400
        %3741 = vmatpush1.msra.mxu0 %v399
        %3742 = vmatprep.subr.mxu0 %v404
        %3743 = vmatpush1.msra.mxu0 %v403
        %3744 = vmatprep.subr.mxu0 %v408
        %3745 = vmatpush1.msra.mxu0 %v407
        %3746 = vmatprep.subr.mxu0 %v412
        %3747 = vmatpush1.msra.mxu0 %v411
        %3748 = vmatprep.subr.mxu0 %v416
        %3749 = vmatpush1.msra.mxu0 %v415
        %3750 = vmatprep.subr.mxu0 %v420
        %3751 = vmatpush1.msra.mxu0 %v419
        %3752 = vmatprep.subr.mxu0 %v424
        %3753 = vmatpush1.msra.mxu0 %v423
        %3754 = vmatprep.subr.mxu0 %v428
        %3755 = vmatpush1.msra.mxu0 %v427
        %3756 = vmatprep.subr.mxu0 %v432
        %3757 = vmatpush1.msra.mxu0 %v431
        %3758 = vmatprep.subr.mxu0 0.0
        %3759 = vmatpush1.msra.mxu0 0.0
        %3760 = vmatprep.subr.mxu0 0.0
        %3761 = vmatpush1.msra.mxu0 0.0
        %3762 = vmatprep.subr.mxu0 0.0
        %3763 = vmatpush1.msra.mxu0 0.0
        %3764 = vmatprep.subr.mxu0 0.0
        %3765 = vmatpush1.msra.mxu0 0.0
        %3766 = vmatprep.subr.mxu0 0.0
        %3767 = vmatpush1.msra.mxu0 0.0
        %3768 = vmatprep.subr.mxu0 0.0
        %3769 = vmatpush1.msra.mxu0 0.0
        %3770 = vmatprep.subr.mxu0 0.0
        %3771 = vmatpush1.msra.mxu0 0.0
        %3772 = vmatprep.subr.mxu0 0.0
        %3773 = vmatpush1.msra.mxu0 0.0
        %3774 = vmatprep.subr.mxu0 0.0
        %3775 = vmatpush1.msra.mxu0 0.0
        %3776 = vmatprep.subr.mxu0 0.0
        %3777 = vmatpush1.msra.mxu0 0.0
        %3778 = vmatprep.subr.mxu0 0.0
        %3779 = vmatpush1.msra.mxu0 0.0
        %3780 = vmatprep.subr.mxu0 0.0
        %3781 = vmatpush1.msra.mxu0 0.0
        %3782 = vmatprep.subr.mxu0 0.0
        %3783 = vmatpush1.msra.mxu0 0.0
        %3784 = vmatprep.subr.mxu0 0.0
        %3785 = vmatpush1.msra.mxu0 0.0
        %3786 = vmatprep.subr.mxu0 0.0
        %3787 = vmatpush1.msra.mxu0 0.0
        %3788 = vmatprep.subr.mxu0 0.0
        %3789 = vmatpush1.msra.mxu0 0.0
        %3790 = vmatprep.mubr.f32.mxu0 0.0
        %3791 = vmatmul.mubr.f32.gmra.mrb[0].mxu0 %v3337
        %v3792 = vpop.f32.mrb[0].mxu0
        %v3793 = vadd.f32 0.0, %v3792
        %v3794 = vpop.f32.mrb[0].mxu0
        %v3795 = vadd.f32 0.0, %v3794
        %3796 = vdwg.mxu0
        %v3797 = vadd.f32 %v3651, %v3722
        %v3798 = vadd.f32 %v3652, %v3724
        %v3799 = vadd.f32 %v3653, %v3793
        %v3800 = vadd.f32 %v3654, %v3795
        %v3801 = vxor.u32 %v3797, 2147483648
        %v3802 = vmul.f32 %v3801, 1.442695
        %v3803 = vpow.pop %v3802
        %v3804 = vadd.f32 %v3803, 1.0
        %v3805 = vrcp.pop %v3804
        %v3806 = vmul.f32 1.0, %v3805
        %v3807 = vxor.u32 %v3798, 2147483648
        %v3808 = vmul.f32 %v3807, 1.442695
        %v3809 = vpow.pop %v3808
        %v3810 = vadd.f32 %v3809, 1.0
        %v3811 = vrcp.pop %v3810
        %v3812 = vmul.f32 1.0, %v3811
        %v3813 = vtanh.pop %v3799
        %v3814 = vxor.u32 %v3800, 2147483648
        %v3815 = vmul.f32 %v3814, 1.442695
        %v3816 = vpow.pop %v3815
        %v3817 = vadd.f32 %v3816, 1.0
        %v3818 = vrcp.pop %v3817
        %v3819 = vmul.f32 1.0, %v3818
        %v3820 = vmul.f32 %v3812, %v3335
        %v3821 = vmul.f32 %v3806, %v3813
        %v3822 = vadd.f32 %v3820, %v3821
        %v3823 = vtanh.pop %v3822
        %v3824 = vmul.f32 %v3819, %v3823
        %3825 = vmatprep.subr.mxu0 %v434
        %3826 = vmatpush1.msra.mxu0 %v433
        %3827 = vmatprep.subr.mxu0 %v438
        %3828 = vmatpush1.msra.mxu0 %v437
        %3829 = vmatprep.subr.mxu0 %v442
        %3830 = vmatpush1.msra.mxu0 %v441
        %3831 = vmatprep.subr.mxu0 %v446
        %3832 = vmatpush1.msra.mxu0 %v445
        %3833 = vmatprep.subr.mxu0 %v450
        %3834 = vmatpush1.msra.mxu0 %v449
        %3835 = vmatprep.subr.mxu0 %v454
        %3836 = vmatpush1.msra.mxu0 %v453
        %3837 = vmatprep.subr.mxu0 %v458
        %3838 = vmatpush1.msra.mxu0 %v457
        %3839 = vmatprep.subr.mxu0 %v462
        %3840 = vmatpush1.msra.mxu0 %v461
        %3841 = vmatprep.subr.mxu0 %v466
        %3842 = vmatpush1.msra.mxu0 %v465
        %3843 = vmatprep.subr.mxu0 %v470
        %3844 = vmatpush1.msra.mxu0 %v469
        %3845 = vmatprep.subr.mxu0 %v474
        %3846 = vmatpush1.msra.mxu0 %v473
        %3847 = vmatprep.subr.mxu0 %v478
        %3848 = vmatpush1.msra.mxu0 %v477
        %3849 = vmatprep.subr.mxu0 %v482
        %3850 = vmatpush1.msra.mxu0 %v481
        %3851 = vmatprep.subr.mxu0 %v486
        %3852 = vmatpush1.msra.mxu0 %v485
        %3853 = vmatprep.subr.mxu0 %v490
        %3854 = vmatpush1.msra.mxu0 %v489
        %3855 = vmatprep.subr.mxu0 %v494
        %3856 = vmatpush1.msra.mxu0 %v493
        %3857 = vmatprep.subr.mxu0 0.0
        %3858 = vmatpush1.msra.mxu0 0.0
        %3859 = vmatprep.subr.mxu0 0.0
        %3860 = vmatpush1.msra.mxu0 0.0
        %3861 = vmatprep.subr.mxu0 0.0
        %3862 = vmatpush1.msra.mxu0 0.0
        %3863 = vmatprep.subr.mxu0 0.0
        %3864 = vmatpush1.msra.mxu0 0.0
        %3865 = vmatprep.subr.mxu0 0.0
        %3866 = vmatpush1.msra.mxu0 0.0
        %3867 = vmatprep.subr.mxu0 0.0
        %3868 = vmatpush1.msra.mxu0 0.0
        %3869 = vmatprep.subr.mxu0 0.0
        %3870 = vmatpush1.msra.mxu0 0.0
        %3871 = vmatprep.subr.mxu0 0.0
        %3872 = vmatpush1.msra.mxu0 0.0
        %3873 = vmatprep.subr.mxu0 0.0
        %3874 = vmatpush1.msra.mxu0 0.0
        %3875 = vmatprep.subr.mxu0 0.0
        %3876 = vmatpush1.msra.mxu0 0.0
        %3877 = vmatprep.subr.mxu0 0.0
        %3878 = vmatpush1.msra.mxu0 0.0
        %3879 = vmatprep.subr.mxu0 0.0
        %3880 = vmatpush1.msra.mxu0 0.0
        %3881 = vmatprep.subr.mxu0 0.0
        %3882 = vmatpush1.msra.mxu0 0.0
        %3883 = vmatprep.subr.mxu0 0.0
        %3884 = vmatpush1.msra.mxu0 0.0
        %3885 = vmatprep.subr.mxu0 0.0
        %3886 = vmatpush1.msra.mxu0 0.0
        %3887 = vmatprep.subr.mxu0 0.0
        %3888 = vmatpush1.msra.mxu0 0.0
        %3889 = vmatprep.mubr.f32.mxu0 0.0
        %3890 = vmatmul.mubr.f32.gmra.mrb[0].mxu0 %v3824
        %v3891 = vpop.f32.mrb[0].mxu0
        %v3892 = vadd.f32 %v3575, %v3891
        %v3893 = vpop.f32.mrb[0].mxu0
        %v3894 = vadd.f32 %v3577, %v3893
        %3895 = vdwg.mxu0
        %3896 = vmatprep.subr.mxu0 %v436
        %3897 = vmatpush1.msra.mxu0 %v435
        %3898 = vmatprep.subr.mxu0 %v440
        %3899 = vmatpush1.msra.mxu0 %v439
        %3900 = vmatprep.subr.mxu0 %v444
        %3901 = vmatpush1.msra.mxu0 %v443
        %3902 = vmatprep.subr.mxu0 %v448
        %3903 = vmatpush1.msra.mxu0 %v447
        %3904 = vmatprep.subr.mxu0 %v452
        %3905 = vmatpush1.msra.mxu0 %v451
        %3906 = vmatprep.subr.mxu0 %v456
        %3907 = vmatpush1.msra.mxu0 %v455
        %3908 = vmatprep.subr.mxu0 %v460
        %3909 = vmatpush1.msra.mxu0 %v459
        %3910 = vmatprep.subr.mxu0 %v464
        %3911 = vmatpush1.msra.mxu0 %v463
        %3912 = vmatprep.subr.mxu0 %v468
        %3913 = vmatpush1.msra.mxu0 %v467
        %3914 = vmatprep.subr.mxu0 %v472
        %3915 = vmatpush1.msra.mxu0 %v471
        %3916 = vmatprep.subr.mxu0 %v476
        %3917 = vmatpush1.msra.mxu0 %v475
        %3918 = vmatprep.subr.mxu0 %v480
        %3919 = vmatpush1.msra.mxu0 %v479
        %3920 = vmatprep.subr.mxu0 %v484
        %3921 = vmatpush1.msra.mxu0 %v483
        %3922 = vmatprep.subr.mxu0 %v488
        %3923 = vmatpush1.msra.mxu0 %v487
        %3924 = vmatprep.subr.mxu0 %v492
        %3925 = vmatpush1.msra.mxu0 %v491
        %3926 = vmatprep.subr.mxu0 %v496
        %3927 = vmatpush1.msra.mxu0 %v495
        %3928 = vmatprep.subr.mxu0 0.0
        %3929 = vmatpush1.msra.mxu0 0.0
        %3930 = vmatprep.subr.mxu0 0.0
        %3931 = vmatpush1.msra.mxu0 0.0
        %3932 = vmatprep.subr.mxu0 0.0
        %3933 = vmatpush1.msra.mxu0 0.0
        %3934 = vmatprep.subr.mxu0 0.0
        %3935 = vmatpush1.msra.mxu0 0.0
        %3936 = vmatprep.subr.mxu0 0.0
        %3937 = vmatpush1.msra.mxu0 0.0
        %3938 = vmatprep.subr.mxu0 0.0
        %3939 = vmatpush1.msra.mxu0 0.0
        %3940 = vmatprep.subr.mxu0 0.0
        %3941 = vmatpush1.msra.mxu0 0.0
        %3942 = vmatprep.subr.mxu0 0.0
        %3943 = vmatpush1.msra.mxu0 0.0
        %3944 = vmatprep.subr.mxu0 0.0
        %3945 = vmatpush1.msra.mxu0 0.0
        %3946 = vmatprep.subr.mxu0 0.0
        %3947 = vmatpush1.msra.mxu0 0.0
        %3948 = vmatprep.subr.mxu0 0.0
        %3949 = vmatpush1.msra.mxu0 0.0
        %3950 = vmatprep.subr.mxu0 0.0
        %3951 = vmatpush1.msra.mxu0 0.0
        %3952 = vmatprep.subr.mxu0 0.0
        %3953 = vmatpush1.msra.mxu0 0.0
        %3954 = vmatprep.subr.mxu0 0.0
        %3955 = vmatpush1.msra.mxu0 0.0
        %3956 = vmatprep.subr.mxu0 0.0
        %3957 = vmatpush1.msra.mxu0 0.0
        %3958 = vmatprep.subr.mxu0 0.0
        %3959 = vmatpush1.msra.mxu0 0.0
        %3960 = vmatprep.mubr.f32.mxu0 0.0
        %3961 = vmatmul.mubr.f32.gmra.mrb[0].mxu0 %v3824
        %v3962 = vpop.f32.mrb[0].mxu0
        %v3963 = vadd.f32 %v3646, %v3962
        %v3964 = vpop.f32.mrb[0].mxu0
        %v3965 = vadd.f32 %v3648, %v3964
        %3966 = vdwg.mxu0
        %v3967 = vadd.f32 %v3892, %v566
        %v3968 = vadd.f32 %v3894, %v570
        %v3969 = vadd.f32 %v3963, %v574
        %v3970 = vadd.f32 %v3965, %v578
        %v3971 = vxor.u32 %v3967, 2147483648
        %v3972 = vmul.f32 %v3971, 1.442695
        %v3973 = vpow.pop %v3972
        %v3974 = vadd.f32 %v3973, 1.0
        %v3975 = vrcp.pop %v3974
        %v3976 = vmul.f32 1.0, %v3975
        %v3977 = vxor.u32 %v3968, 2147483648
        %v3978 = vmul.f32 %v3977, 1.442695
        %v3979 = vpow.pop %v3978
        %v3980 = vadd.f32 %v3979, 1.0
        %v3981 = vrcp.pop %v3980
        %v3982 = vmul.f32 1.0, %v3981
        %v3983 = vtanh.pop %v3969
        %v3984 = vxor.u32 %v3970, 2147483648
        %v3985 = vmul.f32 %v3984, 1.442695
        %v3986 = vpow.pop %v3985
        %v3987 = vadd.f32 %v3986, 1.0
        %v3988 = vrcp.pop %v3987
        %v3989 = vmul.f32 1.0, %v3988
        %v3990 = vmul.f32 %v3982, %v3505
        %v3991 = vmul.f32 %v3976, %v3983
        %v3992 = vadd.f32 %v3990, %v3991
        %v3993 = vtanh.pop %v3992
        %v3994 = vmul.f32 %v3989, %v3993
        %3995 = vmatprep.subr.mxu0 %v498
        %3996 = vmatpush1.msra.mxu0 %v497
        %3997 = vmatprep.subr.mxu0 %v502
        %3998 = vmatpush1.msra.mxu0 %v501
        %3999 = vmatprep.subr.mxu0 %v506
        %4000 = vmatpush1.msra.mxu0 %v505
        %4001 = vmatprep.subr.mxu0 %v510
        %4002 = vmatpush1.msra.mxu0 %v509
        %4003 = vmatprep.subr.mxu0 %v514
        %4004 = vmatpush1.msra.mxu0 %v513
        %4005 = vmatprep.subr.mxu0 %v518
        %4006 = vmatpush1.msra.mxu0 %v517
        %4007 = vmatprep.subr.mxu0 %v522
        %4008 = vmatpush1.msra.mxu0 %v521
        %4009 = vmatprep.subr.mxu0 %v526
        %4010 = vmatpush1.msra.mxu0 %v525
        %4011 = vmatprep.subr.mxu0 %v530
        %4012 = vmatpush1.msra.mxu0 %v529
        %4013 = vmatprep.subr.mxu0 %v534
        %4014 = vmatpush1.msra.mxu0 %v533
        %4015 = vmatprep.subr.mxu0 %v538
        %4016 = vmatpush1.msra.mxu0 %v537
        %4017 = vmatprep.subr.mxu0 %v542
        %4018 = vmatpush1.msra.mxu0 %v541
        %4019 = vmatprep.subr.mxu0 %v546
        %4020 = vmatpush1.msra.mxu0 %v545
        %4021 = vmatprep.subr.mxu0 %v550
        %4022 = vmatpush1.msra.mxu0 %v549
        %4023 = vmatprep.subr.mxu0 %v554
        %4024 = vmatpush1.msra.mxu0 %v553
        %4025 = vmatprep.subr.mxu0 %v558
        %4026 = vmatpush1.msra.mxu0 %v557
        %4027 = vmatprep.subr.mxu0 0.0
        %4028 = vmatpush1.msra.mxu0 0.0
        %4029 = vmatprep.subr.mxu0 0.0
        %4030 = vmatpush1.msra.mxu0 0.0
        %4031 = vmatprep.subr.mxu0 0.0
        %4032 = vmatpush1.msra.mxu0 0.0
        %4033 = vmatprep.subr.mxu0 0.0
        %4034 = vmatpush1.msra.mxu0 0.0
        %4035 = vmatprep.subr.mxu0 0.0
        %4036 = vmatpush1.msra.mxu0 0.0
        %4037 = vmatprep.subr.mxu0 0.0
        %4038 = vmatpush1.msra.mxu0 0.0
        %4039 = vmatprep.subr.mxu0 0.0
        %4040 = vmatpush1.msra.mxu0 0.0
        %4041 = vmatprep.subr.mxu0 0.0
        %4042 = vmatpush1.msra.mxu0 0.0
        %4043 = vmatprep.subr.mxu0 0.0
        %4044 = vmatpush1.msra.mxu0 0.0
        %4045 = vmatprep.subr.mxu0 0.0
        %4046 = vmatpush1.msra.mxu0 0.0
        %4047 = vmatprep.subr.mxu0 0.0
        %4048 = vmatpush1.msra.mxu0 0.0
        %4049 = vmatprep.subr.mxu0 0.0
        %4050 = vmatpush1.msra.mxu0 0.0
        %4051 = vmatprep.subr.mxu0 0.0
        %4052 = vmatpush1.msra.mxu0 0.0
        %4053 = vmatprep.subr.mxu0 0.0
        %4054 = vmatpush1.msra.mxu0 0.0
        %4055 = vmatprep.subr.mxu0 0.0
        %4056 = vmatpush1.msra.mxu0 0.0
        %4057 = vmatprep.subr.mxu0 0.0
        %4058 = vmatpush1.msra.mxu0 0.0
        %4059 = vmatprep.mubr.f32.mxu0 0.0
        %4060 = vmatmul.mubr.f32.gmra.mrb[0].mxu0 %v3994
        %v4061 = vpop.f32.mrb[0].mxu0
        %v4062 = vadd.f32 0.0, %v4061
        %v4063 = vpop.f32.mrb[0].mxu0
        %v4064 = vadd.f32 0.0, %v4063
        %4065 = vdwg.mxu0
        %4066 = vmatprep.subr.mxu0 %v500
        %4067 = vmatpush1.msra.mxu0 %v499
        %4068 = vmatprep.subr.mxu0 %v504
        %4069 = vmatpush1.msra.mxu0 %v503
        %4070 = vmatprep.subr.mxu0 %v508
        %4071 = vmatpush1.msra.mxu0 %v507
        %4072 = vmatprep.subr.mxu0 %v512
        %4073 = vmatpush1.msra.mxu0 %v511
        %4074 = vmatprep.subr.mxu0 %v516
        %4075 = vmatpush1.msra.mxu0 %v515
        %4076 = vmatprep.subr.mxu0 %v520
        %4077 = vmatpush1.msra.mxu0 %v519
        %4078 = vmatprep.subr.mxu0 %v524
        %4079 = vmatpush1.msra.mxu0 %v523
        %4080 = vmatprep.subr.mxu0 %v528
        %4081 = vmatpush1.msra.mxu0 %v527
        %4082 = vmatprep.subr.mxu0 %v532
        %4083 = vmatpush1.msra.mxu0 %v531
        %4084 = vmatprep.subr.mxu0 %v536
        %4085 = vmatpush1.msra.mxu0 %v535
        %4086 = vmatprep.subr.mxu0 %v540
        %4087 = vmatpush1.msra.mxu0 %v539
        %4088 = vmatprep.subr.mxu0 %v544
        %4089 = vmatpush1.msra.mxu0 %v543
        %4090 = vmatprep.subr.mxu0 %v548
        %4091 = vmatpush1.msra.mxu0 %v547
        %4092 = vmatprep.subr.mxu0 %v552
        %4093 = vmatpush1.msra.mxu0 %v551
        %4094 = vmatprep.subr.mxu0 %v556
        %4095 = vmatpush1.msra.mxu0 %v555
        %4096 = vmatprep.subr.mxu0 %v560
        %4097 = vmatpush1.msra.mxu0 %v559
        %4098 = vmatprep.subr.mxu0 0.0
        %4099 = vmatpush1.msra.mxu0 0.0
        %4100 = vmatprep.subr.mxu0 0.0
        %4101 = vmatpush1.msra.mxu0 0.0
        %4102 = vmatprep.subr.mxu0 0.0
        %4103 = vmatpush1.msra.mxu0 0.0
        %4104 = vmatprep.subr.mxu0 0.0
        %4105 = vmatpush1.msra.mxu0 0.0
        %4106 = vmatprep.subr.mxu0 0.0
        %4107 = vmatpush1.msra.mxu0 0.0
        %4108 = vmatprep.subr.mxu0 0.0
        %4109 = vmatpush1.msra.mxu0 0.0
        %4110 = vmatprep.subr.mxu0 0.0
        %4111 = vmatpush1.msra.mxu0 0.0
        %4112 = vmatprep.subr.mxu0 0.0
        %4113 = vmatpush1.msra.mxu0 0.0
        %4114 = vmatprep.subr.mxu0 0.0
        %4115 = vmatpush1.msra.mxu0 0.0
        %4116 = vmatprep.subr.mxu0 0.0
        %4117 = vmatpush1.msra.mxu0 0.0
        %4118 = vmatprep.subr.mxu0 0.0
        %4119 = vmatpush1.msra.mxu0 0.0
        %4120 = vmatprep.subr.mxu0 0.0
        %4121 = vmatpush1.msra.mxu0 0.0
        %4122 = vmatprep.subr.mxu0 0.0
        %4123 = vmatpush1.msra.mxu0 0.0
        %4124 = vmatprep.subr.mxu0 0.0
        %4125 = vmatpush1.msra.mxu0 0.0
        %4126 = vmatprep.subr.mxu0 0.0
        %4127 = vmatpush1.msra.mxu0 0.0
        %4128 = vmatprep.subr.mxu0 0.0
        %4129 = vmatpush1.msra.mxu0 0.0
        %4130 = vmatprep.mubr.f32.mxu0 0.0
        %4131 = vmatmul.mubr.f32.gmra.mrb[0].mxu0 %v3994
        %v4132 = vpop.f32.mrb[0].mxu0
        %v4133 = vadd.f32 0.0, %v4132
        %v4134 = vpop.f32.mrb[0].mxu0
        %v4135 = vadd.f32 0.0, %v4134
        %4136 = vdwg.mxu0
        %s4137 = scalar_lea.vmem %s314, 224 [#allocation7]
        %v4138 = vld [vmem:[%s4137] sm:$0xff]
        %v4139 = vld [vmem:[%s4137 + $0x8] sm:$0xff]
        %v4140 = vld [vmem:[%s4137 + $0x10] sm:$0xff]
        %v4141 = vld [vmem:[%s4137 + $0x18] sm:$0xff]
        %4142 = vmatprep.subr.mxu0 %v370
        %4143 = vmatpush1.msra.mxu0 %v369
        %4144 = vmatprep.subr.mxu0 %v374
        %4145 = vmatpush1.msra.mxu0 %v373
        %4146 = vmatprep.subr.mxu0 %v378
        %4147 = vmatpush1.msra.mxu0 %v377
        %4148 = vmatprep.subr.mxu0 %v382
        %4149 = vmatpush1.msra.mxu0 %v381
        %4150 = vmatprep.subr.mxu0 %v386
        %4151 = vmatpush1.msra.mxu0 %v385
        %4152 = vmatprep.subr.mxu0 %v390
        %4153 = vmatpush1.msra.mxu0 %v389
        %4154 = vmatprep.subr.mxu0 %v394
        %4155 = vmatpush1.msra.mxu0 %v393
        %4156 = vmatprep.subr.mxu0 %v398
        %4157 = vmatpush1.msra.mxu0 %v397
        %4158 = vmatprep.subr.mxu0 %v402
        %4159 = vmatpush1.msra.mxu0 %v401
        %4160 = vmatprep.subr.mxu0 %v406
        %4161 = vmatpush1.msra.mxu0 %v405
        %4162 = vmatprep.subr.mxu0 %v410
        %4163 = vmatpush1.msra.mxu0 %v409
        %4164 = vmatprep.subr.mxu0 %v414
        %4165 = vmatpush1.msra.mxu0 %v413
        %4166 = vmatprep.subr.mxu0 %v418
        %4167 = vmatpush1.msra.mxu0 %v417
        %4168 = vmatprep.subr.mxu0 %v422
        %4169 = vmatpush1.msra.mxu0 %v421
        %4170 = vmatprep.subr.mxu0 %v426
        %4171 = vmatpush1.msra.mxu0 %v425
        %4172 = vmatprep.subr.mxu0 %v430
        %4173 = vmatpush1.msra.mxu0 %v429
        %4174 = vmatprep.subr.mxu0 0.0
        %4175 = vmatpush1.msra.mxu0 0.0
        %4176 = vmatprep.subr.mxu0 0.0
        %4177 = vmatpush1.msra.mxu0 0.0
        %4178 = vmatprep.subr.mxu0 0.0
        %4179 = vmatpush1.msra.mxu0 0.0
        %4180 = vmatprep.subr.mxu0 0.0
        %4181 = vmatpush1.msra.mxu0 0.0
        %4182 = vmatprep.subr.mxu0 0.0
        %4183 = vmatpush1.msra.mxu0 0.0
        %4184 = vmatprep.subr.mxu0 0.0
        %4185 = vmatpush1.msra.mxu0 0.0
        %4186 = vmatprep.subr.mxu0 0.0
        %4187 = vmatpush1.msra.mxu0 0.0
        %4188 = vmatprep.subr.mxu0 0.0
        %4189 = vmatpush1.msra.mxu0 0.0
        %4190 = vmatprep.subr.mxu0 0.0
        %4191 = vmatpush1.msra.mxu0 0.0
        %4192 = vmatprep.subr.mxu0 0.0
        %4193 = vmatpush1.msra.mxu0 0.0
        %4194 = vmatprep.subr.mxu0 0.0
        %4195 = vmatpush1.msra.mxu0 0.0
        %4196 = vmatprep.subr.mxu0 0.0
        %4197 = vmatpush1.msra.mxu0 0.0
        %4198 = vmatprep.subr.mxu0 0.0
        %4199 = vmatpush1.msra.mxu0 0.0
        %4200 = vmatprep.subr.mxu0 0.0
        %4201 = vmatpush1.msra.mxu0 0.0
        %4202 = vmatprep.subr.mxu0 0.0
        %4203 = vmatpush1.msra.mxu0 0.0
        %4204 = vmatprep.subr.mxu0 0.0
        %4205 = vmatpush1.msra.mxu0 0.0
        %4206 = vmatprep.mubr.f32.mxu0 0.0
        %4207 = vmatmul.mubr.f32.gmra.mrb[0].mxu0 %v3824
        %v4208 = vpop.f32.mrb[0].mxu0
        %v4209 = vadd.f32 0.0, %v4208
        %v4210 = vpop.f32.mrb[0].mxu0
        %v4211 = vadd.f32 0.0, %v4210
        %4212 = vdwg.mxu0
        %4213 = vmatprep.subr.mxu0 %v372
        %4214 = vmatpush1.msra.mxu0 %v371
        %4215 = vmatprep.subr.mxu0 %v376
        %4216 = vmatpush1.msra.mxu0 %v375
        %4217 = vmatprep.subr.mxu0 %v380
        %4218 = vmatpush1.msra.mxu0 %v379
        %4219 = vmatprep.subr.mxu0 %v384
        %4220 = vmatpush1.msra.mxu0 %v383
        %4221 = vmatprep.subr.mxu0 %v388
        %4222 = vmatpush1.msra.mxu0 %v387
        %4223 = vmatprep.subr.mxu0 %v392
        %4224 = vmatpush1.msra.mxu0 %v391
        %4225 = vmatprep.subr.mxu0 %v396
        %4226 = vmatpush1.msra.mxu0 %v395
        %4227 = vmatprep.subr.mxu0 %v400
        %4228 = vmatpush1.msra.mxu0 %v399
        %4229 = vmatprep.subr.mxu0 %v404
        %4230 = vmatpush1.msra.mxu0 %v403
        %4231 = vmatprep.subr.mxu0 %v408
        %4232 = vmatpush1.msra.mxu0 %v407
        %4233 = vmatprep.subr.mxu0 %v412
        %4234 = vmatpush1.msra.mxu0 %v411
        %4235 = vmatprep.subr.mxu0 %v416
        %4236 = vmatpush1.msra.mxu0 %v415
        %4237 = vmatprep.subr.mxu0 %v420
        %4238 = vmatpush1.msra.mxu0 %v419
        %4239 = vmatprep.subr.mxu0 %v424
        %4240 = vmatpush1.msra.mxu0 %v423
        %4241 = vmatprep.subr.mxu0 %v428
        %4242 = vmatpush1.msra.mxu0 %v427
        %4243 = vmatprep.subr.mxu0 %v432
        %4244 = vmatpush1.msra.mxu0 %v431
        %4245 = vmatprep.subr.mxu0 0.0
        %4246 = vmatpush1.msra.mxu0 0.0
        %4247 = vmatprep.subr.mxu0 0.0
        %4248 = vmatpush1.msra.mxu0 0.0
        %4249 = vmatprep.subr.mxu0 0.0
        %4250 = vmatpush1.msra.mxu0 0.0
        %4251 = vmatprep.subr.mxu0 0.0
        %4252 = vmatpush1.msra.mxu0 0.0
        %4253 = vmatprep.subr.mxu0 0.0
        %4254 = vmatpush1.msra.mxu0 0.0
        %4255 = vmatprep.subr.mxu0 0.0
        %4256 = vmatpush1.msra.mxu0 0.0
        %4257 = vmatprep.subr.mxu0 0.0
        %4258 = vmatpush1.msra.mxu0 0.0
        %4259 = vmatprep.subr.mxu0 0.0
        %4260 = vmatpush1.msra.mxu0 0.0
        %4261 = vmatprep.subr.mxu0 0.0
        %4262 = vmatpush1.msra.mxu0 0.0
        %4263 = vmatprep.subr.mxu0 0.0
        %4264 = vmatpush1.msra.mxu0 0.0
        %4265 = vmatprep.subr.mxu0 0.0
        %4266 = vmatpush1.msra.mxu0 0.0
        %4267 = vmatprep.subr.mxu0 0.0
        %4268 = vmatpush1.msra.mxu0 0.0
        %4269 = vmatprep.subr.mxu0 0.0
        %4270 = vmatpush1.msra.mxu0 0.0
        %4271 = vmatprep.subr.mxu0 0.0
        %4272 = vmatpush1.msra.mxu0 0.0
        %4273 = vmatprep.subr.mxu0 0.0
        %4274 = vmatpush1.msra.mxu0 0.0
        %4275 = vmatprep.subr.mxu0 0.0
        %4276 = vmatpush1.msra.mxu0 0.0
        %4277 = vmatprep.mubr.f32.mxu0 0.0
        %4278 = vmatmul.mubr.f32.gmra.mrb[0].mxu0 %v3824
        %v4279 = vpop.f32.mrb[0].mxu0
        %v4280 = vadd.f32 0.0, %v4279
        %v4281 = vpop.f32.mrb[0].mxu0
        %v4282 = vadd.f32 0.0, %v4281
        %4283 = vdwg.mxu0
        %v4284 = vadd.f32 %v4138, %v4209
        %v4285 = vadd.f32 %v4139, %v4211
        %v4286 = vadd.f32 %v4140, %v4280
        %v4287 = vadd.f32 %v4141, %v4282
        %v4288 = vxor.u32 %v4284, 2147483648
        %v4289 = vmul.f32 %v4288, 1.442695
        %v4290 = vpow.pop %v4289
        %v4291 = vadd.f32 %v4290, 1.0
        %v4292 = vrcp.pop %v4291
        %v4293 = vmul.f32 1.0, %v4292
        %v4294 = vxor.u32 %v4285, 2147483648
        %v4295 = vmul.f32 %v4294, 1.442695
        %v4296 = vpow.pop %v4295
        %v4297 = vadd.f32 %v4296, 1.0
        %v4298 = vrcp.pop %v4297
        %v4299 = vmul.f32 1.0, %v4298
        %v4300 = vtanh.pop %v4286
        %v4301 = vxor.u32 %v4287, 2147483648
        %v4302 = vmul.f32 %v4301, 1.442695
        %v4303 = vpow.pop %v4302
        %v4304 = vadd.f32 %v4303, 1.0
        %v4305 = vrcp.pop %v4304
        %v4306 = vmul.f32 1.0, %v4305
        %v4307 = vmul.f32 %v4299, %v3822
        %v4308 = vmul.f32 %v4293, %v4300
        %v4309 = vadd.f32 %v4307, %v4308
        %v4310 = vtanh.pop %v4309
        %v4311 = vmul.f32 %v4306, %v4310
        %4312 = vmatprep.subr.mxu0 %v434
        %4313 = vmatpush1.msra.mxu0 %v433
        %4314 = vmatprep.subr.mxu0 %v438
        %4315 = vmatpush1.msra.mxu0 %v437
        %4316 = vmatprep.subr.mxu0 %v442
        %4317 = vmatpush1.msra.mxu0 %v441
        %4318 = vmatprep.subr.mxu0 %v446
        %4319 = vmatpush1.msra.mxu0 %v445
        %4320 = vmatprep.subr.mxu0 %v450
        %4321 = vmatpush1.msra.mxu0 %v449
        %4322 = vmatprep.subr.mxu0 %v454
        %4323 = vmatpush1.msra.mxu0 %v453
        %4324 = vmatprep.subr.mxu0 %v458
        %4325 = vmatpush1.msra.mxu0 %v457
        %4326 = vmatprep.subr.mxu0 %v462
        %4327 = vmatpush1.msra.mxu0 %v461
        %4328 = vmatprep.subr.mxu0 %v466
        %4329 = vmatpush1.msra.mxu0 %v465
        %4330 = vmatprep.subr.mxu0 %v470
        %4331 = vmatpush1.msra.mxu0 %v469
        %4332 = vmatprep.subr.mxu0 %v474
        %4333 = vmatpush1.msra.mxu0 %v473
        %4334 = vmatprep.subr.mxu0 %v478
        %4335 = vmatpush1.msra.mxu0 %v477
        %4336 = vmatprep.subr.mxu0 %v482
        %4337 = vmatpush1.msra.mxu0 %v481
        %4338 = vmatprep.subr.mxu0 %v486
        %4339 = vmatpush1.msra.mxu0 %v485
        %4340 = vmatprep.subr.mxu0 %v490
        %4341 = vmatpush1.msra.mxu0 %v489
        %4342 = vmatprep.subr.mxu0 %v494
        %4343 = vmatpush1.msra.mxu0 %v493
        %4344 = vmatprep.subr.mxu0 0.0
        %4345 = vmatpush1.msra.mxu0 0.0
        %4346 = vmatprep.subr.mxu0 0.0
        %4347 = vmatpush1.msra.mxu0 0.0
        %4348 = vmatprep.subr.mxu0 0.0
        %4349 = vmatpush1.msra.mxu0 0.0
        %4350 = vmatprep.subr.mxu0 0.0
        %4351 = vmatpush1.msra.mxu0 0.0
        %4352 = vmatprep.subr.mxu0 0.0
        %4353 = vmatpush1.msra.mxu0 0.0
        %4354 = vmatprep.subr.mxu0 0.0
        %4355 = vmatpush1.msra.mxu0 0.0
        %4356 = vmatprep.subr.mxu0 0.0
        %4357 = vmatpush1.msra.mxu0 0.0
        %4358 = vmatprep.subr.mxu0 0.0
        %4359 = vmatpush1.msra.mxu0 0.0
        %4360 = vmatprep.subr.mxu0 0.0
        %4361 = vmatpush1.msra.mxu0 0.0
        %4362 = vmatprep.subr.mxu0 0.0
        %4363 = vmatpush1.msra.mxu0 0.0
        %4364 = vmatprep.subr.mxu0 0.0
        %4365 = vmatpush1.msra.mxu0 0.0
        %4366 = vmatprep.subr.mxu0 0.0
        %4367 = vmatpush1.msra.mxu0 0.0
        %4368 = vmatprep.subr.mxu0 0.0
        %4369 = vmatpush1.msra.mxu0 0.0
        %4370 = vmatprep.subr.mxu0 0.0
        %4371 = vmatpush1.msra.mxu0 0.0
        %4372 = vmatprep.subr.mxu0 0.0
        %4373 = vmatpush1.msra.mxu0 0.0
        %4374 = vmatprep.subr.mxu0 0.0
        %4375 = vmatpush1.msra.mxu0 0.0
        %4376 = vmatprep.mubr.f32.mxu0 0.0
        %4377 = vmatmul.mubr.f32.gmra.mrb[0].mxu0 %v4311
        %v4378 = vpop.f32.mrb[0].mxu0
        %v4379 = vadd.f32 %v4062, %v4378
        %v4380 = vpop.f32.mrb[0].mxu0
        %v4381 = vadd.f32 %v4064, %v4380
        %4382 = vdwg.mxu0
        %4383 = vmatprep.subr.mxu0 %v436
        %4384 = vmatpush1.msra.mxu0 %v435
        %4385 = vmatprep.subr.mxu0 %v440
        %4386 = vmatpush1.msra.mxu0 %v439
        %4387 = vmatprep.subr.mxu0 %v444
        %4388 = vmatpush1.msra.mxu0 %v443
        %4389 = vmatprep.subr.mxu0 %v448
        %4390 = vmatpush1.msra.mxu0 %v447
        %4391 = vmatprep.subr.mxu0 %v452
        %4392 = vmatpush1.msra.mxu0 %v451
        %4393 = vmatprep.subr.mxu0 %v456
        %4394 = vmatpush1.msra.mxu0 %v455
        %4395 = vmatprep.subr.mxu0 %v460
        %4396 = vmatpush1.msra.mxu0 %v459
        %4397 = vmatprep.subr.mxu0 %v464
        %4398 = vmatpush1.msra.mxu0 %v463
        %4399 = vmatprep.subr.mxu0 %v468
        %4400 = vmatpush1.msra.mxu0 %v467
        %4401 = vmatprep.subr.mxu0 %v472
        %4402 = vmatpush1.msra.mxu0 %v471
        %4403 = vmatprep.subr.mxu0 %v476
        %4404 = vmatpush1.msra.mxu0 %v475
        %4405 = vmatprep.subr.mxu0 %v480
        %4406 = vmatpush1.msra.mxu0 %v479
        %4407 = vmatprep.subr.mxu0 %v484
        %4408 = vmatpush1.msra.mxu0 %v483
        %4409 = vmatprep.subr.mxu0 %v488
        %4410 = vmatpush1.msra.mxu0 %v487
        %4411 = vmatprep.subr.mxu0 %v492
        %4412 = vmatpush1.msra.mxu0 %v491
        %4413 = vmatprep.subr.mxu0 %v496
        %4414 = vmatpush1.msra.mxu0 %v495
        %4415 = vmatprep.subr.mxu0 0.0
        %4416 = vmatpush1.msra.mxu0 0.0
        %4417 = vmatprep.subr.mxu0 0.0
        %4418 = vmatpush1.msra.mxu0 0.0
        %4419 = vmatprep.subr.mxu0 0.0
        %4420 = vmatpush1.msra.mxu0 0.0
        %4421 = vmatprep.subr.mxu0 0.0
        %4422 = vmatpush1.msra.mxu0 0.0
        %4423 = vmatprep.subr.mxu0 0.0
        %4424 = vmatpush1.msra.mxu0 0.0
        %4425 = vmatprep.subr.mxu0 0.0
        %4426 = vmatpush1.msra.mxu0 0.0
        %4427 = vmatprep.subr.mxu0 0.0
        %4428 = vmatpush1.msra.mxu0 0.0
        %4429 = vmatprep.subr.mxu0 0.0
        %4430 = vmatpush1.msra.mxu0 0.0
        %4431 = vmatprep.subr.mxu0 0.0
        %4432 = vmatpush1.msra.mxu0 0.0
        %4433 = vmatprep.subr.mxu0 0.0
        %4434 = vmatpush1.msra.mxu0 0.0
        %4435 = vmatprep.subr.mxu0 0.0
        %4436 = vmatpush1.msra.mxu0 0.0
        %4437 = vmatprep.subr.mxu0 0.0
        %4438 = vmatpush1.msra.mxu0 0.0
        %4439 = vmatprep.subr.mxu0 0.0
        %4440 = vmatpush1.msra.mxu0 0.0
        %4441 = vmatprep.subr.mxu0 0.0
        %4442 = vmatpush1.msra.mxu0 0.0
        %4443 = vmatprep.subr.mxu0 0.0
        %4444 = vmatpush1.msra.mxu0 0.0
        %4445 = vmatprep.subr.mxu0 0.0
        %4446 = vmatpush1.msra.mxu0 0.0
        %4447 = vmatprep.mubr.f32.mxu0 0.0
        %4448 = vmatmul.mubr.f32.gmra.mrb[0].mxu0 %v4311
        %v4449 = vpop.f32.mrb[0].mxu0
        %v4450 = vadd.f32 %v4133, %v4449
        %v4451 = vpop.f32.mrb[0].mxu0
        %v4452 = vadd.f32 %v4135, %v4451
        %4453 = vdwg.mxu0
        %v4454 = vadd.f32 %v4379, %v566
        %v4455 = vadd.f32 %v4381, %v570
        %v4456 = vadd.f32 %v4450, %v574
        %v4457 = vadd.f32 %v4452, %v578
        %v4458 = vxor.u32 %v4454, 2147483648
        %v4459 = vmul.f32 %v4458, 1.442695
        %v4460 = vpow.pop %v4459
        %v4461 = vadd.f32 %v4460, 1.0
        %v4462 = vrcp.pop %v4461
        %v4463 = vmul.f32 1.0, %v4462
        %v4464 = vxor.u32 %v4455, 2147483648
        %v4465 = vmul.f32 %v4464, 1.442695
        %v4466 = vpow.pop %v4465
        %v4467 = vadd.f32 %v4466, 1.0
        %v4468 = vrcp.pop %v4467
        %v4469 = vmul.f32 1.0, %v4468
        %v4470 = vtanh.pop %v4456
        %v4471 = vxor.u32 %v4457, 2147483648
        %v4472 = vmul.f32 %v4471, 1.442695
        %v4473 = vpow.pop %v4472
        %v4474 = vadd.f32 %v4473, 1.0
        %v4475 = vrcp.pop %v4474
        %v4476 = vmul.f32 1.0, %v4475
        %v4477 = vmul.f32 %v4469, %v3992
        %v4478 = vmul.f32 %v4463, %v4470
        %v4479 = vadd.f32 %v4477, %v4478
        %v4480 = vtanh.pop %v4479
        %v4481 = vmul.f32 %v4476, %v4480
        %4482 = vst [vmem:[#allocation2] sm:$0xff] %v4311
        %4483 = vst [vmem:[#allocation3] sm:$0xff] %v4309
        %4484 = vst [vmem:[#allocation4] sm:$0xff] %v4481
        %4485 = vst [vmem:[#allocation5] sm:$0xff] %v4479
        %p4486 = scmp.eq.s32.totalorder %s30, 1
        // Predicated region
        $region69: #{tpu_custom_call.1} parent=47 // pred_check
          %p4487 = pneg %p4486
        $region70: #{tpu_custom_call.1} parent=47 // pred_check_branch
          %4489 = sbr.rel (%p4487) target = $region72
        $region71: #{tpu_custom_call.1} parent=47 // pred_region
          %v4490 = vld [vmem:[%s5] sm:$0x1]
          %v4492 = vlaneseq
          %v4493 = vshrl.u32 %v4492, 7
          %v4494 = vsub.s32 0, %v4493
          %v4495 = vrot.slane %v4490, %v4494
          %v4497 = vmul.f32 %v4481, %v4495
          %4498 = vadd.xlane.f32.xlu0 %v4497
          %v4499 = vpop.xlane.xlu0 %4498
          %v4500 = vld [vmem:[#allocation6] sm:$0x1]
          %v4502 = vlaneseq
          %v4503 = vshrl.u32 %v4502, 7
          %v4504 = vsub.s32 0, %v4503
          %v4505 = vrot.slane %v4500, %v4504
          %v4507 = vadd.f32 %v4499, %v4505
          %v4508 = vxor.u32 %v4507, 2147483648
          %v4509 = vmul.f32 %v4508, 1.442695
          %v4510 = vpow.pop %v4509
          %v4511 = vadd.f32 %v4510, 1.0
          %v4512 = vrcp.pop %v4511
          %v4513 = vmul.f32 1.0, %v4512
          %vm4514 = vcmask 7168
          %4515 = vst.msk [vmem:[%s360] sm:$0xff] %vm4514, %v4513
        $region72: #{tpu_custom_call.1} parent=47 // pred_fallthru
          _
        %p4516 = scmp.lt.s32.totalorder %s29, 0
        %s4517 = scalar_select %p4516, %s29, 0
        %s4518 = smul.addr %s4517, 8
        %s4519 = scalar_lea.vmem %s7, %s4518
        // Predicated region
        $region73: #{tpu_custom_call.1} parent=47 // pred_check
          %p4520 = pneg %p209
        $region74: #{tpu_custom_call.1} parent=47 // pred_check_branch
          %4522 = sbr.rel (%p4520) target = $region76
        $region75: #{tpu_custom_call.1} parent=47 // pred_region
          _
        $region76: #{tpu_custom_call.1} parent=47 // pred_fallthru
          _
        // Predicated region
        $region77: #{tpu_custom_call.1} parent=47 // pred_check
          %p4523 = pneg %p209
        $region78: #{tpu_custom_call.1} parent=47 // pred_check_branch
          %4525 = sbr.rel (%p4523) target = $region80
        $region79: #{tpu_custom_call.1} parent=47 // pred_region
          %p4526 = scmp.lt.s32.totalorder %s29, 0
          %s4527 = scalar_select %p4526, %s29, 0
          %s4528 = smul.addr %s4527, 8
          %s4529 = scalar_lea.vmem %s7, %s4528
        $region80: #{tpu_custom_call.1} parent=47 // pred_fallthru
          _
      $region48: #{tpu_custom_call.1} parent=5 // pred_fallthru
        _
      %p4530 = scmp.le.s32.totalorder 2, %s20
      // Predicated region
      $region81: #{tpu_custom_call.1} parent=5 // pred_check
        %p4531 = pneg %p4530
      $region82: #{tpu_custom_call.1} parent=5 // pred_check_branch
        %4533 = sbr.rel (%p4531) target = $region84
      $region83: #{tpu_custom_call.1} parent=5 // pred_region
        %s4534 = ssub.s32 %s20, 2
      $region84: #{tpu_custom_call.1} parent=5 // pred_fallthru
        _
    $region6: #{tpu_custom_call.1} parent=1 // loop_footer
      %s24 = sadd.s32 1, %s20
    $region7: #{tpu_custom_call.1} parent=1 // loop_footer_branch
      %19 = sbr.rel target = $region3
    $region8: #{tpu_custom_call.1} parent=1 // loop_exit
      _
    %4535 = vsyncpa [#allocation8], 1
    %s4536 = scalar_lea.sflag [#allocation8], 1
    %4537 = vsyncpa %s4536, 1
    %4538 = vsyncpa [#allocation10], 1
    %4539 = vsyncpa [#allocation13], 1

</llo_original>
